<compile_context>
chip_gen: v7x
topology: tpu7x:2x2x1
jax: 0.10.0
libtpu: 0.0.40
codegen_flags: <defaults>
</compile_context>

<pallas_src>
import functools

import jax
import jax.numpy as jnp
from jax import lax
from jax.experimental import pallas as pl
from jax.experimental.pallas import tpu as pltpu

num_items = 2079
num_users = 50
hidden_layers = [16, 8, 8, 8]
gmf_embedding_size = 8
mlp_embedding_size = 8

_COMB = mlp_embedding_size + gmf_embedding_size   # 16 lanes: [mlp_emb | gmf_emb]
_PARAM_ROWS = 56                                  # packed parameter blob rows


def _round_up(x, m):
    return -(-x // m) * m


def _neucf_kernel(u_idx_ref, i_idx_ref, user_tab_ref, item_tab_ref, params_ref, out_ref):
    """One batch tile of the full NeuCF forward.

    u_idx_ref / i_idx_ref : (TB, 1) int32          (VMEM, blocked over batch)
    user_tab_ref          : (num_users, 16) f32    [mlp_user_emb | gmf_user_emb]
    item_tab_ref          : (num_items, 16) f32    [mlp_item_emb | gmf_item_emb]
    params_ref            : (56, 16) f32 packed blob (layout in _pack_params)
    out_ref               : (TB, 1) f32 sigmoid predictions
    """
    tb = u_idx_ref.shape[0]
    nu = user_tab_ref.shape[0]
    ni = item_tab_ref.shape[0]

    u_idx = u_idx_ref[...]                         # (TB, 1) int32
    i_idx = i_idx_ref[...]                         # (TB, 1) int32

    # Fused embedding gather: one-hot @ table runs on the MXU, no relayout.
    # (out-of-range indices would yield a zero row instead of raising - benign.)
    u_oh = (u_idx == lax.broadcasted_iota(jnp.int32, (tb, nu), 1)).astype(jnp.float32)
    i_oh = (i_idx == lax.broadcasted_iota(jnp.int32, (tb, ni), 1)).astype(jnp.float32)
    u_all = jnp.dot(u_oh, user_tab_ref[...], preferred_element_type=jnp.float32)  # (TB,16)
    i_all = jnp.dot(i_oh, item_tab_ref[...], preferred_element_type=jnp.float32)  # (TB,16)

    # Static (free) views into the packed parameter blob.
    P = params_ref
    w0u = P[0:16, 0:8]        # layer-0 user half, zero-padded to 16 rows
    w0i = P[16:32, 0:8]       # layer-0 item half, zero-padded to 16 rows
    w1 = P[32:40, 0:8]
    w2 = P[40:48, 0:8]
    b0 = P[48:49, 0:8]
    b1 = P[49:50, 0:8]
    b2 = P[50:51, 0:8]
    w_out_mlp = P[51:52, 0:8]     # head weight, MLP half (as a row)
    w_out_gmf = P[52:53, :]       # head weight, GMF half (lanes 8:16; lanes 0:8 are 0)
    b_out = P[53:54, 0:1]         # head bias

    # MLP tower: relu(x @ W + b) x3, layer 0 done as split user/item matmuls
    # (equivalent to concat([mlp_u, mlp_i]) @ W0, without the lane relayout).
    h = jnp.maximum(
        jnp.dot(u_all, w0u, preferred_element_type=jnp.float32)
        + jnp.dot(i_all, w0i, preferred_element_type=jnp.float32) + b0, 0.0)
    h = jnp.maximum(jnp.dot(h, w1, preferred_element_type=jnp.float32) + b1, 0.0)
    h = jnp.maximum(jnp.dot(h, w2, preferred_element_type=jnp.float32) + b2, 0.0)

    # GMF tower: elementwise product; lanes 8:16 are the GMF embeddings, lanes
    # 0:8 (MLP product) get multiplied by the zero half of w_out_gmf below.
    gmf = u_all * i_all                                          # (TB, 16)

    # Head: Linear(16 -> 1) as lane reductions (no (8,1) column weights needed).
    logit = (jnp.sum(h * w_out_mlp, axis=-1, keepdims=True)
             + jnp.sum(gmf * w_out_gmf, axis=-1, keepdims=True)
             + b_out)                                            # (TB, 1)
    pred = 1.0 / (1.0 + jnp.exp(-logit))                         # sigmoid (EUP exp)
    # TODO(synk): out_dim=1 -> masked lane store; negligible here, pad to 128
    # lanes only if the head ever grows.
    out_ref[...] = pred.astype(out_ref.dtype)


def _pack_params(mlp_user_tab, mlp_item_tab, gmf_user_tab, gmf_item_tab,
                 mlp_weights, mlp_biases, out_w, out_b):
    """Pack embedding tables (side by side) and all Linear params into one blob."""
    user_tab = jnp.concatenate([mlp_user_tab, gmf_user_tab], axis=1)   # (NU, 16)
    item_tab = jnp.concatenate([mlp_item_tab, gmf_item_tab], axis=1)   # (NI, 16)

    w0, w1, w2 = mlp_weights        # (16,8), (8,8), (8,8)  stored as (in, out)
    b0, b1, b2 = mlp_biases         # (8,) each
    blob = jnp.zeros((_PARAM_ROWS, _COMB), jnp.float32)
    blob = blob.at[0:8, 0:8].set(w0[0:8])        # W0 user half (rows 8:16 stay 0)
    blob = blob.at[16:24, 0:8].set(w0[8:16])     # W0 item half (rows 24:32 stay 0)
    blob = blob.at[32:40, 0:8].set(w1)
    blob = blob.at[40:48, 0:8].set(w2)
    blob = blob.at[48, 0:8].set(b0)
    blob = blob.at[49, 0:8].set(b1)
    blob = blob.at[50, 0:8].set(b2)
    blob = blob.at[51, 0:8].set(out_w[0:8, 0])   # head weight, MLP half
    blob = blob.at[52, 8:16].set(out_w[8:16, 0]) # head weight, GMF half (lanes 8:16)
    blob = blob.at[53, 0].set(out_b[0])          # head bias
    return user_tab, item_tab, blob


@functools.partial(jax.jit, static_argnames=("block_b",))
def neucf_forward(user_indices, item_indices,
                  mlp_user_tab, mlp_item_tab, gmf_user_tab, gmf_item_tab,
                  mlp_weights, mlp_biases, out_w, out_b, *, block_b=128):
    """Full NeuCF forward: one pallas_call, batch tiled over a parallel grid."""
    user_tab, item_tab, blob = _pack_params(
        mlp_user_tab, mlp_item_tab, gmf_user_tab, gmf_item_tab,
        mlp_weights, mlp_biases, out_w, out_b)

    b = user_indices.shape[0]
    tb = min(block_b, _round_up(b, 8))           # batch tile (multiple of 8 sublanes)
    b_pad = _round_up(b, tb)
    n_blocks = b_pad // tb

    u = jnp.asarray(user_indices, jnp.int32).reshape(b, 1)
    i = jnp.asarray(item_indices, jnp.int32).reshape(b, 1)
    if b_pad != b:
        u = jnp.pad(u, ((0, b_pad - b), (0, 0)))
        i = jnp.pad(i, ((0, b_pad - b), (0, 0)))

    idx_spec = pl.BlockSpec((tb, 1), lambda bb: (bb, 0))
    user_tab_spec = pl.BlockSpec(user_tab.shape, lambda bb: (0, 0))  # VMEM-resident
    item_tab_spec = pl.BlockSpec(item_tab.shape, lambda bb: (0, 0))  # VMEM-resident
    blob_spec = pl.BlockSpec(blob.shape, lambda bb: (0, 0))          # VMEM-resident

    out = pl.pallas_call(
        _neucf_kernel,
        out_shape=jax.ShapeDtypeStruct((b_pad, 1), jnp.float32),
        grid=(n_blocks,),
        in_specs=[idx_spec, idx_spec, user_tab_spec, item_tab_spec, blob_spec],
        out_specs=pl.BlockSpec((tb, 1), lambda bb: (bb, 0)),
        compiler_params=pltpu.CompilerParams(
            dimension_semantics=("parallel",)),   # v7x: batch blocks across both TCs
    )(u, i, user_tab, item_tab, blob)
    return out[:b]


def init_params(key):
    """Deterministic init mirroring PyTorch defaults (Embedding ~ N(0,1), Linear ~ U)."""
    ks = jax.random.split(key, 12)
    mlp_user_tab = jax.random.normal(ks[0], (num_users, mlp_embedding_size), jnp.float32)
    mlp_item_tab = jax.random.normal(ks[1], (num_items, mlp_embedding_size), jnp.float32)
    gmf_user_tab = jax.random.normal(ks[2], (num_users, gmf_embedding_size), jnp.float32)
    gmf_item_tab = jax.random.normal(ks[3], (num_items, gmf_embedding_size), jnp.float32)

    weights, biases = [], []
    k = 4
    for in_size, out_size in zip(hidden_layers[:-1], hidden_layers[1:]):
        bound = 1.0 / (in_size ** 0.5)
        # stored as (in, out) so the kernel computes x @ W (== PyTorch x @ W.T)
        weights.append(jax.random.uniform(ks[k], (in_size, out_size), jnp.float32,
                                          minval=-bound, maxval=bound))
        biases.append(jax.random.uniform(ks[k + 1], (out_size,), jnp.float32,
                                         minval=-bound, maxval=bound))
        k += 2
    head_in = hidden_layers[-1] + gmf_embedding_size
    bound = 1.0 / (head_in ** 0.5)
    out_w = jax.random.uniform(ks[k], (head_in, 1), jnp.float32, minval=-bound, maxval=bound)
    out_b = jax.random.uniform(ks[k + 1], (1,), jnp.float32, minval=-bound, maxval=bound)
    return (mlp_user_tab, mlp_item_tab, gmf_user_tab, gmf_item_tab,
            tuple(weights), tuple(biases), out_w, out_b)


def reference_forward(user_indices, item_indices,
                      mlp_user_tab, mlp_item_tab, gmf_user_tab, gmf_item_tab,
                      mlp_weights, mlp_biases, out_w, out_b):
    """Pure-JAX reference matching the PyTorch NeuCF forward."""
    x = jnp.concatenate([jnp.take(mlp_user_tab, user_indices, axis=0),
                         jnp.take(mlp_item_tab, item_indices, axis=0)], axis=-1)
    for w, bvec in zip(mlp_weights, mlp_biases):
        x = jnp.maximum(x @ w + bvec, 0.0)
    gmf = (jnp.take(gmf_user_tab, user_indices, axis=0)
           * jnp.take(gmf_item_tab, item_indices, axis=0))
    comb = jnp.concatenate([x, gmf], axis=-1)
    return jax.nn.sigmoid(comb @ out_w + out_b)


if __name__ == "__main__":
    key = jax.random.PRNGKey(0)
    p_key, u_key, i_key = jax.random.split(key, 3)

    params = init_params(p_key)

    batch = 256                      # fills MXU rows / sublanes; 2 grid blocks of 128
    user_indices = jax.random.randint(u_key, (batch,), 0, num_users, dtype=jnp.int32)
    item_indices = jax.random.randint(i_key, (batch,), 0, num_items, dtype=jnp.int32)

    out = neucf_forward(user_indices, item_indices, *params, block_b=128)
    out = jax.block_until_ready(out)

    ref = reference_forward(user_indices, item_indices, *params)
    assert out.shape == (batch, 1), out.shape
    assert jnp.allclose(out, ref, atol=5e-4, rtol=5e-4), "mismatch vs reference"

    print("KERNEL_OK")
</pallas_src>

<mosaic_0001>
module attributes {stable_mosaic.version = 11 : i64} {
  func.func @_neucf_kernel(%arg0: i32, %arg1: memref<128x1xi32, #tpu.memory_space<vmem>>, %arg2: memref<128x1xi32, #tpu.memory_space<vmem>>, %arg3: memref<50x16xf32, #tpu.memory_space<vmem>>, %arg4: memref<2079x16xf32, #tpu.memory_space<vmem>>, %arg5: memref<56x16xf32, #tpu.memory_space<vmem>>, %arg6: memref<128x1xf32, #tpu.memory_space<vmem>>) attributes {dimension_semantics = [#tpu.dimension_semantics<parallel>], iteration_bounds = array<i64: 2>, scalar_prefetch = 0 : i64, scratch_operands = 0 : i64, tpu.core_type = #tpu.core_type<tc>, window_params = [{transform_indices = @transform_0, window_bounds = array<i64: 128, 1>}, {transform_indices = @transform_1, window_bounds = array<i64: 128, 1>}, {pipeline_mode = #tpu.pipeline_mode<synchronous>, transform_indices = @transform_2, window_bounds = array<i64: 50, 16>}, {pipeline_mode = #tpu.pipeline_mode<synchronous>, transform_indices = @transform_3, window_bounds = array<i64: 2079, 16>}, {pipeline_mode = #tpu.pipeline_mode<synchronous>, transform_indices = @transform_4, window_bounds = array<i64: 56, 16>}, {transform_indices = @transform_5, window_bounds = array<i64: 128, 1>}]} {
    %c0 = arith.constant 0 : index
    %c0_0 = arith.constant 0 : index
    %0 = vector.load %arg1[%c0, %c0_0] : memref<128x1xi32, #tpu.memory_space<vmem>>, vector<128x1xi32>
    %c0_1 = arith.constant 0 : index
    %c0_2 = arith.constant 0 : index
    %1 = vector.load %arg2[%c0_1, %c0_2] : memref<128x1xi32, #tpu.memory_space<vmem>>, vector<128x1xi32>
    %2 = tpu.iota {dimensions = array<i32: 1>} : vector<128x50xi32>
    %3 = vector.broadcast %0 : vector<128x1xi32> to vector<128x50xi32>
    %4 = arith.cmpi eq, %3, %2 : vector<128x50xi32>
    %5 = arith.extui %4 : vector<128x50xi1> to vector<128x50xi32>
    %6 = arith.sitofp %5 : vector<128x50xi32> to vector<128x50xf32>
    %7 = tpu.iota {dimensions = array<i32: 1>} : vector<128x2079xi32>
    %8 = vector.broadcast %1 : vector<128x1xi32> to vector<128x2079xi32>
    %9 = arith.cmpi eq, %8, %7 : vector<128x2079xi32>
    %10 = arith.extui %9 : vector<128x2079xi1> to vector<128x2079xi32>
    %11 = arith.sitofp %10 : vector<128x2079xi32> to vector<128x2079xf32>
    %c0_3 = arith.constant 0 : index
    %c0_4 = arith.constant 0 : index
    %12 = vector.load %arg3[%c0_3, %c0_4] : memref<50x16xf32, #tpu.memory_space<vmem>>, vector<50x16xf32>
    %cst = arith.constant dense<0.000000e+00> : vector<128x16xf32>
    %13 = tpu.matmul %6, %12, %cst {dimension_numbers = #tpu.dot_dimension_numbers<[1], [0], [0], [1], [0, 0, 1, 1], [], []>} : vector<128x50xf32>, vector<50x16xf32>, vector<128x16xf32> -> vector<128x16xf32>
    %c0_5 = arith.constant 0 : index
    %c0_6 = arith.constant 0 : index
    %14 = vector.load %arg4[%c0_5, %c0_6] : memref<2079x16xf32, #tpu.memory_space<vmem>>, vector<2079x16xf32>
    %cst_7 = arith.constant dense<0.000000e+00> : vector<128x16xf32>
    %15 = tpu.matmul %11, %14, %cst_7 {dimension_numbers = #tpu.dot_dimension_numbers<[1], [0], [0], [1], [0, 0, 1, 1], [], []>} : vector<128x2079xf32>, vector<2079x16xf32>, vector<128x16xf32> -> vector<128x16xf32>
    %c0_8 = arith.constant 0 : index
    %c0_9 = arith.constant 0 : index
    %16 = vector.load %arg5[%c0_8, %c0_9] : memref<56x16xf32, #tpu.memory_space<vmem>>, vector<16x8xf32>
    %c16 = arith.constant 16 : index
    %c0_10 = arith.constant 0 : index
    %17 = vector.load %arg5[%c16, %c0_10] : memref<56x16xf32, #tpu.memory_space<vmem>>, vector<16x8xf32>
    %c32 = arith.constant 32 : index
    %c0_11 = arith.constant 0 : index
    %18 = vector.load %arg5[%c32, %c0_11] : memref<56x16xf32, #tpu.memory_space<vmem>>, vector<8x8xf32>
    %c40 = arith.constant 40 : index
    %c0_12 = arith.constant 0 : index
    %19 = vector.load %arg5[%c40, %c0_12] : memref<56x16xf32, #tpu.memory_space<vmem>>, vector<8x8xf32>
    %c48 = arith.constant 48 : index
    %c0_13 = arith.constant 0 : index
    %20 = vector.load %arg5[%c48, %c0_13] : memref<56x16xf32, #tpu.memory_space<vmem>>, vector<1x8xf32>
    %c49 = arith.constant 49 : index
    %c0_14 = arith.constant 0 : index
    %21 = vector.load %arg5[%c49, %c0_14] : memref<56x16xf32, #tpu.memory_space<vmem>>, vector<1x8xf32>
    %c50 = arith.constant 50 : index
    %c0_15 = arith.constant 0 : index
    %22 = vector.load %arg5[%c50, %c0_15] : memref<56x16xf32, #tpu.memory_space<vmem>>, vector<1x8xf32>
    %c51 = arith.constant 51 : index
    %c0_16 = arith.constant 0 : index
    %23 = vector.load %arg5[%c51, %c0_16] : memref<56x16xf32, #tpu.memory_space<vmem>>, vector<1x8xf32>
    %c52 = arith.constant 52 : index
    %c0_17 = arith.constant 0 : index
    %24 = vector.load %arg5[%c52, %c0_17] : memref<56x16xf32, #tpu.memory_space<vmem>>, vector<1x16xf32>
    %c53 = arith.constant 53 : index
    %c0_18 = arith.constant 0 : index
    %25 = vector.load %arg5[%c53, %c0_18] : memref<56x16xf32, #tpu.memory_space<vmem>>, vector<1x1xf32>
    %cst_19 = arith.constant dense<0.000000e+00> : vector<128x8xf32>
    %26 = tpu.matmul %13, %16, %cst_19 {dimension_numbers = #tpu.dot_dimension_numbers<[1], [0], [0], [1], [0, 0, 1, 1], [], []>} : vector<128x16xf32>, vector<16x8xf32>, vector<128x8xf32> -> vector<128x8xf32>
    %cst_20 = arith.constant dense<0.000000e+00> : vector<128x8xf32>
    %27 = tpu.matmul %15, %17, %cst_20 {dimension_numbers = #tpu.dot_dimension_numbers<[1], [0], [0], [1], [0, 0, 1, 1], [], []>} : vector<128x16xf32>, vector<16x8xf32>, vector<128x8xf32> -> vector<128x8xf32>
    %28 = arith.addf %26, %27 : vector<128x8xf32>
    %29 = vector.broadcast %20 : vector<1x8xf32> to vector<128x8xf32>
    %30 = arith.addf %28, %29 : vector<128x8xf32>
    %cst_21 = arith.constant 0.000000e+00 : f32
    %31 = vector.broadcast %cst_21 : f32 to vector<128x8xf32>
    %32 = arith.maximumf %30, %31 : vector<128x8xf32>
    %cst_22 = arith.constant dense<0.000000e+00> : vector<128x8xf32>
    %33 = tpu.matmul %32, %18, %cst_22 {dimension_numbers = #tpu.dot_dimension_numbers<[1], [0], [0], [1], [0, 0, 1, 1], [], []>} : vector<128x8xf32>, vector<8x8xf32>, vector<128x8xf32> -> vector<128x8xf32>
    %34 = vector.broadcast %21 : vector<1x8xf32> to vector<128x8xf32>
    %35 = arith.addf %33, %34 : vector<128x8xf32>
    %cst_23 = arith.constant 0.000000e+00 : f32
    %36 = vector.broadcast %cst_23 : f32 to vector<128x8xf32>
    %37 = arith.maximumf %35, %36 : vector<128x8xf32>
    %cst_24 = arith.constant dense<0.000000e+00> : vector<128x8xf32>
    %38 = tpu.matmul %37, %19, %cst_24 {dimension_numbers = #tpu.dot_dimension_numbers<[1], [0], [0], [1], [0, 0, 1, 1], [], []>} : vector<128x8xf32>, vector<8x8xf32>, vector<128x8xf32> -> vector<128x8xf32>
    %39 = vector.broadcast %22 : vector<1x8xf32> to vector<128x8xf32>
    %40 = arith.addf %38, %39 : vector<128x8xf32>
    %cst_25 = arith.constant 0.000000e+00 : f32
    %41 = vector.broadcast %cst_25 : f32 to vector<128x8xf32>
    %42 = arith.maximumf %40, %41 : vector<128x8xf32>
    %43 = arith.mulf %13, %15 : vector<128x16xf32>
    %44 = vector.broadcast %23 : vector<1x8xf32> to vector<128x8xf32>
    %45 = arith.mulf %42, %44 : vector<128x8xf32>
    %cst_26 = arith.constant dense<0.000000e+00> : vector<128xf32>
    %46 = vector.multi_reduction <add>, %45, %cst_26 [1] : vector<128x8xf32> to vector<128xf32>
    %47 = vector.shape_cast %46 : vector<128xf32> to vector<128x1xf32>
    %48 = vector.broadcast %24 : vector<1x16xf32> to vector<128x16xf32>
    %49 = arith.mulf %43, %48 : vector<128x16xf32>
    %cst_27 = arith.constant dense<0.000000e+00> : vector<128xf32>
    %50 = vector.multi_reduction <add>, %49, %cst_27 [1] : vector<128x16xf32> to vector<128xf32>
    %51 = vector.shape_cast %50 : vector<128xf32> to vector<128x1xf32>
    %52 = arith.addf %47, %51 : vector<128x1xf32>
    %53 = vector.broadcast %25 : vector<1x1xf32> to vector<128x1xf32>
    %54 = arith.addf %52, %53 : vector<128x1xf32>
    %cst_28 = arith.constant 0.000000e+00 : f32
    %55 = vector.broadcast %cst_28 : f32 to vector<128x1xf32>
    %56 = arith.subf %55, %54 : vector<128x1xf32>
    %57 = math.exp %56 : vector<128x1xf32>
    %cst_29 = arith.constant 1.000000e+00 : f32
    %58 = vector.broadcast %cst_29 : f32 to vector<128x1xf32>
    %59 = arith.addf %58, %57 : vector<128x1xf32>
    %cst_30 = arith.constant 1.000000e+00 : f32
    %60 = vector.broadcast %cst_30 : f32 to vector<128x1xf32>
    %61 = arith.divf %60, %59 : vector<128x1xf32>
    %c0_31 = arith.constant 0 : index
    %c0_32 = arith.constant 0 : index
    %62 = vector.load %arg6[%c0_31, %c0_32] : memref<128x1xf32, #tpu.memory_space<vmem>>, vector<128x1xf32>
    tpu.vector_store %arg6[%c0_31, %c0_32], %61 {strides = array<i32>} : memref<128x1xf32, #tpu.memory_space<vmem>>, vector<128x1xf32>,
    return
  }
  func.func @transform_0(%arg0: i32) -> (i32, i32) {
    %c0_i32 = arith.constant 0 : i32
    %c0_i32_0 = arith.constant 0 : i32
    return %arg0, %c0_i32 : i32, i32
  }
  func.func @transform_1(%arg0: i32) -> (i32, i32) {
    %c0_i32 = arith.constant 0 : i32
    %c0_i32_0 = arith.constant 0 : i32
    return %arg0, %c0_i32 : i32, i32
  }
  func.func @transform_2(%arg0: i32) -> (i32, i32) {
    %c0_i32 = arith.constant 0 : i32
    %c0_i32_0 = arith.constant 0 : i32
    %c0_i32_1 = arith.constant 0 : i32
    return %c0_i32, %c0_i32_0 : i32, i32
  }
  func.func @transform_3(%arg0: i32) -> (i32, i32) {
    %c0_i32 = arith.constant 0 : i32
    %c0_i32_0 = arith.constant 0 : i32
    %c0_i32_1 = arith.constant 0 : i32
    return %c0_i32, %c0_i32_0 : i32, i32
  }
  func.func @transform_4(%arg0: i32) -> (i32, i32) {
    %c0_i32 = arith.constant 0 : i32
    %c0_i32_0 = arith.constant 0 : i32
    %c0_i32_1 = arith.constant 0 : i32
    return %c0_i32, %c0_i32_0 : i32, i32
  }
  func.func @transform_5(%arg0: i32) -> (i32, i32) {
    %c0_i32 = arith.constant 0 : i32
    %c0_i32_0 = arith.constant 0 : i32
    return %arg0, %c0_i32 : i32, i32
  }
}

</mosaic_0001>

<llo_original>
// kernel: neucf_forward.1
$region0: #{neucf_forward.1}
  #allocation0 [shape = 'u32[]', space=smem, size = 0x4, offset = 0x4, fixed_abs, tag = 'smem constant byte address 0x4 - core index']
  #allocation1 [shape = 'u32[144,128]{1,0:T(1,128)}', space=vmem, size = 0x12000, scoped, tag = 'internal scratch']
  %s0 = inlined_call_operand.vmem [shape: s32[256,1], index: 0, kind: input, shape index: {}]
  %s1 = inlined_call_operand.vmem [shape: s32[256,1], index: 1, kind: input, shape index: {}]
  %s2 = inlined_call_operand.vmem [shape: f32[50,16], index: 2, kind: input, shape index: {}]
  %s3 = inlined_call_operand.vmem [shape: f32[2079,16], index: 3, kind: input, shape index: {}]
  %s4 = inlined_call_operand.vmem [shape: f32[56,16], index: 4, kind: input, shape index: {}]
  %s5 = inlined_call_operand.vmem [shape: f32[256,1], index: 5, kind: output, shape index: {}]
  %s6 = sld [smem:[#allocation0]]
  $region53: #{neucf_forward.1} parent=0
    _
  %s8 = ssub.s32 1, %s6
  %s9 = scalar_select 0, %s8, %s6
  loop: start=0, step=1, limit=4
  $region2: #{neucf_forward.1} parent=0 // loop_pre_header
    _
  $region3: #{neucf_forward.1} parent=0 // loop_header
    %s11 = sphi 0, %s15
    %p12 = scmp.ge.s32.totalorder %s11, 4
    %s21 = sphi 0, %s23
    %s24 = sphi 0, %s21
    %s25 = sphi 0, %s24
    %s41 = sphi 0, %s25
    %s47 = sphi 0, %s49
    %s50 = sphi 0, %s47
    %s51 = sphi 0, %s50
    %s67 = sphi 0, %s51
    %s71 = sphi 0, %s71
    %s73 = sphi 0, %s71
    %s74 = sphi 0, %s73
    %s88 = sphi 0, %s74
    %s92 = sphi 0, %s92
    %s94 = sphi 0, %s92
    %s95 = sphi 0, %s94
    %s109 = sphi 0, %s95
    %s113 = sphi 0, %s113
    %s115 = sphi 0, %s113
    %s116 = sphi 0, %s115
    %s130 = sphi 0, %s116
    %s136 = sphi 0, %s138
    %s139 = sphi 0, %s136
    %s140 = sphi 0, %s139
    %s156 = sphi 0, %s140
  $region4: #{neucf_forward.1} parent=0 // loop_header_branch
    %14 = sbr.rel (%p12) target = $region8
  $region5: #{neucf_forward.1} parent=0 // loop_body
    %s16 = ssub.s32 %s11, 1
    %s17 = ssub.s32 %s11, 2
    %s18 = sadd.s32 %s11, 1
    %s19 = ssub.s32 %s11, %s18
    %p20 = scmp.eq.s32.totalorder %s19, 0
    %s22 = sadd.s32 %s21, 1
    %s23 = scalar_select %p20, %s21, %s22
    %p26 = pneg %p20
    %p27 = scmp.eq.s32.totalorder %s11, 1
    %p28 = por %p26, %p27
    %p29 = scmp.ne.s32.totalorder %s21, %s24
    %p30 = scmp.eq.s32.totalorder %s11, 0
    %p31 = por %p29, %p30
    %p32 = scmp.ne.s32.totalorder %s21, %s24
    %p33 = scmp.eq.s32.totalorder %s16, 1
    %p34 = por %p32, %p33
    %p35 = scmp.ne.s32.totalorder %s24, %s25
    %p36 = scmp.eq.s32.totalorder %s16, 0
    %p37 = por %p35, %p36
    %p38 = scmp.ne.s32.totalorder %s24, %s25
    %p39 = scmp.eq.s32.totalorder %s17, 1
    %p40 = por %p38, %p39
    %p42 = scmp.ne.s32.totalorder %s25, %s41
    %p43 = scmp.eq.s32.totalorder %s17, 0
    %p44 = por %p42, %p43
    %s45 = ssub.s32 %s11, %s18
    %p46 = scmp.eq.s32.totalorder %s45, 0
    %s48 = sadd.s32 %s47, 1
    %s49 = scalar_select %p46, %s47, %s48
    %p52 = pneg %p46
    %p53 = scmp.eq.s32.totalorder %s11, 1
    %p54 = por %p52, %p53
    %p55 = scmp.ne.s32.totalorder %s47, %s50
    %p56 = scmp.eq.s32.totalorder %s11, 0
    %p57 = por %p55, %p56
    %p58 = scmp.ne.s32.totalorder %s47, %s50
    %p59 = scmp.eq.s32.totalorder %s16, 1
    %p60 = por %p58, %p59
    %p61 = scmp.ne.s32.totalorder %s50, %s51
    %p62 = scmp.eq.s32.totalorder %s16, 0
    %p63 = por %p61, %p62
    %p64 = scmp.ne.s32.totalorder %s50, %s51
    %p65 = scmp.eq.s32.totalorder %s17, 1
    %p66 = por %p64, %p65
    %p68 = scmp.ne.s32.totalorder %s51, %s67
    %p69 = scmp.eq.s32.totalorder %s17, 0
    %p70 = por %p68, %p69
    %s72 = sadd.s32 %s71, 1
    %p75 = scmp.eq.s32.totalorder %s11, 1
    %p76 = scmp.ne.s32.totalorder %s71, %s73
    %p77 = scmp.eq.s32.totalorder %s11, 0
    %p78 = por %p76, %p77
    %p79 = scmp.ne.s32.totalorder %s71, %s73
    %p80 = scmp.eq.s32.totalorder %s16, 1
    %p81 = por %p79, %p80
    %p82 = scmp.ne.s32.totalorder %s73, %s74
    %p83 = scmp.eq.s32.totalorder %s16, 0
    %p84 = por %p82, %p83
    %p85 = scmp.ne.s32.totalorder %s73, %s74
    %p86 = scmp.eq.s32.totalorder %s17, 1
    %p87 = por %p85, %p86
    %p89 = scmp.ne.s32.totalorder %s74, %s88
    %p90 = scmp.eq.s32.totalorder %s17, 0
    %p91 = por %p89, %p90
    %s93 = sadd.s32 %s92, 1
    %p96 = scmp.eq.s32.totalorder %s11, 1
    %p97 = scmp.ne.s32.totalorder %s92, %s94
    %p98 = scmp.eq.s32.totalorder %s11, 0
    %p99 = por %p97, %p98
    %p100 = scmp.ne.s32.totalorder %s92, %s94
    %p101 = scmp.eq.s32.totalorder %s16, 1
    %p102 = por %p100, %p101
    %p103 = scmp.ne.s32.totalorder %s94, %s95
    %p104 = scmp.eq.s32.totalorder %s16, 0
    %p105 = por %p103, %p104
    %p106 = scmp.ne.s32.totalorder %s94, %s95
    %p107 = scmp.eq.s32.totalorder %s17, 1
    %p108 = por %p106, %p107
    %p110 = scmp.ne.s32.totalorder %s95, %s109
    %p111 = scmp.eq.s32.totalorder %s17, 0
    %p112 = por %p110, %p111
    %s114 = sadd.s32 %s113, 1
    %p117 = scmp.eq.s32.totalorder %s11, 1
    %p118 = scmp.ne.s32.totalorder %s113, %s115
    %p119 = scmp.eq.s32.totalorder %s11, 0
    %p120 = por %p118, %p119
    %p121 = scmp.ne.s32.totalorder %s113, %s115
    %p122 = scmp.eq.s32.totalorder %s16, 1
    %p123 = por %p121, %p122
    %p124 = scmp.ne.s32.totalorder %s115, %s116
    %p125 = scmp.eq.s32.totalorder %s16, 0
    %p126 = por %p124, %p125
    %p127 = scmp.ne.s32.totalorder %s115, %s116
    %p128 = scmp.eq.s32.totalorder %s17, 1
    %p129 = por %p127, %p128
    %p131 = scmp.ne.s32.totalorder %s116, %s130
    %p132 = scmp.eq.s32.totalorder %s17, 0
    %p133 = por %p131, %p132
    %s134 = ssub.s32 %s11, %s18
    %p135 = scmp.eq.s32.totalorder %s134, 0
    %s137 = sadd.s32 %s136, 1
    %s138 = scalar_select %p135, %s136, %s137
    %p141 = pneg %p135
    %p142 = scmp.eq.s32.totalorder %s11, 1
    %p143 = por %p141, %p142
    %p144 = scmp.ne.s32.totalorder %s136, %s139
    %p145 = scmp.eq.s32.totalorder %s11, 0
    %p146 = por %p144, %p145
    %p147 = scmp.ne.s32.totalorder %s136, %s139
    %p148 = scmp.eq.s32.totalorder %s16, 1
    %p149 = por %p147, %p148
    %p150 = scmp.ne.s32.totalorder %s139, %s140
    %p151 = scmp.eq.s32.totalorder %s16, 0
    %p152 = por %p150, %p151
    %p153 = scmp.ne.s32.totalorder %s139, %s140
    %p154 = scmp.eq.s32.totalorder %s17, 1
    %p155 = por %p153, %p154
    %p157 = scmp.ne.s32.totalorder %s140, %s156
    %p158 = scmp.eq.s32.totalorder %s17, 0
    %p159 = por %p157, %p158
    %p160 = scmp.le.s32.totalorder 1, %s11
    %p161 = scmp.lt.s32.totalorder %s11, 3
    %p162 = pnand %p160, %p161
    %p163 = pneg %p162
    // Predicated region
    $region9: #{neucf_forward.1} parent=5 // pred_check
      _
    $region10: #{neucf_forward.1} parent=5 // pred_check_branch
      %165 = sbr.rel (%p162) target = $region12
    $region11: #{neucf_forward.1} parent=5 // pred_region
      %s166 = ssub.s32 %s11, 1
      // Predicated region
      $region13: #{neucf_forward.1} parent=11 // pred_check
        %p167 = pneg %p84
      $region14: #{neucf_forward.1} parent=11 // pred_check_branch
        %169 = sbr.rel (%p167) target = $region16
      $region15: #{neucf_forward.1} parent=11 // pred_region
        _
      $region16: #{neucf_forward.1} parent=11 // pred_fallthru
        _
      // Predicated region
      $region17: #{neucf_forward.1} parent=11 // pred_check
        %p170 = pneg %p105
      $region18: #{neucf_forward.1} parent=11 // pred_check_branch
        %172 = sbr.rel (%p170) target = $region20
      $region19: #{neucf_forward.1} parent=11 // pred_region
        _
      $region20: #{neucf_forward.1} parent=11 // pred_fallthru
        _
      // Predicated region
      $region21: #{neucf_forward.1} parent=11 // pred_check
        %p173 = pneg %p126
      $region22: #{neucf_forward.1} parent=11 // pred_check_branch
        %175 = sbr.rel (%p173) target = $region24
      $region23: #{neucf_forward.1} parent=11 // pred_region
        _
      $region24: #{neucf_forward.1} parent=11 // pred_fallthru
        _
    $region12: #{neucf_forward.1} parent=5 // pred_fallthru
      _
    %p176 = scmp.lt.s32.totalorder %s11, 2
    // Predicated region
    $region25: #{neucf_forward.1} parent=5 // pred_check
      %p177 = pneg %p176
    $region26: #{neucf_forward.1} parent=5 // pred_check_branch
      %179 = sbr.rel (%p177) target = $region28
    $region27: #{neucf_forward.1} parent=5 // pred_region
      // Predicated region
      $region29: #{neucf_forward.1} parent=27 // pred_check
        %p180 = pneg %p31
      $region30: #{neucf_forward.1} parent=27 // pred_check_branch
        %182 = sbr.rel (%p180) target = $region32
      $region31: #{neucf_forward.1} parent=27 // pred_region
        %s183 = smul.u32 16, %s11
        %p184 = scmp.lt.s32.totalorder %s183, 31
        %s185 = scalar_select %p184, %s183, 31
        %s186 = smul.addr %s185, 8
        %s187 = scalar_lea.vmem %s0, %s186
        %s188 = smul.u32 16, %s11
      $region32: #{neucf_forward.1} parent=27 // pred_fallthru
        _
      // Predicated region
      $region33: #{neucf_forward.1} parent=27 // pred_check
        %p189 = pneg %p57
      $region34: #{neucf_forward.1} parent=27 // pred_check_branch
        %191 = sbr.rel (%p189) target = $region36
      $region35: #{neucf_forward.1} parent=27 // pred_region
        %s192 = smul.u32 16, %s11
        %p193 = scmp.lt.s32.totalorder %s192, 31
        %s194 = scalar_select %p193, %s192, 31
        %s195 = smul.addr %s194, 8
        %s196 = scalar_lea.vmem %s1, %s195
        %s197 = smul.u32 16, %s11
      $region36: #{neucf_forward.1} parent=27 // pred_fallthru
        _
    $region28: #{neucf_forward.1} parent=5 // pred_fallthru
      _
    %p198 = scmp.le.s32.totalorder 1, %s11
    %p199 = scmp.lt.s32.totalorder %s11, 3
    %p200 = pnand %p198, %p199
    %p201 = pneg %p200
    // Predicated region
    $region37: #{neucf_forward.1} parent=5 // pred_check
      _
    $region38: #{neucf_forward.1} parent=5 // pred_check_branch
      %203 = sbr.rel (%p200) target = $region40
    $region39: #{neucf_forward.1} parent=5 // pred_region
      %s204 = ssub.s32 %s11, 1
      %s205 = smul.u32 16, %s16
      %p206 = scmp.lt.s32.totalorder %s205, 31
      %s207 = scalar_select %p206, %s205, 31
      %s208 = smul.addr %s207, 8
      %s209 = scalar_lea.vmem %s0, %s208
      %p210 = pneg %p37
      %p211 = pneg %p34
      %s212 = smul.u32 16, %s16
      %p213 = scmp.lt.s32.totalorder %s212, 31
      %s214 = scalar_select %p213, %s212, 31
      %s215 = smul.addr %s214, 8
      %s216 = scalar_lea.vmem %s1, %s215
      %p217 = pneg %p63
      %p218 = pneg %p60
      %p219 = pneg %p84
      %p220 = pneg %p81
      %p221 = pneg %p105
      %p222 = pneg %p102
      %p223 = pneg %p126
      %p224 = pneg %p123
      %p225 = pneg %p152
      %p226 = pneg %p149
      %s227 = smul.u32 16, %s16
      %p228 = scmp.lt.s32.totalorder %s227, 31
      %s229 = scalar_select %p228, %s227, 31
      %s230 = smul.addr %s229, 8
      %s231 = scalar_lea.vmem %s5, %s230
      %s232 = smul.u32 16, %s16
      %p233 = scmp.lt.s32.totalorder %s232, 31
      %s234 = scalar_select %p233, %s232, 31
      %s235 = smul.addr %s234, 8
      %s236 = scalar_lea.vmem %s0, %s235
      %s237 = smul.u32 16, %s16
      %s238 = smul.u32 16, %s16
      %p239 = scmp.lt.s32.totalorder %s238, 31
      %s240 = scalar_select %p239, %s238, 31
      %s241 = smul.addr %s240, 8
      %s242 = scalar_lea.vmem %s1, %s241
      %s243 = smul.u32 16, %s16
      %s244 = smul.u32 16, %s16
      %p245 = scmp.lt.s32.totalorder %s244, 31
      %s246 = scalar_select %p245, %s244, 31
      %s247 = smul.addr %s246, 8
      %s248 = scalar_lea.vmem %s5, %s247
      %s249 = smul.u32 16, %s16
      %v250 = vld [vmem:[%s236] sm:$0xff]
      %v251 = vld [vmem:[%s236 + $0x8] sm:$0xff]
      %v252 = vld [vmem:[%s236 + $0x10] sm:$0xff]
      %v253 = vld [vmem:[%s236 + $0x18] sm:$0xff]
      %v254 = vld [vmem:[%s236 + $0x20] sm:$0xff]
      %v255 = vld [vmem:[%s236 + $0x28] sm:$0xff]
      %v256 = vld [vmem:[%s236 + $0x30] sm:$0xff]
      %v257 = vld [vmem:[%s236 + $0x38] sm:$0xff]
      %v258 = vld [vmem:[%s236 + $0x40] sm:$0xff]
      %v259 = vld [vmem:[%s236 + $0x48] sm:$0xff]
      %v260 = vld [vmem:[%s236 + $0x50] sm:$0xff]
      %v261 = vld [vmem:[%s236 + $0x58] sm:$0xff]
      %v262 = vld [vmem:[%s236 + $0x60] sm:$0xff]
      %v263 = vld [vmem:[%s236 + $0x68] sm:$0xff]
      %v264 = vld [vmem:[%s236 + $0x70] sm:$0xff]
      %v265 = vld [vmem:[%s236 + $0x78] sm:$0xff]
      %v266 = vld [vmem:[%s242] sm:$0xff]
      %v267 = vld [vmem:[%s242 + $0x8] sm:$0xff]
      %v268 = vld [vmem:[%s242 + $0x10] sm:$0xff]
      %v269 = vld [vmem:[%s242 + $0x18] sm:$0xff]
      %v270 = vld [vmem:[%s242 + $0x20] sm:$0xff]
      %v271 = vld [vmem:[%s242 + $0x28] sm:$0xff]
      %v272 = vld [vmem:[%s242 + $0x30] sm:$0xff]
      %v273 = vld [vmem:[%s242 + $0x38] sm:$0xff]
      %v274 = vld [vmem:[%s242 + $0x40] sm:$0xff]
      %v275 = vld [vmem:[%s242 + $0x48] sm:$0xff]
      %v276 = vld [vmem:[%s242 + $0x50] sm:$0xff]
      %v277 = vld [vmem:[%s242 + $0x58] sm:$0xff]
      %v278 = vld [vmem:[%s242 + $0x60] sm:$0xff]
      %v279 = vld [vmem:[%s242 + $0x68] sm:$0xff]
      %v280 = vld [vmem:[%s242 + $0x70] sm:$0xff]
      %v281 = vld [vmem:[%s242 + $0x78] sm:$0xff]
      %v282 = vlaneseq
      %v283 = vand.u32 %v282, 127
      %284 = vset.pattern.permute.xlu0 0
      %285 = vperm.xlu0 %284, %v250
      %v286 = vpop.permute.xlu0 %285
      %287 = vset.pattern.permute.xlu0 0
      %288 = vperm.xlu0 %287, %v251
      %v289 = vpop.permute.xlu0 %288
      %290 = vset.pattern.permute.xlu0 0
      %291 = vperm.xlu0 %290, %v252
      %v292 = vpop.permute.xlu0 %291
      %293 = vset.pattern.permute.xlu0 0
      %294 = vperm.xlu0 %293, %v253
      %v295 = vpop.permute.xlu0 %294
      %296 = vset.pattern.permute.xlu0 0
      %297 = vperm.xlu0 %296, %v254
      %v298 = vpop.permute.xlu0 %297
      %299 = vset.pattern.permute.xlu0 0
      %300 = vperm.xlu0 %299, %v255
      %v301 = vpop.permute.xlu0 %300
      %302 = vset.pattern.permute.xlu0 0
      %303 = vperm.xlu0 %302, %v256
      %v304 = vpop.permute.xlu0 %303
      %305 = vset.pattern.permute.xlu0 0
      %306 = vperm.xlu0 %305, %v257
      %v307 = vpop.permute.xlu0 %306
      %308 = vset.pattern.permute.xlu0 0
      %309 = vperm.xlu0 %308, %v258
      %v310 = vpop.permute.xlu0 %309
      %311 = vset.pattern.permute.xlu0 0
      %312 = vperm.xlu0 %311, %v259
      %v313 = vpop.permute.xlu0 %312
      %314 = vset.pattern.permute.xlu0 0
      %315 = vperm.xlu0 %314, %v260
      %v316 = vpop.permute.xlu0 %315
      %317 = vset.pattern.permute.xlu0 0
      %318 = vperm.xlu0 %317, %v261
      %v319 = vpop.permute.xlu0 %318
      %320 = vset.pattern.permute.xlu0 0
      %321 = vperm.xlu0 %320, %v262
      %v322 = vpop.permute.xlu0 %321
      %323 = vset.pattern.permute.xlu0 0
      %324 = vperm.xlu0 %323, %v263
      %v325 = vpop.permute.xlu0 %324
      %326 = vset.pattern.permute.xlu0 0
      %327 = vperm.xlu0 %326, %v264
      %v328 = vpop.permute.xlu0 %327
      %329 = vset.pattern.permute.xlu0 0
      %330 = vperm.xlu0 %329, %v265
      %v331 = vpop.permute.xlu0 %330
      %vm332 = vcmp.eq.s32.totalorder %v286, %v283
      %vm333 = vcmp.eq.s32.totalorder %v289, %v283
      %vm334 = vcmp.eq.s32.totalorder %v292, %v283
      %vm335 = vcmp.eq.s32.totalorder %v295, %v283
      %vm336 = vcmp.eq.s32.totalorder %v298, %v283
      %vm337 = vcmp.eq.s32.totalorder %v301, %v283
      %vm338 = vcmp.eq.s32.totalorder %v304, %v283
      %vm339 = vcmp.eq.s32.totalorder %v307, %v283
      %vm340 = vcmp.eq.s32.totalorder %v310, %v283
      %vm341 = vcmp.eq.s32.totalorder %v313, %v283
      %vm342 = vcmp.eq.s32.totalorder %v316, %v283
      %vm343 = vcmp.eq.s32.totalorder %v319, %v283
      %vm344 = vcmp.eq.s32.totalorder %v322, %v283
      %vm345 = vcmp.eq.s32.totalorder %v325, %v283
      %vm346 = vcmp.eq.s32.totalorder %v328, %v283
      %vm347 = vcmp.eq.s32.totalorder %v331, %v283
      %v348 = vsel %vm332, 1, 0
      %v349 = vsel %vm333, 1, 0
      %v350 = vsel %vm334, 1, 0
      %v351 = vsel %vm335, 1, 0
      %v352 = vsel %vm336, 1, 0
      %v353 = vsel %vm337, 1, 0
      %v354 = vsel %vm338, 1, 0
      %v355 = vsel %vm339, 1, 0
      %v356 = vsel %vm340, 1, 0
      %v357 = vsel %vm341, 1, 0
      %v358 = vsel %vm342, 1, 0
      %v359 = vsel %vm343, 1, 0
      %v360 = vsel %vm344, 1, 0
      %v361 = vsel %vm345, 1, 0
      %v362 = vsel %vm346, 1, 0
      %v363 = vsel %vm347, 1, 0
      %v364 = vcvt.s32.f32 %v348
      %v365 = vcvt.s32.f32 %v349
      %v366 = vcvt.s32.f32 %v350
      %v367 = vcvt.s32.f32 %v351
      %v368 = vcvt.s32.f32 %v352
      %v369 = vcvt.s32.f32 %v353
      %v370 = vcvt.s32.f32 %v354
      %v371 = vcvt.s32.f32 %v355
      %v372 = vcvt.s32.f32 %v356
      %v373 = vcvt.s32.f32 %v357
      %v374 = vcvt.s32.f32 %v358
      %v375 = vcvt.s32.f32 %v359
      %v376 = vcvt.s32.f32 %v360
      %v377 = vcvt.s32.f32 %v361
      %v378 = vcvt.s32.f32 %v362
      %v379 = vcvt.s32.f32 %v363
      %v380 = vadd.s32 %v283, 128
      %v381 = vadd.s32 %v283, 256
      %v382 = vadd.s32 %v283, 384
      %v383 = vadd.s32 %v283, 512
      %v384 = vadd.s32 %v283, 640
      %v385 = vadd.s32 %v283, 768
      %v386 = vadd.s32 %v283, 896
      %v387 = vadd.s32 %v283, 1024
      %v388 = vadd.s32 %v283, 1152
      %v389 = vadd.s32 %v283, 1280
      %v390 = vadd.s32 %v283, 1408
      %v391 = vadd.s32 %v283, 1536
      %v392 = vadd.s32 %v283, 1664
      %v393 = vadd.s32 %v283, 1792
      %v394 = vadd.s32 %v283, 1920
      %v395 = vadd.s32 %v283, 2048
      %396 = vset.pattern.permute.xlu0 0
      %397 = vperm.xlu0 %396, %v266
      %v398 = vpop.permute.xlu0 %397
      %399 = vset.pattern.permute.xlu0 0
      %400 = vperm.xlu0 %399, %v267
      %v401 = vpop.permute.xlu0 %400
      %402 = vset.pattern.permute.xlu0 0
      %403 = vperm.xlu0 %402, %v268
      %v404 = vpop.permute.xlu0 %403
      %405 = vset.pattern.permute.xlu0 0
      %406 = vperm.xlu0 %405, %v269
      %v407 = vpop.permute.xlu0 %406
      %408 = vset.pattern.permute.xlu0 0
      %409 = vperm.xlu0 %408, %v270
      %v410 = vpop.permute.xlu0 %409
      %411 = vset.pattern.permute.xlu0 0
      %412 = vperm.xlu0 %411, %v271
      %v413 = vpop.permute.xlu0 %412
      %414 = vset.pattern.permute.xlu0 0
      %415 = vperm.xlu0 %414, %v272
      %v416 = vpop.permute.xlu0 %415
      %417 = vset.pattern.permute.xlu0 0
      %418 = vperm.xlu0 %417, %v273
      %v419 = vpop.permute.xlu0 %418
      %420 = vset.pattern.permute.xlu0 0
      %421 = vperm.xlu0 %420, %v274
      %v422 = vpop.permute.xlu0 %421
      %423 = vset.pattern.permute.xlu0 0
      %424 = vperm.xlu0 %423, %v275
      %v425 = vpop.permute.xlu0 %424
      %426 = vset.pattern.permute.xlu0 0
      %427 = vperm.xlu0 %426, %v276
      %v428 = vpop.permute.xlu0 %427
      %429 = vset.pattern.permute.xlu0 0
      %430 = vperm.xlu0 %429, %v277
      %v431 = vpop.permute.xlu0 %430
      %432 = vset.pattern.permute.xlu0 0
      %433 = vperm.xlu0 %432, %v278
      %v434 = vpop.permute.xlu0 %433
      %435 = vset.pattern.permute.xlu0 0
      %436 = vperm.xlu0 %435, %v279
      %v437 = vpop.permute.xlu0 %436
      %438 = vset.pattern.permute.xlu0 0
      %439 = vperm.xlu0 %438, %v280
      %v440 = vpop.permute.xlu0 %439
      %441 = vset.pattern.permute.xlu0 0
      %442 = vperm.xlu0 %441, %v281
      %v443 = vpop.permute.xlu0 %442
      %vm444 = vcmp.eq.s32.totalorder %v398, %v283
      %vm445 = vcmp.eq.s32.totalorder %v398, %v380
      %vm446 = vcmp.eq.s32.totalorder %v398, %v381
      %vm447 = vcmp.eq.s32.totalorder %v398, %v382
      %vm448 = vcmp.eq.s32.totalorder %v398, %v383
      %vm449 = vcmp.eq.s32.totalorder %v398, %v384
      %vm450 = vcmp.eq.s32.totalorder %v398, %v385
      %vm451 = vcmp.eq.s32.totalorder %v398, %v386
      %vm452 = vcmp.eq.s32.totalorder %v398, %v387
      %vm453 = vcmp.eq.s32.totalorder %v398, %v388
      %vm454 = vcmp.eq.s32.totalorder %v398, %v389
      %vm455 = vcmp.eq.s32.totalorder %v398, %v390
      %vm456 = vcmp.eq.s32.totalorder %v398, %v391
      %vm457 = vcmp.eq.s32.totalorder %v398, %v392
      %vm458 = vcmp.eq.s32.totalorder %v398, %v393
      %vm459 = vcmp.eq.s32.totalorder %v398, %v394
      %vm460 = vcmp.eq.s32.totalorder %v398, %v395
      %vm461 = vcmp.eq.s32.totalorder %v401, %v283
      %vm462 = vcmp.eq.s32.totalorder %v401, %v380
      %vm463 = vcmp.eq.s32.totalorder %v401, %v381
      %vm464 = vcmp.eq.s32.totalorder %v401, %v382
      %vm465 = vcmp.eq.s32.totalorder %v401, %v383
      %vm466 = vcmp.eq.s32.totalorder %v401, %v384
      %vm467 = vcmp.eq.s32.totalorder %v401, %v385
      %vm468 = vcmp.eq.s32.totalorder %v401, %v386
      %vm469 = vcmp.eq.s32.totalorder %v401, %v387
      %vm470 = vcmp.eq.s32.totalorder %v401, %v388
      %vm471 = vcmp.eq.s32.totalorder %v401, %v389
      %vm472 = vcmp.eq.s32.totalorder %v401, %v390
      %vm473 = vcmp.eq.s32.totalorder %v401, %v391
      %vm474 = vcmp.eq.s32.totalorder %v401, %v392
      %vm475 = vcmp.eq.s32.totalorder %v401, %v393
      %vm476 = vcmp.eq.s32.totalorder %v401, %v394
      %vm477 = vcmp.eq.s32.totalorder %v401, %v395
      %vm478 = vcmp.eq.s32.totalorder %v404, %v283
      %vm479 = vcmp.eq.s32.totalorder %v404, %v380
      %vm480 = vcmp.eq.s32.totalorder %v404, %v381
      %vm481 = vcmp.eq.s32.totalorder %v404, %v382
      %vm482 = vcmp.eq.s32.totalorder %v404, %v383
      %vm483 = vcmp.eq.s32.totalorder %v404, %v384
      %vm484 = vcmp.eq.s32.totalorder %v404, %v385
      %vm485 = vcmp.eq.s32.totalorder %v404, %v386
      %vm486 = vcmp.eq.s32.totalorder %v404, %v387
      %vm487 = vcmp.eq.s32.totalorder %v404, %v388
      %vm488 = vcmp.eq.s32.totalorder %v404, %v389
      %vm489 = vcmp.eq.s32.totalorder %v404, %v390
      %vm490 = vcmp.eq.s32.totalorder %v404, %v391
      %vm491 = vcmp.eq.s32.totalorder %v404, %v392
      %vm492 = vcmp.eq.s32.totalorder %v404, %v393
      %vm493 = vcmp.eq.s32.totalorder %v404, %v394
      %vm494 = vcmp.eq.s32.totalorder %v404, %v395
      %vm495 = vcmp.eq.s32.totalorder %v407, %v283
      %vm496 = vcmp.eq.s32.totalorder %v407, %v380
      %vm497 = vcmp.eq.s32.totalorder %v407, %v381
      %vm498 = vcmp.eq.s32.totalorder %v407, %v382
      %vm499 = vcmp.eq.s32.totalorder %v407, %v383
      %vm500 = vcmp.eq.s32.totalorder %v407, %v384
      %vm501 = vcmp.eq.s32.totalorder %v407, %v385
      %vm502 = vcmp.eq.s32.totalorder %v407, %v386
      %vm503 = vcmp.eq.s32.totalorder %v407, %v387
      %vm504 = vcmp.eq.s32.totalorder %v407, %v388
      %vm505 = vcmp.eq.s32.totalorder %v407, %v389
      %vm506 = vcmp.eq.s32.totalorder %v407, %v390
      %vm507 = vcmp.eq.s32.totalorder %v407, %v391
      %vm508 = vcmp.eq.s32.totalorder %v407, %v392
      %vm509 = vcmp.eq.s32.totalorder %v407, %v393
      %vm510 = vcmp.eq.s32.totalorder %v407, %v394
      %vm511 = vcmp.eq.s32.totalorder %v407, %v395
      %vm512 = vcmp.eq.s32.totalorder %v410, %v283
      %vm513 = vcmp.eq.s32.totalorder %v410, %v380
      %vm514 = vcmp.eq.s32.totalorder %v410, %v381
      %vm515 = vcmp.eq.s32.totalorder %v410, %v382
      %vm516 = vcmp.eq.s32.totalorder %v410, %v383
      %vm517 = vcmp.eq.s32.totalorder %v410, %v384
      %vm518 = vcmp.eq.s32.totalorder %v410, %v385
      %vm519 = vcmp.eq.s32.totalorder %v410, %v386
      %vm520 = vcmp.eq.s32.totalorder %v410, %v387
      %vm521 = vcmp.eq.s32.totalorder %v410, %v388
      %vm522 = vcmp.eq.s32.totalorder %v410, %v389
      %vm523 = vcmp.eq.s32.totalorder %v410, %v390
      %vm524 = vcmp.eq.s32.totalorder %v410, %v391
      %vm525 = vcmp.eq.s32.totalorder %v410, %v392
      %vm526 = vcmp.eq.s32.totalorder %v410, %v393
      %vm527 = vcmp.eq.s32.totalorder %v410, %v394
      %vm528 = vcmp.eq.s32.totalorder %v410, %v395
      %vm529 = vcmp.eq.s32.totalorder %v413, %v283
      %vm530 = vcmp.eq.s32.totalorder %v413, %v380
      %vm531 = vcmp.eq.s32.totalorder %v413, %v381
      %vm532 = vcmp.eq.s32.totalorder %v413, %v382
      %vm533 = vcmp.eq.s32.totalorder %v413, %v383
      %vm534 = vcmp.eq.s32.totalorder %v413, %v384
      %vm535 = vcmp.eq.s32.totalorder %v413, %v385
      %vm536 = vcmp.eq.s32.totalorder %v413, %v386
      %vm537 = vcmp.eq.s32.totalorder %v413, %v387
      %vm538 = vcmp.eq.s32.totalorder %v413, %v388
      %vm539 = vcmp.eq.s32.totalorder %v413, %v389
      %vm540 = vcmp.eq.s32.totalorder %v413, %v390
      %vm541 = vcmp.eq.s32.totalorder %v413, %v391
      %vm542 = vcmp.eq.s32.totalorder %v413, %v392
      %vm543 = vcmp.eq.s32.totalorder %v413, %v393
      %vm544 = vcmp.eq.s32.totalorder %v413, %v394
      %vm545 = vcmp.eq.s32.totalorder %v413, %v395
      %vm546 = vcmp.eq.s32.totalorder %v416, %v283
      %vm547 = vcmp.eq.s32.totalorder %v416, %v380
      %vm548 = vcmp.eq.s32.totalorder %v416, %v381
      %vm549 = vcmp.eq.s32.totalorder %v416, %v382
      %vm550 = vcmp.eq.s32.totalorder %v416, %v383
      %vm551 = vcmp.eq.s32.totalorder %v416, %v384
      %vm552 = vcmp.eq.s32.totalorder %v416, %v385
      %vm553 = vcmp.eq.s32.totalorder %v416, %v386
      %vm554 = vcmp.eq.s32.totalorder %v416, %v387
      %vm555 = vcmp.eq.s32.totalorder %v416, %v388
      %vm556 = vcmp.eq.s32.totalorder %v416, %v389
      %vm557 = vcmp.eq.s32.totalorder %v416, %v390
      %vm558 = vcmp.eq.s32.totalorder %v416, %v391
      %vm559 = vcmp.eq.s32.totalorder %v416, %v392
      %vm560 = vcmp.eq.s32.totalorder %v416, %v393
      %vm561 = vcmp.eq.s32.totalorder %v416, %v394
      %vm562 = vcmp.eq.s32.totalorder %v416, %v395
      %vm563 = vcmp.eq.s32.totalorder %v419, %v283
      %vm564 = vcmp.eq.s32.totalorder %v419, %v380
      %vm565 = vcmp.eq.s32.totalorder %v419, %v381
      %vm566 = vcmp.eq.s32.totalorder %v419, %v382
      %vm567 = vcmp.eq.s32.totalorder %v419, %v383
      %vm568 = vcmp.eq.s32.totalorder %v419, %v384
      %vm569 = vcmp.eq.s32.totalorder %v419, %v385
      %vm570 = vcmp.eq.s32.totalorder %v419, %v386
      %vm571 = vcmp.eq.s32.totalorder %v419, %v387
      %vm572 = vcmp.eq.s32.totalorder %v419, %v388
      %vm573 = vcmp.eq.s32.totalorder %v419, %v389
      %vm574 = vcmp.eq.s32.totalorder %v419, %v390
      %vm575 = vcmp.eq.s32.totalorder %v419, %v391
      %vm576 = vcmp.eq.s32.totalorder %v419, %v392
      %vm577 = vcmp.eq.s32.totalorder %v419, %v393
      %vm578 = vcmp.eq.s32.totalorder %v419, %v394
      %vm579 = vcmp.eq.s32.totalorder %v419, %v395
      %vm580 = vcmp.eq.s32.totalorder %v422, %v283
      %vm581 = vcmp.eq.s32.totalorder %v422, %v380
      %vm582 = vcmp.eq.s32.totalorder %v422, %v381
      %vm583 = vcmp.eq.s32.totalorder %v422, %v382
      %vm584 = vcmp.eq.s32.totalorder %v422, %v383
      %vm585 = vcmp.eq.s32.totalorder %v422, %v384
      %vm586 = vcmp.eq.s32.totalorder %v422, %v385
      %vm587 = vcmp.eq.s32.totalorder %v422, %v386
      %vm588 = vcmp.eq.s32.totalorder %v422, %v387
      %vm589 = vcmp.eq.s32.totalorder %v422, %v388
      %vm590 = vcmp.eq.s32.totalorder %v422, %v389
      %vm591 = vcmp.eq.s32.totalorder %v422, %v390
      %vm592 = vcmp.eq.s32.totalorder %v422, %v391
      %vm593 = vcmp.eq.s32.totalorder %v422, %v392
      %vm594 = vcmp.eq.s32.totalorder %v422, %v393
      %vm595 = vcmp.eq.s32.totalorder %v422, %v394
      %vm596 = vcmp.eq.s32.totalorder %v422, %v395
      %vm597 = vcmp.eq.s32.totalorder %v425, %v283
      %vm598 = vcmp.eq.s32.totalorder %v425, %v380
      %vm599 = vcmp.eq.s32.totalorder %v425, %v381
      %vm600 = vcmp.eq.s32.totalorder %v425, %v382
      %vm601 = vcmp.eq.s32.totalorder %v425, %v383
      %vm602 = vcmp.eq.s32.totalorder %v425, %v384
      %vm603 = vcmp.eq.s32.totalorder %v425, %v385
      %vm604 = vcmp.eq.s32.totalorder %v425, %v386
      %vm605 = vcmp.eq.s32.totalorder %v425, %v387
      %vm606 = vcmp.eq.s32.totalorder %v425, %v388
      %vm607 = vcmp.eq.s32.totalorder %v425, %v389
      %vm608 = vcmp.eq.s32.totalorder %v425, %v390
      %vm609 = vcmp.eq.s32.totalorder %v425, %v391
      %vm610 = vcmp.eq.s32.totalorder %v425, %v392
      %vm611 = vcmp.eq.s32.totalorder %v425, %v393
      %vm612 = vcmp.eq.s32.totalorder %v425, %v394
      %vm613 = vcmp.eq.s32.totalorder %v425, %v395
      %vm614 = vcmp.eq.s32.totalorder %v428, %v283
      %vm615 = vcmp.eq.s32.totalorder %v428, %v380
      %vm616 = vcmp.eq.s32.totalorder %v428, %v381
      %vm617 = vcmp.eq.s32.totalorder %v428, %v382
      %vm618 = vcmp.eq.s32.totalorder %v428, %v383
      %vm619 = vcmp.eq.s32.totalorder %v428, %v384
      %vm620 = vcmp.eq.s32.totalorder %v428, %v385
      %vm621 = vcmp.eq.s32.totalorder %v428, %v386
      %vm622 = vcmp.eq.s32.totalorder %v428, %v387
      %vm623 = vcmp.eq.s32.totalorder %v428, %v388
      %vm624 = vcmp.eq.s32.totalorder %v428, %v389
      %vm625 = vcmp.eq.s32.totalorder %v428, %v390
      %vm626 = vcmp.eq.s32.totalorder %v428, %v391
      %vm627 = vcmp.eq.s32.totalorder %v428, %v392
      %vm628 = vcmp.eq.s32.totalorder %v428, %v393
      %vm629 = vcmp.eq.s32.totalorder %v428, %v394
      %vm630 = vcmp.eq.s32.totalorder %v428, %v395
      %vm631 = vcmp.eq.s32.totalorder %v431, %v283
      %vm632 = vcmp.eq.s32.totalorder %v431, %v380
      %vm633 = vcmp.eq.s32.totalorder %v431, %v381
      %vm634 = vcmp.eq.s32.totalorder %v431, %v382
      %vm635 = vcmp.eq.s32.totalorder %v431, %v383
      %vm636 = vcmp.eq.s32.totalorder %v431, %v384
      %vm637 = vcmp.eq.s32.totalorder %v431, %v385
      %vm638 = vcmp.eq.s32.totalorder %v431, %v386
      %vm639 = vcmp.eq.s32.totalorder %v431, %v387
      %vm640 = vcmp.eq.s32.totalorder %v431, %v388
      %vm641 = vcmp.eq.s32.totalorder %v431, %v389
      %vm642 = vcmp.eq.s32.totalorder %v431, %v390
      %vm643 = vcmp.eq.s32.totalorder %v431, %v391
      %vm644 = vcmp.eq.s32.totalorder %v431, %v392
      %vm645 = vcmp.eq.s32.totalorder %v431, %v393
      %vm646 = vcmp.eq.s32.totalorder %v431, %v394
      %vm647 = vcmp.eq.s32.totalorder %v431, %v395
      %vm648 = vcmp.eq.s32.totalorder %v434, %v283
      %vm649 = vcmp.eq.s32.totalorder %v434, %v380
      %vm650 = vcmp.eq.s32.totalorder %v434, %v381
      %vm651 = vcmp.eq.s32.totalorder %v434, %v382
      %vm652 = vcmp.eq.s32.totalorder %v434, %v383
      %vm653 = vcmp.eq.s32.totalorder %v434, %v384
      %vm654 = vcmp.eq.s32.totalorder %v434, %v385
      %vm655 = vcmp.eq.s32.totalorder %v434, %v386
      %vm656 = vcmp.eq.s32.totalorder %v434, %v387
      %vm657 = vcmp.eq.s32.totalorder %v434, %v388
      %vm658 = vcmp.eq.s32.totalorder %v434, %v389
      %vm659 = vcmp.eq.s32.totalorder %v434, %v390
      %vm660 = vcmp.eq.s32.totalorder %v434, %v391
      %vm661 = vcmp.eq.s32.totalorder %v434, %v392
      %vm662 = vcmp.eq.s32.totalorder %v434, %v393
      %vm663 = vcmp.eq.s32.totalorder %v434, %v394
      %vm664 = vcmp.eq.s32.totalorder %v434, %v395
      %vm665 = vcmp.eq.s32.totalorder %v437, %v283
      %vm666 = vcmp.eq.s32.totalorder %v437, %v380
      %vm667 = vcmp.eq.s32.totalorder %v437, %v381
      %vm668 = vcmp.eq.s32.totalorder %v437, %v382
      %vm669 = vcmp.eq.s32.totalorder %v437, %v383
      %vm670 = vcmp.eq.s32.totalorder %v437, %v384
      %vm671 = vcmp.eq.s32.totalorder %v437, %v385
      %vm672 = vcmp.eq.s32.totalorder %v437, %v386
      %vm673 = vcmp.eq.s32.totalorder %v437, %v387
      %vm674 = vcmp.eq.s32.totalorder %v437, %v388
      %vm675 = vcmp.eq.s32.totalorder %v437, %v389
      %vm676 = vcmp.eq.s32.totalorder %v437, %v390
      %vm677 = vcmp.eq.s32.totalorder %v437, %v391
      %vm678 = vcmp.eq.s32.totalorder %v437, %v392
      %vm679 = vcmp.eq.s32.totalorder %v437, %v393
      %vm680 = vcmp.eq.s32.totalorder %v437, %v394
      %vm681 = vcmp.eq.s32.totalorder %v437, %v395
      %vm682 = vcmp.eq.s32.totalorder %v440, %v283
      %vm683 = vcmp.eq.s32.totalorder %v440, %v380
      %vm684 = vcmp.eq.s32.totalorder %v440, %v381
      %vm685 = vcmp.eq.s32.totalorder %v440, %v382
      %vm686 = vcmp.eq.s32.totalorder %v440, %v383
      %vm687 = vcmp.eq.s32.totalorder %v440, %v384
      %vm688 = vcmp.eq.s32.totalorder %v440, %v385
      %vm689 = vcmp.eq.s32.totalorder %v440, %v386
      %vm690 = vcmp.eq.s32.totalorder %v440, %v387
      %vm691 = vcmp.eq.s32.totalorder %v440, %v388
      %vm692 = vcmp.eq.s32.totalorder %v440, %v389
      %vm693 = vcmp.eq.s32.totalorder %v440, %v390
      %vm694 = vcmp.eq.s32.totalorder %v440, %v391
      %vm695 = vcmp.eq.s32.totalorder %v440, %v392
      %vm696 = vcmp.eq.s32.totalorder %v440, %v393
      %vm697 = vcmp.eq.s32.totalorder %v440, %v394
      %vm698 = vcmp.eq.s32.totalorder %v440, %v395
      %vm699 = vcmp.eq.s32.totalorder %v443, %v283
      %vm700 = vcmp.eq.s32.totalorder %v443, %v380
      %vm701 = vcmp.eq.s32.totalorder %v443, %v381
      %vm702 = vcmp.eq.s32.totalorder %v443, %v382
      %vm703 = vcmp.eq.s32.totalorder %v443, %v383
      %vm704 = vcmp.eq.s32.totalorder %v443, %v384
      %vm705 = vcmp.eq.s32.totalorder %v443, %v385
      %vm706 = vcmp.eq.s32.totalorder %v443, %v386
      %vm707 = vcmp.eq.s32.totalorder %v443, %v387
      %vm708 = vcmp.eq.s32.totalorder %v443, %v388
      %vm709 = vcmp.eq.s32.totalorder %v443, %v389
      %vm710 = vcmp.eq.s32.totalorder %v443, %v390
      %vm711 = vcmp.eq.s32.totalorder %v443, %v391
      %vm712 = vcmp.eq.s32.totalorder %v443, %v392
      %vm713 = vcmp.eq.s32.totalorder %v443, %v393
      %vm714 = vcmp.eq.s32.totalorder %v443, %v394
      %vm715 = vcmp.eq.s32.totalorder %v443, %v395
      %v716 = vsel %vm444, 1, 0
      %v717 = vsel %vm445, 1, 0
      %v718 = vsel %vm446, 1, 0
      %v719 = vsel %vm447, 1, 0
      %v720 = vsel %vm448, 1, 0
      %v721 = vsel %vm449, 1, 0
      %v722 = vsel %vm450, 1, 0
      %v723 = vsel %vm451, 1, 0
      %v724 = vsel %vm452, 1, 0
      %v725 = vsel %vm453, 1, 0
      %v726 = vsel %vm454, 1, 0
      %v727 = vsel %vm455, 1, 0
      %v728 = vsel %vm456, 1, 0
      %v729 = vsel %vm457, 1, 0
      %v730 = vsel %vm458, 1, 0
      %v731 = vsel %vm459, 1, 0
      %v732 = vsel %vm460, 1, 0
      %v733 = vsel %vm461, 1, 0
      %v734 = vsel %vm462, 1, 0
      %v735 = vsel %vm463, 1, 0
      %v736 = vsel %vm464, 1, 0
      %v737 = vsel %vm465, 1, 0
      %v738 = vsel %vm466, 1, 0
      %v739 = vsel %vm467, 1, 0
      %v740 = vsel %vm468, 1, 0
      %v741 = vsel %vm469, 1, 0
      %v742 = vsel %vm470, 1, 0
      %v743 = vsel %vm471, 1, 0
      %v744 = vsel %vm472, 1, 0
      %v745 = vsel %vm473, 1, 0
      %v746 = vsel %vm474, 1, 0
      %v747 = vsel %vm475, 1, 0
      %v748 = vsel %vm476, 1, 0
      %v749 = vsel %vm477, 1, 0
      %v750 = vsel %vm478, 1, 0
      %v751 = vsel %vm479, 1, 0
      %v752 = vsel %vm480, 1, 0
      %v753 = vsel %vm481, 1, 0
      %v754 = vsel %vm482, 1, 0
      %v755 = vsel %vm483, 1, 0
      %v756 = vsel %vm484, 1, 0
      %v757 = vsel %vm485, 1, 0
      %v758 = vsel %vm486, 1, 0
      %v759 = vsel %vm487, 1, 0
      %v760 = vsel %vm488, 1, 0
      %v761 = vsel %vm489, 1, 0
      %v762 = vsel %vm490, 1, 0
      %v763 = vsel %vm491, 1, 0
      %v764 = vsel %vm492, 1, 0
      %v765 = vsel %vm493, 1, 0
      %v766 = vsel %vm494, 1, 0
      %v767 = vsel %vm495, 1, 0
      %v768 = vsel %vm496, 1, 0
      %v769 = vsel %vm497, 1, 0
      %v770 = vsel %vm498, 1, 0
      %v771 = vsel %vm499, 1, 0
      %v772 = vsel %vm500, 1, 0
      %v773 = vsel %vm501, 1, 0
      %v774 = vsel %vm502, 1, 0
      %v775 = vsel %vm503, 1, 0
      %v776 = vsel %vm504, 1, 0
      %v777 = vsel %vm505, 1, 0
      %v778 = vsel %vm506, 1, 0
      %v779 = vsel %vm507, 1, 0
      %v780 = vsel %vm508, 1, 0
      %v781 = vsel %vm509, 1, 0
      %v782 = vsel %vm510, 1, 0
      %v783 = vsel %vm511, 1, 0
      %v784 = vsel %vm512, 1, 0
      %v785 = vsel %vm513, 1, 0
      %v786 = vsel %vm514, 1, 0
      %v787 = vsel %vm515, 1, 0
      %v788 = vsel %vm516, 1, 0
      %v789 = vsel %vm517, 1, 0
      %v790 = vsel %vm518, 1, 0
      %v791 = vsel %vm519, 1, 0
      %v792 = vsel %vm520, 1, 0
      %v793 = vsel %vm521, 1, 0
      %v794 = vsel %vm522, 1, 0
      %v795 = vsel %vm523, 1, 0
      %v796 = vsel %vm524, 1, 0
      %v797 = vsel %vm525, 1, 0
      %v798 = vsel %vm526, 1, 0
      %v799 = vsel %vm527, 1, 0
      %v800 = vsel %vm528, 1, 0
      %v801 = vsel %vm529, 1, 0
      %v802 = vsel %vm530, 1, 0
      %v803 = vsel %vm531, 1, 0
      %v804 = vsel %vm532, 1, 0
      %v805 = vsel %vm533, 1, 0
      %v806 = vsel %vm534, 1, 0
      %v807 = vsel %vm535, 1, 0
      %v808 = vsel %vm536, 1, 0
      %v809 = vsel %vm537, 1, 0
      %v810 = vsel %vm538, 1, 0
      %v811 = vsel %vm539, 1, 0
      %v812 = vsel %vm540, 1, 0
      %v813 = vsel %vm541, 1, 0
      %v814 = vsel %vm542, 1, 0
      %v815 = vsel %vm543, 1, 0
      %v816 = vsel %vm544, 1, 0
      %v817 = vsel %vm545, 1, 0
      %v818 = vsel %vm546, 1, 0
      %v819 = vsel %vm547, 1, 0
      %v820 = vsel %vm548, 1, 0
      %v821 = vsel %vm549, 1, 0
      %v822 = vsel %vm550, 1, 0
      %v823 = vsel %vm551, 1, 0
      %v824 = vsel %vm552, 1, 0
      %v825 = vsel %vm553, 1, 0
      %v826 = vsel %vm554, 1, 0
      %v827 = vsel %vm555, 1, 0
      %v828 = vsel %vm556, 1, 0
      %v829 = vsel %vm557, 1, 0
      %v830 = vsel %vm558, 1, 0
      %v831 = vsel %vm559, 1, 0
      %v832 = vsel %vm560, 1, 0
      %v833 = vsel %vm561, 1, 0
      %v834 = vsel %vm562, 1, 0
      %v835 = vsel %vm563, 1, 0
      %v836 = vsel %vm564, 1, 0
      %v837 = vsel %vm565, 1, 0
      %v838 = vsel %vm566, 1, 0
      %v839 = vsel %vm567, 1, 0
      %v840 = vsel %vm568, 1, 0
      %v841 = vsel %vm569, 1, 0
      %v842 = vsel %vm570, 1, 0
      %v843 = vsel %vm571, 1, 0
      %v844 = vsel %vm572, 1, 0
      %v845 = vsel %vm573, 1, 0
      %v846 = vsel %vm574, 1, 0
      %v847 = vsel %vm575, 1, 0
      %v848 = vsel %vm576, 1, 0
      %v849 = vsel %vm577, 1, 0
      %v850 = vsel %vm578, 1, 0
      %v851 = vsel %vm579, 1, 0
      %v852 = vsel %vm580, 1, 0
      %v853 = vsel %vm581, 1, 0
      %v854 = vsel %vm582, 1, 0
      %v855 = vsel %vm583, 1, 0
      %v856 = vsel %vm584, 1, 0
      %v857 = vsel %vm585, 1, 0
      %v858 = vsel %vm586, 1, 0
      %v859 = vsel %vm587, 1, 0
      %v860 = vsel %vm588, 1, 0
      %v861 = vsel %vm589, 1, 0
      %v862 = vsel %vm590, 1, 0
      %v863 = vsel %vm591, 1, 0
      %v864 = vsel %vm592, 1, 0
      %v865 = vsel %vm593, 1, 0
      %v866 = vsel %vm594, 1, 0
      %v867 = vsel %vm595, 1, 0
      %v868 = vsel %vm596, 1, 0
      %v869 = vsel %vm597, 1, 0
      %v870 = vsel %vm598, 1, 0
      %v871 = vsel %vm599, 1, 0
      %v872 = vsel %vm600, 1, 0
      %v873 = vsel %vm601, 1, 0
      %v874 = vsel %vm602, 1, 0
      %v875 = vsel %vm603, 1, 0
      %v876 = vsel %vm604, 1, 0
      %v877 = vsel %vm605, 1, 0
      %v878 = vsel %vm606, 1, 0
      %v879 = vsel %vm607, 1, 0
      %v880 = vsel %vm608, 1, 0
      %v881 = vsel %vm609, 1, 0
      %v882 = vsel %vm610, 1, 0
      %v883 = vsel %vm611, 1, 0
      %v884 = vsel %vm612, 1, 0
      %v885 = vsel %vm613, 1, 0
      %v886 = vsel %vm614, 1, 0
      %v887 = vsel %vm615, 1, 0
      %v888 = vsel %vm616, 1, 0
      %v889 = vsel %vm617, 1, 0
      %v890 = vsel %vm618, 1, 0
      %v891 = vsel %vm619, 1, 0
      %v892 = vsel %vm620, 1, 0
      %v893 = vsel %vm621, 1, 0
      %v894 = vsel %vm622, 1, 0
      %v895 = vsel %vm623, 1, 0
      %v896 = vsel %vm624, 1, 0
      %v897 = vsel %vm625, 1, 0
      %v898 = vsel %vm626, 1, 0
      %v899 = vsel %vm627, 1, 0
      %v900 = vsel %vm628, 1, 0
      %v901 = vsel %vm629, 1, 0
      %v902 = vsel %vm630, 1, 0
      %v903 = vsel %vm631, 1, 0
      %v904 = vsel %vm632, 1, 0
      %v905 = vsel %vm633, 1, 0
      %v906 = vsel %vm634, 1, 0
      %v907 = vsel %vm635, 1, 0
      %v908 = vsel %vm636, 1, 0
      %v909 = vsel %vm637, 1, 0
      %v910 = vsel %vm638, 1, 0
      %v911 = vsel %vm639, 1, 0
      %v912 = vsel %vm640, 1, 0
      %v913 = vsel %vm641, 1, 0
      %v914 = vsel %vm642, 1, 0
      %v915 = vsel %vm643, 1, 0
      %v916 = vsel %vm644, 1, 0
      %v917 = vsel %vm645, 1, 0
      %v918 = vsel %vm646, 1, 0
      %v919 = vsel %vm647, 1, 0
      %v920 = vsel %vm648, 1, 0
      %v921 = vsel %vm649, 1, 0
      %v922 = vsel %vm650, 1, 0
      %v923 = vsel %vm651, 1, 0
      %v924 = vsel %vm652, 1, 0
      %v925 = vsel %vm653, 1, 0
      %v926 = vsel %vm654, 1, 0
      %v927 = vsel %vm655, 1, 0
      %v928 = vsel %vm656, 1, 0
      %v929 = vsel %vm657, 1, 0
      %v930 = vsel %vm658, 1, 0
      %v931 = vsel %vm659, 1, 0
      %v932 = vsel %vm660, 1, 0
      %v933 = vsel %vm661, 1, 0
      %v934 = vsel %vm662, 1, 0
      %v935 = vsel %vm663, 1, 0
      %v936 = vsel %vm664, 1, 0
      %v937 = vsel %vm665, 1, 0
      %v938 = vsel %vm666, 1, 0
      %v939 = vsel %vm667, 1, 0
      %v940 = vsel %vm668, 1, 0
      %v941 = vsel %vm669, 1, 0
      %v942 = vsel %vm670, 1, 0
      %v943 = vsel %vm671, 1, 0
      %v944 = vsel %vm672, 1, 0
      %v945 = vsel %vm673, 1, 0
      %v946 = vsel %vm674, 1, 0
      %v947 = vsel %vm675, 1, 0
      %v948 = vsel %vm676, 1, 0
      %v949 = vsel %vm677, 1, 0
      %v950 = vsel %vm678, 1, 0
      %v951 = vsel %vm679, 1, 0
      %v952 = vsel %vm680, 1, 0
      %v953 = vsel %vm681, 1, 0
      %v954 = vsel %vm682, 1, 0
      %v955 = vsel %vm683, 1, 0
      %v956 = vsel %vm684, 1, 0
      %v957 = vsel %vm685, 1, 0
      %v958 = vsel %vm686, 1, 0
      %v959 = vsel %vm687, 1, 0
      %v960 = vsel %vm688, 1, 0
      %v961 = vsel %vm689, 1, 0
      %v962 = vsel %vm690, 1, 0
      %v963 = vsel %vm691, 1, 0
      %v964 = vsel %vm692, 1, 0
      %v965 = vsel %vm693, 1, 0
      %v966 = vsel %vm694, 1, 0
      %v967 = vsel %vm695, 1, 0
      %v968 = vsel %vm696, 1, 0
      %v969 = vsel %vm697, 1, 0
      %v970 = vsel %vm698, 1, 0
      %v971 = vsel %vm699, 1, 0
      %v972 = vsel %vm700, 1, 0
      %v973 = vsel %vm701, 1, 0
      %v974 = vsel %vm702, 1, 0
      %v975 = vsel %vm703, 1, 0
      %v976 = vsel %vm704, 1, 0
      %v977 = vsel %vm705, 1, 0
      %v978 = vsel %vm706, 1, 0
      %v979 = vsel %vm707, 1, 0
      %v980 = vsel %vm708, 1, 0
      %v981 = vsel %vm709, 1, 0
      %v982 = vsel %vm710, 1, 0
      %v983 = vsel %vm711, 1, 0
      %v984 = vsel %vm712, 1, 0
      %v985 = vsel %vm713, 1, 0
      %v986 = vsel %vm714, 1, 0
      %v987 = vsel %vm715, 1, 0
      %v988 = vcvt.s32.f32 %v716
      %v989 = vcvt.s32.f32 %v717
      %v990 = vcvt.s32.f32 %v718
      %v991 = vcvt.s32.f32 %v719
      %v992 = vcvt.s32.f32 %v720
      %v993 = vcvt.s32.f32 %v721
      %v994 = vcvt.s32.f32 %v722
      %v995 = vcvt.s32.f32 %v723
      %v996 = vcvt.s32.f32 %v724
      %v997 = vcvt.s32.f32 %v725
      %v998 = vcvt.s32.f32 %v726
      %v999 = vcvt.s32.f32 %v727
      %v1000 = vcvt.s32.f32 %v728
      %v1001 = vcvt.s32.f32 %v729
      %v1002 = vcvt.s32.f32 %v730
      %v1003 = vcvt.s32.f32 %v731
      %v1004 = vcvt.s32.f32 %v732
      %v1005 = vcvt.s32.f32 %v733
      %v1006 = vcvt.s32.f32 %v734
      %v1007 = vcvt.s32.f32 %v735
      %v1008 = vcvt.s32.f32 %v736
      %v1009 = vcvt.s32.f32 %v737
      %v1010 = vcvt.s32.f32 %v738
      %v1011 = vcvt.s32.f32 %v739
      %v1012 = vcvt.s32.f32 %v740
      %v1013 = vcvt.s32.f32 %v741
      %v1014 = vcvt.s32.f32 %v742
      %v1015 = vcvt.s32.f32 %v743
      %v1016 = vcvt.s32.f32 %v744
      %v1017 = vcvt.s32.f32 %v745
      %v1018 = vcvt.s32.f32 %v746
      %v1019 = vcvt.s32.f32 %v747
      %v1020 = vcvt.s32.f32 %v748
      %v1021 = vcvt.s32.f32 %v749
      %v1022 = vcvt.s32.f32 %v750
      %v1023 = vcvt.s32.f32 %v751
      %v1024 = vcvt.s32.f32 %v752
      %v1025 = vcvt.s32.f32 %v753
      %v1026 = vcvt.s32.f32 %v754
      %v1027 = vcvt.s32.f32 %v755
      %v1028 = vcvt.s32.f32 %v756
      %v1029 = vcvt.s32.f32 %v757
      %v1030 = vcvt.s32.f32 %v758
      %v1031 = vcvt.s32.f32 %v759
      %v1032 = vcvt.s32.f32 %v760
      %v1033 = vcvt.s32.f32 %v761
      %v1034 = vcvt.s32.f32 %v762
      %v1035 = vcvt.s32.f32 %v763
      %v1036 = vcvt.s32.f32 %v764
      %v1037 = vcvt.s32.f32 %v765
      %v1038 = vcvt.s32.f32 %v766
      %v1039 = vcvt.s32.f32 %v767
      %v1040 = vcvt.s32.f32 %v768
      %v1041 = vcvt.s32.f32 %v769
      %v1042 = vcvt.s32.f32 %v770
      %v1043 = vcvt.s32.f32 %v771
      %v1044 = vcvt.s32.f32 %v772
      %v1045 = vcvt.s32.f32 %v773
      %v1046 = vcvt.s32.f32 %v774
      %v1047 = vcvt.s32.f32 %v775
      %v1048 = vcvt.s32.f32 %v776
      %v1049 = vcvt.s32.f32 %v777
      %v1050 = vcvt.s32.f32 %v778
      %v1051 = vcvt.s32.f32 %v779
      %v1052 = vcvt.s32.f32 %v780
      %v1053 = vcvt.s32.f32 %v781
      %v1054 = vcvt.s32.f32 %v782
      %v1055 = vcvt.s32.f32 %v783
      %v1056 = vcvt.s32.f32 %v784
      %v1057 = vcvt.s32.f32 %v785
      %v1058 = vcvt.s32.f32 %v786
      %v1059 = vcvt.s32.f32 %v787
      %v1060 = vcvt.s32.f32 %v788
      %v1061 = vcvt.s32.f32 %v789
      %v1062 = vcvt.s32.f32 %v790
      %v1063 = vcvt.s32.f32 %v791
      %v1064 = vcvt.s32.f32 %v792
      %v1065 = vcvt.s32.f32 %v793
      %v1066 = vcvt.s32.f32 %v794
      %v1067 = vcvt.s32.f32 %v795
      %v1068 = vcvt.s32.f32 %v796
      %v1069 = vcvt.s32.f32 %v797
      %v1070 = vcvt.s32.f32 %v798
      %v1071 = vcvt.s32.f32 %v799
      %v1072 = vcvt.s32.f32 %v800
      %v1073 = vcvt.s32.f32 %v801
      %v1074 = vcvt.s32.f32 %v802
      %v1075 = vcvt.s32.f32 %v803
      %v1076 = vcvt.s32.f32 %v804
      %v1077 = vcvt.s32.f32 %v805
      %v1078 = vcvt.s32.f32 %v806
      %v1079 = vcvt.s32.f32 %v807
      %v1080 = vcvt.s32.f32 %v808
      %v1081 = vcvt.s32.f32 %v809
      %v1082 = vcvt.s32.f32 %v810
      %v1083 = vcvt.s32.f32 %v811
      %v1084 = vcvt.s32.f32 %v812
      %v1085 = vcvt.s32.f32 %v813
      %v1086 = vcvt.s32.f32 %v814
      %v1087 = vcvt.s32.f32 %v815
      %v1088 = vcvt.s32.f32 %v816
      %v1089 = vcvt.s32.f32 %v817
      %v1090 = vcvt.s32.f32 %v818
      %v1091 = vcvt.s32.f32 %v819
      %v1092 = vcvt.s32.f32 %v820
      %v1093 = vcvt.s32.f32 %v821
      %v1094 = vcvt.s32.f32 %v822
      %v1095 = vcvt.s32.f32 %v823
      %v1096 = vcvt.s32.f32 %v824
      %v1097 = vcvt.s32.f32 %v825
      %v1098 = vcvt.s32.f32 %v826
      %v1099 = vcvt.s32.f32 %v827
      %v1100 = vcvt.s32.f32 %v828
      %v1101 = vcvt.s32.f32 %v829
      %v1102 = vcvt.s32.f32 %v830
      %v1103 = vcvt.s32.f32 %v831
      %v1104 = vcvt.s32.f32 %v832
      %v1105 = vcvt.s32.f32 %v833
      %v1106 = vcvt.s32.f32 %v834
      %v1107 = vcvt.s32.f32 %v835
      %v1108 = vcvt.s32.f32 %v836
      %v1109 = vcvt.s32.f32 %v837
      %v1110 = vcvt.s32.f32 %v838
      %v1111 = vcvt.s32.f32 %v839
      %v1112 = vcvt.s32.f32 %v840
      %v1113 = vcvt.s32.f32 %v841
      %v1114 = vcvt.s32.f32 %v842
      %v1115 = vcvt.s32.f32 %v843
      %v1116 = vcvt.s32.f32 %v844
      %v1117 = vcvt.s32.f32 %v845
      %v1118 = vcvt.s32.f32 %v846
      %v1119 = vcvt.s32.f32 %v847
      %v1120 = vcvt.s32.f32 %v848
      %v1121 = vcvt.s32.f32 %v849
      %v1122 = vcvt.s32.f32 %v850
      %v1123 = vcvt.s32.f32 %v851
      %v1124 = vcvt.s32.f32 %v852
      %v1125 = vcvt.s32.f32 %v853
      %v1126 = vcvt.s32.f32 %v854
      %v1127 = vcvt.s32.f32 %v855
      %v1128 = vcvt.s32.f32 %v856
      %v1129 = vcvt.s32.f32 %v857
      %v1130 = vcvt.s32.f32 %v858
      %v1131 = vcvt.s32.f32 %v859
      %v1132 = vcvt.s32.f32 %v860
      %v1133 = vcvt.s32.f32 %v861
      %v1134 = vcvt.s32.f32 %v862
      %v1135 = vcvt.s32.f32 %v863
      %v1136 = vcvt.s32.f32 %v864
      %v1137 = vcvt.s32.f32 %v865
      %v1138 = vcvt.s32.f32 %v866
      %v1139 = vcvt.s32.f32 %v867
      %v1140 = vcvt.s32.f32 %v868
      %v1141 = vcvt.s32.f32 %v869
      %v1142 = vcvt.s32.f32 %v870
      %v1143 = vcvt.s32.f32 %v871
      %v1144 = vcvt.s32.f32 %v872
      %v1145 = vcvt.s32.f32 %v873
      %v1146 = vcvt.s32.f32 %v874
      %v1147 = vcvt.s32.f32 %v875
      %v1148 = vcvt.s32.f32 %v876
      %v1149 = vcvt.s32.f32 %v877
      %v1150 = vcvt.s32.f32 %v878
      %v1151 = vcvt.s32.f32 %v879
      %v1152 = vcvt.s32.f32 %v880
      %v1153 = vcvt.s32.f32 %v881
      %v1154 = vcvt.s32.f32 %v882
      %v1155 = vcvt.s32.f32 %v883
      %v1156 = vcvt.s32.f32 %v884
      %v1157 = vcvt.s32.f32 %v885
      %v1158 = vcvt.s32.f32 %v886
      %v1159 = vcvt.s32.f32 %v887
      %v1160 = vcvt.s32.f32 %v888
      %v1161 = vcvt.s32.f32 %v889
      %v1162 = vcvt.s32.f32 %v890
      %v1163 = vcvt.s32.f32 %v891
      %v1164 = vcvt.s32.f32 %v892
      %v1165 = vcvt.s32.f32 %v893
      %v1166 = vcvt.s32.f32 %v894
      %v1167 = vcvt.s32.f32 %v895
      %v1168 = vcvt.s32.f32 %v896
      %v1169 = vcvt.s32.f32 %v897
      %v1170 = vcvt.s32.f32 %v898
      %v1171 = vcvt.s32.f32 %v899
      %v1172 = vcvt.s32.f32 %v900
      %v1173 = vcvt.s32.f32 %v901
      %v1174 = vcvt.s32.f32 %v902
      %v1175 = vcvt.s32.f32 %v903
      %v1176 = vcvt.s32.f32 %v904
      %v1177 = vcvt.s32.f32 %v905
      %v1178 = vcvt.s32.f32 %v906
      %v1179 = vcvt.s32.f32 %v907
      %v1180 = vcvt.s32.f32 %v908
      %v1181 = vcvt.s32.f32 %v909
      %v1182 = vcvt.s32.f32 %v910
      %v1183 = vcvt.s32.f32 %v911
      %v1184 = vcvt.s32.f32 %v912
      %v1185 = vcvt.s32.f32 %v913
      %v1186 = vcvt.s32.f32 %v914
      %v1187 = vcvt.s32.f32 %v915
      %v1188 = vcvt.s32.f32 %v916
      %v1189 = vcvt.s32.f32 %v917
      %v1190 = vcvt.s32.f32 %v918
      %v1191 = vcvt.s32.f32 %v919
      %v1192 = vcvt.s32.f32 %v920
      %v1193 = vcvt.s32.f32 %v921
      %v1194 = vcvt.s32.f32 %v922
      %v1195 = vcvt.s32.f32 %v923
      %v1196 = vcvt.s32.f32 %v924
      %v1197 = vcvt.s32.f32 %v925
      %v1198 = vcvt.s32.f32 %v926
      %v1199 = vcvt.s32.f32 %v927
      %v1200 = vcvt.s32.f32 %v928
      %v1201 = vcvt.s32.f32 %v929
      %v1202 = vcvt.s32.f32 %v930
      %v1203 = vcvt.s32.f32 %v931
      %v1204 = vcvt.s32.f32 %v932
      %v1205 = vcvt.s32.f32 %v933
      %v1206 = vcvt.s32.f32 %v934
      %v1207 = vcvt.s32.f32 %v935
      %v1208 = vcvt.s32.f32 %v936
      %v1209 = vcvt.s32.f32 %v937
      %v1210 = vcvt.s32.f32 %v938
      %v1211 = vcvt.s32.f32 %v939
      %v1212 = vcvt.s32.f32 %v940
      %v1213 = vcvt.s32.f32 %v941
      %v1214 = vcvt.s32.f32 %v942
      %v1215 = vcvt.s32.f32 %v943
      %v1216 = vcvt.s32.f32 %v944
      %v1217 = vcvt.s32.f32 %v945
      %v1218 = vcvt.s32.f32 %v946
      %v1219 = vcvt.s32.f32 %v947
      %v1220 = vcvt.s32.f32 %v948
      %v1221 = vcvt.s32.f32 %v949
      %v1222 = vcvt.s32.f32 %v950
      %v1223 = vcvt.s32.f32 %v951
      %v1224 = vcvt.s32.f32 %v952
      %v1225 = vcvt.s32.f32 %v953
      %v1226 = vcvt.s32.f32 %v954
      %v1227 = vcvt.s32.f32 %v955
      %v1228 = vcvt.s32.f32 %v956
      %v1229 = vcvt.s32.f32 %v957
      %v1230 = vcvt.s32.f32 %v958
      %v1231 = vcvt.s32.f32 %v959
      %v1232 = vcvt.s32.f32 %v960
      %v1233 = vcvt.s32.f32 %v961
      %v1234 = vcvt.s32.f32 %v962
      %v1235 = vcvt.s32.f32 %v963
      %v1236 = vcvt.s32.f32 %v964
      %v1237 = vcvt.s32.f32 %v965
      %v1238 = vcvt.s32.f32 %v966
      %v1239 = vcvt.s32.f32 %v967
      %v1240 = vcvt.s32.f32 %v968
      %v1241 = vcvt.s32.f32 %v969
      %v1242 = vcvt.s32.f32 %v970
      %v1243 = vcvt.s32.f32 %v971
      %v1244 = vcvt.s32.f32 %v972
      %v1245 = vcvt.s32.f32 %v973
      %v1246 = vcvt.s32.f32 %v974
      %v1247 = vcvt.s32.f32 %v975
      %v1248 = vcvt.s32.f32 %v976
      %v1249 = vcvt.s32.f32 %v977
      %v1250 = vcvt.s32.f32 %v978
      %v1251 = vcvt.s32.f32 %v979
      %v1252 = vcvt.s32.f32 %v980
      %v1253 = vcvt.s32.f32 %v981
      %v1254 = vcvt.s32.f32 %v982
      %v1255 = vcvt.s32.f32 %v983
      %v1256 = vcvt.s32.f32 %v984
      %v1257 = vcvt.s32.f32 %v985
      %v1258 = vcvt.s32.f32 %v986
      %v1259 = vcvt.s32.f32 %v987
      %v1260 = vld [vmem:[%s2] sm:$0xff]
      %v1261 = vld [vmem:[%s2 + $0x8] sm:$0xff]
      %v1262 = vld [vmem:[%s2 + $0x10] sm:$0xff]
      %v1263 = vld [vmem:[%s2 + $0x18] sm:$0xff]
      %v1264 = vld [vmem:[%s2 + $0x20] sm:$0xff]
      %v1265 = vld [vmem:[%s2 + $0x28] sm:$0xff]
      %v1266 = vld [vmem:[%s2 + $0x30] sm:$0x3]
      %vm1267 = vcmask 408576
      %v1269 = vsel %vm1267, %v364, 0
      %v1272 = vsel %vm1267, %v365, 0
      %v1275 = vsel %vm1267, %v366, 0
      %v1278 = vsel %vm1267, %v367, 0
      %v1281 = vsel %vm1267, %v368, 0
      %v1284 = vsel %vm1267, %v369, 0
      %v1287 = vsel %vm1267, %v370, 0
      %v1290 = vsel %vm1267, %v371, 0
      %v1293 = vsel %vm1267, %v372, 0
      %v1296 = vsel %vm1267, %v373, 0
      %v1299 = vsel %vm1267, %v374, 0
      %v1302 = vsel %vm1267, %v375, 0
      %v1305 = vsel %vm1267, %v376, 0
      %v1308 = vsel %vm1267, %v377, 0
      %v1311 = vsel %vm1267, %v378, 0
      %v1314 = vsel %vm1267, %v379, 0
      %vm1316 = vcmask 1041408
      %v1318 = vsel %vm1316, %v1266, 0
      %1320 = vmatprep.subr.mxu0 0.0
      %1321 = vmatpush1.msra.mxu0 %v1260
      %1322 = vmatprep.subr.mxu0 0.0
      %1323 = vmatpush1.msra.mxu0 %v1261
      %1324 = vmatprep.subr.mxu0 0.0
      %1325 = vmatpush1.msra.mxu0 %v1262
      %1326 = vmatprep.subr.mxu0 0.0
      %1327 = vmatpush1.msra.mxu0 %v1263
      %1328 = vmatprep.subr.mxu0 0.0
      %1329 = vmatpush1.msra.mxu0 %v1264
      %1330 = vmatprep.subr.mxu0 0.0
      %1331 = vmatpush1.msra.mxu0 %v1265
      %1332 = vmatprep.subr.mxu0 0.0
      %1333 = vmatpush1.msra.mxu0 %v1318
      %1334 = vmatprep.subr.mxu0 0.0
      %1335 = vmatpush1.msra.mxu0 0.0
      %1336 = vmatprep.subr.mxu0 0.0
      %1337 = vmatpush1.msra.mxu0 0.0
      %1338 = vmatprep.subr.mxu0 0.0
      %1339 = vmatpush1.msra.mxu0 0.0
      %1340 = vmatprep.subr.mxu0 0.0
      %1341 = vmatpush1.msra.mxu0 0.0
      %1342 = vmatprep.subr.mxu0 0.0
      %1343 = vmatpush1.msra.mxu0 0.0
      %1344 = vmatprep.subr.mxu0 0.0
      %1345 = vmatpush1.msra.mxu0 0.0
      %1346 = vmatprep.subr.mxu0 0.0
      %1347 = vmatpush1.msra.mxu0 0.0
      %1348 = vmatprep.subr.mxu0 0.0
      %1349 = vmatpush1.msra.mxu0 0.0
      %1350 = vmatprep.subr.mxu0 0.0
      %1351 = vmatpush1.msra.mxu0 0.0
      %1352 = vmatprep.subr.mxu0 0.0
      %1353 = vmatpush1.msra.mxu0 0.0
      %1354 = vmatprep.subr.mxu0 0.0
      %1355 = vmatpush1.msra.mxu0 0.0
      %1356 = vmatprep.subr.mxu0 0.0
      %1357 = vmatpush1.msra.mxu0 0.0
      %1358 = vmatprep.subr.mxu0 0.0
      %1359 = vmatpush1.msra.mxu0 0.0
      %1360 = vmatprep.subr.mxu0 0.0
      %1361 = vmatpush1.msra.mxu0 0.0
      %1362 = vmatprep.subr.mxu0 0.0
      %1363 = vmatpush1.msra.mxu0 0.0
      %1364 = vmatprep.subr.mxu0 0.0
      %1365 = vmatpush1.msra.mxu0 0.0
      %1366 = vmatprep.subr.mxu0 0.0
      %1367 = vmatpush1.msra.mxu0 0.0
      %1368 = vmatprep.subr.mxu0 0.0
      %1369 = vmatpush1.msra.mxu0 0.0
      %1370 = vmatprep.subr.mxu0 0.0
      %1371 = vmatpush1.msra.mxu0 0.0
      %1372 = vmatprep.subr.mxu0 0.0
      %1373 = vmatpush1.msra.mxu0 0.0
      %1374 = vmatprep.subr.mxu0 0.0
      %1375 = vmatpush1.msra.mxu0 0.0
      %1376 = vmatprep.subr.mxu0 0.0
      %1377 = vmatpush1.msra.mxu0 0.0
      %1378 = vmatprep.subr.mxu0 0.0
      %1379 = vmatpush1.msra.mxu0 0.0
      %1380 = vmatprep.subr.mxu0 0.0
      %1381 = vmatpush1.msra.mxu0 0.0
      %1382 = vmatprep.subr.mxu0 0.0
      %1383 = vmatpush1.msra.mxu0 0.0
      %1384 = vmatprep.mubr.f32.mxu0 0.0
      %1385 = vmatmul.mubr.f32.gmra.mrb[0].mxu0 %v1269
      %v1386 = vpop.f32.mrb[0].mxu0
      %v1387 = vadd.f32 0.0, %v1386
      %v1388 = vpop.f32.mrb[0].mxu0
      %1389 = vmatprep.mubr.f32.mxu0 0.0
      %1390 = vmatmul.mubr.f32.gmra.mrb[0].mxu0 %v1272
      %v1391 = vpop.f32.mrb[0].mxu0
      %v1392 = vadd.f32 0.0, %v1391
      %v1393 = vpop.f32.mrb[0].mxu0
      %1394 = vmatprep.mubr.f32.mxu0 0.0
      %1395 = vmatmul.mubr.f32.gmra.mrb[0].mxu0 %v1275
      %v1396 = vpop.f32.mrb[0].mxu0
      %v1397 = vadd.f32 0.0, %v1396
      %v1398 = vpop.f32.mrb[0].mxu0
      %1399 = vmatprep.mubr.f32.mxu0 0.0
      %1400 = vmatmul.mubr.f32.gmra.mrb[0].mxu0 %v1278
      %v1401 = vpop.f32.mrb[0].mxu0
      %v1402 = vadd.f32 0.0, %v1401
      %v1403 = vpop.f32.mrb[0].mxu0
      %1404 = vmatprep.mubr.f32.mxu0 0.0
      %1405 = vmatmul.mubr.f32.gmra.mrb[0].mxu0 %v1281
      %v1406 = vpop.f32.mrb[0].mxu0
      %v1407 = vadd.f32 0.0, %v1406
      %v1408 = vpop.f32.mrb[0].mxu0
      %1409 = vmatprep.mubr.f32.mxu0 0.0
      %1410 = vmatmul.mubr.f32.gmra.mrb[0].mxu0 %v1284
      %v1411 = vpop.f32.mrb[0].mxu0
      %v1412 = vadd.f32 0.0, %v1411
      %v1413 = vpop.f32.mrb[0].mxu0
      %1414 = vmatprep.mubr.f32.mxu0 0.0
      %1415 = vmatmul.mubr.f32.gmra.mrb[0].mxu0 %v1287
      %v1416 = vpop.f32.mrb[0].mxu0
      %v1417 = vadd.f32 0.0, %v1416
      %v1418 = vpop.f32.mrb[0].mxu0
      %1419 = vmatprep.mubr.f32.mxu0 0.0
      %1420 = vmatmul.mubr.f32.gmra.mrb[0].mxu0 %v1290
      %v1421 = vpop.f32.mrb[0].mxu0
      %v1422 = vadd.f32 0.0, %v1421
      %v1423 = vpop.f32.mrb[0].mxu0
      %1424 = vmatprep.mubr.f32.mxu0 0.0
      %1425 = vmatmul.mubr.f32.gmra.mrb[0].mxu0 %v1293
      %v1426 = vpop.f32.mrb[0].mxu0
      %v1427 = vadd.f32 0.0, %v1426
      %v1428 = vpop.f32.mrb[0].mxu0
      %1429 = vmatprep.mubr.f32.mxu0 0.0
      %1430 = vmatmul.mubr.f32.gmra.mrb[0].mxu0 %v1296
      %v1431 = vpop.f32.mrb[0].mxu0
      %v1432 = vadd.f32 0.0, %v1431
      %v1433 = vpop.f32.mrb[0].mxu0
      %1434 = vmatprep.mubr.f32.mxu0 0.0
      %1435 = vmatmul.mubr.f32.gmra.mrb[0].mxu0 %v1299
      %v1436 = vpop.f32.mrb[0].mxu0
      %v1437 = vadd.f32 0.0, %v1436
      %v1438 = vpop.f32.mrb[0].mxu0
      %1439 = vmatprep.mubr.f32.mxu0 0.0
      %1440 = vmatmul.mubr.f32.gmra.mrb[0].mxu0 %v1302
      %v1441 = vpop.f32.mrb[0].mxu0
      %v1442 = vadd.f32 0.0, %v1441
      %v1443 = vpop.f32.mrb[0].mxu0
      %1444 = vmatprep.mubr.f32.mxu0 0.0
      %1445 = vmatmul.mubr.f32.gmra.mrb[0].mxu0 %v1305
      %v1446 = vpop.f32.mrb[0].mxu0
      %v1447 = vadd.f32 0.0, %v1446
      %v1448 = vpop.f32.mrb[0].mxu0
      %1449 = vmatprep.mubr.f32.mxu0 0.0
      %1450 = vmatmul.mubr.f32.gmra.mrb[0].mxu0 %v1308
      %v1451 = vpop.f32.mrb[0].mxu0
      %v1452 = vadd.f32 0.0, %v1451
      %v1453 = vpop.f32.mrb[0].mxu0
      %1454 = vmatprep.mubr.f32.mxu0 0.0
      %1455 = vmatmul.mubr.f32.gmra.mrb[0].mxu0 %v1311
      %v1456 = vpop.f32.mrb[0].mxu0
      %v1457 = vadd.f32 0.0, %v1456
      %v1458 = vpop.f32.mrb[0].mxu0
      %1459 = vmatprep.mubr.f32.mxu0 0.0
      %1460 = vmatmul.mubr.f32.gmra.mrb[0].mxu0 %v1314
      %v1461 = vpop.f32.mrb[0].mxu0
      %v1462 = vadd.f32 0.0, %v1461
      %v1463 = vpop.f32.mrb[0].mxu0
      %1464 = vdwg.mxu0
      %v1465 = vld [vmem:[%s3] sm:$0xff]
      %v1466 = vld [vmem:[%s3 + $0x8] sm:$0xff]
      %v1467 = vld [vmem:[%s3 + $0x10] sm:$0xff]
      %v1468 = vld [vmem:[%s3 + $0x18] sm:$0xff]
      %v1469 = vld [vmem:[%s3 + $0x20] sm:$0xff]
      %v1470 = vld [vmem:[%s3 + $0x28] sm:$0xff]
      %v1471 = vld [vmem:[%s3 + $0x30] sm:$0xff]
      %v1472 = vld [vmem:[%s3 + $0x38] sm:$0xff]
      %v1473 = vld [vmem:[%s3 + $0x40] sm:$0xff]
      %v1474 = vld [vmem:[%s3 + $0x48] sm:$0xff]
      %v1475 = vld [vmem:[%s3 + $0x50] sm:$0xff]
      %v1476 = vld [vmem:[%s3 + $0x58] sm:$0xff]
      %v1477 = vld [vmem:[%s3 + $0x60] sm:$0xff]
      %v1478 = vld [vmem:[%s3 + $0x68] sm:$0xff]
      %v1479 = vld [vmem:[%s3 + $0x70] sm:$0xff]
      %v1480 = vld [vmem:[%s3 + $0x78] sm:$0xff]
      %v1481 = vld [vmem:[%s3 + $0x80] sm:$0xff]
      %v1482 = vld [vmem:[%s3 + $0x88] sm:$0xff]
      %v1483 = vld [vmem:[%s3 + $0x90] sm:$0xff]
      %v1484 = vld [vmem:[%s3 + $0x98] sm:$0xff]
      %v1485 = vld [vmem:[%s3 + $0xa0] sm:$0xff]
      %v1486 = vld [vmem:[%s3 + $0xa8] sm:$0xff]
      %v1487 = vld [vmem:[%s3 + $0xb0] sm:$0xff]
      %v1488 = vld [vmem:[%s3 + $0xb8] sm:$0xff]
      %v1489 = vld [vmem:[%s3 + $0xc0] sm:$0xff]
      %v1490 = vld [vmem:[%s3 + $0xc8] sm:$0xff]
      %v1491 = vld [vmem:[%s3 + $0xd0] sm:$0xff]
      %v1492 = vld [vmem:[%s3 + $0xd8] sm:$0xff]
      %v1493 = vld [vmem:[%s3 + $0xe0] sm:$0xff]
      %v1494 = vld [vmem:[%s3 + $0xe8] sm:$0xff]
      %v1495 = vld [vmem:[%s3 + $0xf0] sm:$0xff]
      %v1496 = vld [vmem:[%s3 + $0xf8] sm:$0xff]
      %v1497 = vld [vmem:[%s3 + $0x100] sm:$0xff]
      %v1498 = vld [vmem:[%s3 + $0x108] sm:$0xff]
      %v1499 = vld [vmem:[%s3 + $0x110] sm:$0xff]
      %v1500 = vld [vmem:[%s3 + $0x118] sm:$0xff]
      %v1501 = vld [vmem:[%s3 + $0x120] sm:$0xff]
      %v1502 = vld [vmem:[%s3 + $0x128] sm:$0xff]
      %v1503 = vld [vmem:[%s3 + $0x130] sm:$0xff]
      %v1504 = vld [vmem:[%s3 + $0x138] sm:$0xff]
      %v1505 = vld [vmem:[%s3 + $0x140] sm:$0xff]
      %v1506 = vld [vmem:[%s3 + $0x148] sm:$0xff]
      %v1507 = vld [vmem:[%s3 + $0x150] sm:$0xff]
      %v1508 = vld [vmem:[%s3 + $0x158] sm:$0xff]
      %v1509 = vld [vmem:[%s3 + $0x160] sm:$0xff]
      %v1510 = vld [vmem:[%s3 + $0x168] sm:$0xff]
      %v1511 = vld [vmem:[%s3 + $0x170] sm:$0xff]
      %v1512 = vld [vmem:[%s3 + $0x178] sm:$0xff]
      %v1513 = vld [vmem:[%s3 + $0x180] sm:$0xff]
      %v1514 = vld [vmem:[%s3 + $0x188] sm:$0xff]
      %v1515 = vld [vmem:[%s3 + $0x190] sm:$0xff]
      %v1516 = vld [vmem:[%s3 + $0x198] sm:$0xff]
      %v1517 = vld [vmem:[%s3 + $0x1a0] sm:$0xff]
      %v1518 = vld [vmem:[%s3 + $0x1a8] sm:$0xff]
      %v1519 = vld [vmem:[%s3 + $0x1b0] sm:$0xff]
      %v1520 = vld [vmem:[%s3 + $0x1b8] sm:$0xff]
      %v1521 = vld [vmem:[%s3 + $0x1c0] sm:$0xff]
      %v1522 = vld [vmem:[%s3 + $0x1c8] sm:$0xff]
      %v1523 = vld [vmem:[%s3 + $0x1d0] sm:$0xff]
      %v1524 = vld [vmem:[%s3 + $0x1d8] sm:$0xff]
      %v1525 = vld [vmem:[%s3 + $0x1e0] sm:$0xff]
      %v1526 = vld [vmem:[%s3 + $0x1e8] sm:$0xff]
      %v1527 = vld [vmem:[%s3 + $0x1f0] sm:$0xff]
      %v1528 = vld [vmem:[%s3 + $0x1f8] sm:$0xff]
      %v1529 = vld [vmem:[%s3 + $0x200] sm:$0xff]
      %v1530 = vld [vmem:[%s3 + $0x208] sm:$0xff]
      %v1531 = vld [vmem:[%s3 + $0x210] sm:$0xff]
      %v1532 = vld [vmem:[%s3 + $0x218] sm:$0xff]
      %v1533 = vld [vmem:[%s3 + $0x220] sm:$0xff]
      %v1534 = vld [vmem:[%s3 + $0x228] sm:$0xff]
      %v1535 = vld [vmem:[%s3 + $0x230] sm:$0xff]
      %v1536 = vld [vmem:[%s3 + $0x238] sm:$0xff]
      %v1537 = vld [vmem:[%s3 + $0x240] sm:$0xff]
      %v1538 = vld [vmem:[%s3 + $0x248] sm:$0xff]
      %v1539 = vld [vmem:[%s3 + $0x250] sm:$0xff]
      %v1540 = vld [vmem:[%s3 + $0x258] sm:$0xff]
      %v1541 = vld [vmem:[%s3 + $0x260] sm:$0xff]
      %v1542 = vld [vmem:[%s3 + $0x268] sm:$0xff]
      %v1543 = vld [vmem:[%s3 + $0x270] sm:$0xff]
      %v1544 = vld [vmem:[%s3 + $0x278] sm:$0xff]
      %v1545 = vld [vmem:[%s3 + $0x280] sm:$0xff]
      %v1546 = vld [vmem:[%s3 + $0x288] sm:$0xff]
      %v1547 = vld [vmem:[%s3 + $0x290] sm:$0xff]
      %v1548 = vld [vmem:[%s3 + $0x298] sm:$0xff]
      %v1549 = vld [vmem:[%s3 + $0x2a0] sm:$0xff]
      %v1550 = vld [vmem:[%s3 + $0x2a8] sm:$0xff]
      %v1551 = vld [vmem:[%s3 + $0x2b0] sm:$0xff]
      %v1552 = vld [vmem:[%s3 + $0x2b8] sm:$0xff]
      %v1553 = vld [vmem:[%s3 + $0x2c0] sm:$0xff]
      %v1554 = vld [vmem:[%s3 + $0x2c8] sm:$0xff]
      %v1555 = vld [vmem:[%s3 + $0x2d0] sm:$0xff]
      %v1556 = vld [vmem:[%s3 + $0x2d8] sm:$0xff]
      %v1557 = vld [vmem:[%s3 + $0x2e0] sm:$0xff]
      %v1558 = vld [vmem:[%s3 + $0x2e8] sm:$0xff]
      %v1559 = vld [vmem:[%s3 + $0x2f0] sm:$0xff]
      %v1560 = vld [vmem:[%s3 + $0x2f8] sm:$0xff]
      %v1561 = vld [vmem:[%s3 + $0x300] sm:$0xff]
      %v1562 = vld [vmem:[%s3 + $0x308] sm:$0xff]
      %v1563 = vld [vmem:[%s3 + $0x310] sm:$0xff]
      %v1564 = vld [vmem:[%s3 + $0x318] sm:$0xff]
      %v1565 = vld [vmem:[%s3 + $0x320] sm:$0xff]
      %v1566 = vld [vmem:[%s3 + $0x328] sm:$0xff]
      %v1567 = vld [vmem:[%s3 + $0x330] sm:$0xff]
      %v1568 = vld [vmem:[%s3 + $0x338] sm:$0xff]
      %v1569 = vld [vmem:[%s3 + $0x340] sm:$0xff]
      %v1570 = vld [vmem:[%s3 + $0x348] sm:$0xff]
      %v1571 = vld [vmem:[%s3 + $0x350] sm:$0xff]
      %v1572 = vld [vmem:[%s3 + $0x358] sm:$0xff]
      %v1573 = vld [vmem:[%s3 + $0x360] sm:$0xff]
      %v1574 = vld [vmem:[%s3 + $0x368] sm:$0xff]
      %v1575 = vld [vmem:[%s3 + $0x370] sm:$0xff]
      %v1576 = vld [vmem:[%s3 + $0x378] sm:$0xff]
      %v1577 = vld [vmem:[%s3 + $0x380] sm:$0xff]
      %v1578 = vld [vmem:[%s3 + $0x388] sm:$0xff]
      %v1579 = vld [vmem:[%s3 + $0x390] sm:$0xff]
      %v1580 = vld [vmem:[%s3 + $0x398] sm:$0xff]
      %v1581 = vld [vmem:[%s3 + $0x3a0] sm:$0xff]
      %v1582 = vld [vmem:[%s3 + $0x3a8] sm:$0xff]
      %v1583 = vld [vmem:[%s3 + $0x3b0] sm:$0xff]
      %v1584 = vld [vmem:[%s3 + $0x3b8] sm:$0xff]
      %v1585 = vld [vmem:[%s3 + $0x3c0] sm:$0xff]
      %v1586 = vld [vmem:[%s3 + $0x3c8] sm:$0xff]
      %v1587 = vld [vmem:[%s3 + $0x3d0] sm:$0xff]
      %v1588 = vld [vmem:[%s3 + $0x3d8] sm:$0xff]
      %v1589 = vld [vmem:[%s3 + $0x3e0] sm:$0xff]
      %v1590 = vld [vmem:[%s3 + $0x3e8] sm:$0xff]
      %v1591 = vld [vmem:[%s3 + $0x3f0] sm:$0xff]
      %v1592 = vld [vmem:[%s3 + $0x3f8] sm:$0xff]
      %v1593 = vld [vmem:[%s3 + $0x400] sm:$0xff]
      %v1594 = vld [vmem:[%s3 + $0x408] sm:$0xff]
      %v1595 = vld [vmem:[%s3 + $0x410] sm:$0xff]
      %v1596 = vld [vmem:[%s3 + $0x418] sm:$0xff]
      %v1597 = vld [vmem:[%s3 + $0x420] sm:$0xff]
      %v1598 = vld [vmem:[%s3 + $0x428] sm:$0xff]
      %v1599 = vld [vmem:[%s3 + $0x430] sm:$0xff]
      %v1600 = vld [vmem:[%s3 + $0x438] sm:$0xff]
      %v1601 = vld [vmem:[%s3 + $0x440] sm:$0xff]
      %v1602 = vld [vmem:[%s3 + $0x448] sm:$0xff]
      %v1603 = vld [vmem:[%s3 + $0x450] sm:$0xff]
      %v1604 = vld [vmem:[%s3 + $0x458] sm:$0xff]
      %v1605 = vld [vmem:[%s3 + $0x460] sm:$0xff]
      %v1606 = vld [vmem:[%s3 + $0x468] sm:$0xff]
      %v1607 = vld [vmem:[%s3 + $0x470] sm:$0xff]
      %v1608 = vld [vmem:[%s3 + $0x478] sm:$0xff]
      %v1609 = vld [vmem:[%s3 + $0x480] sm:$0xff]
      %v1610 = vld [vmem:[%s3 + $0x488] sm:$0xff]
      %v1611 = vld [vmem:[%s3 + $0x490] sm:$0xff]
      %v1612 = vld [vmem:[%s3 + $0x498] sm:$0xff]
      %v1613 = vld [vmem:[%s3 + $0x4a0] sm:$0xff]
      %v1614 = vld [vmem:[%s3 + $0x4a8] sm:$0xff]
      %v1615 = vld [vmem:[%s3 + $0x4b0] sm:$0xff]
      %v1616 = vld [vmem:[%s3 + $0x4b8] sm:$0xff]
      %v1617 = vld [vmem:[%s3 + $0x4c0] sm:$0xff]
      %v1618 = vld [vmem:[%s3 + $0x4c8] sm:$0xff]
      %v1619 = vld [vmem:[%s3 + $0x4d0] sm:$0xff]
      %v1620 = vld [vmem:[%s3 + $0x4d8] sm:$0xff]
      %v1621 = vld [vmem:[%s3 + $0x4e0] sm:$0xff]
      %v1622 = vld [vmem:[%s3 + $0x4e8] sm:$0xff]
      %v1623 = vld [vmem:[%s3 + $0x4f0] sm:$0xff]
      %v1624 = vld [vmem:[%s3 + $0x4f8] sm:$0xff]
      %v1625 = vld [vmem:[%s3 + $0x500] sm:$0xff]
      %v1626 = vld [vmem:[%s3 + $0x508] sm:$0xff]
      %v1627 = vld [vmem:[%s3 + $0x510] sm:$0xff]
      %v1628 = vld [vmem:[%s3 + $0x518] sm:$0xff]
      %v1629 = vld [vmem:[%s3 + $0x520] sm:$0xff]
      %v1630 = vld [vmem:[%s3 + $0x528] sm:$0xff]
      %v1631 = vld [vmem:[%s3 + $0x530] sm:$0xff]
      %v1632 = vld [vmem:[%s3 + $0x538] sm:$0xff]
      %v1633 = vld [vmem:[%s3 + $0x540] sm:$0xff]
      %v1634 = vld [vmem:[%s3 + $0x548] sm:$0xff]
      %v1635 = vld [vmem:[%s3 + $0x550] sm:$0xff]
      %v1636 = vld [vmem:[%s3 + $0x558] sm:$0xff]
      %v1637 = vld [vmem:[%s3 + $0x560] sm:$0xff]
      %v1638 = vld [vmem:[%s3 + $0x568] sm:$0xff]
      %v1639 = vld [vmem:[%s3 + $0x570] sm:$0xff]
      %v1640 = vld [vmem:[%s3 + $0x578] sm:$0xff]
      %v1641 = vld [vmem:[%s3 + $0x580] sm:$0xff]
      %v1642 = vld [vmem:[%s3 + $0x588] sm:$0xff]
      %v1643 = vld [vmem:[%s3 + $0x590] sm:$0xff]
      %v1644 = vld [vmem:[%s3 + $0x598] sm:$0xff]
      %v1645 = vld [vmem:[%s3 + $0x5a0] sm:$0xff]
      %v1646 = vld [vmem:[%s3 + $0x5a8] sm:$0xff]
      %v1647 = vld [vmem:[%s3 + $0x5b0] sm:$0xff]
      %v1648 = vld [vmem:[%s3 + $0x5b8] sm:$0xff]
      %v1649 = vld [vmem:[%s3 + $0x5c0] sm:$0xff]
      %v1650 = vld [vmem:[%s3 + $0x5c8] sm:$0xff]
      %v1651 = vld [vmem:[%s3 + $0x5d0] sm:$0xff]
      %v1652 = vld [vmem:[%s3 + $0x5d8] sm:$0xff]
      %v1653 = vld [vmem:[%s3 + $0x5e0] sm:$0xff]
      %v1654 = vld [vmem:[%s3 + $0x5e8] sm:$0xff]
      %v1655 = vld [vmem:[%s3 + $0x5f0] sm:$0xff]
      %v1656 = vld [vmem:[%s3 + $0x5f8] sm:$0xff]
      %v1657 = vld [vmem:[%s3 + $0x600] sm:$0xff]
      %v1658 = vld [vmem:[%s3 + $0x608] sm:$0xff]
      %v1659 = vld [vmem:[%s3 + $0x610] sm:$0xff]
      %v1660 = vld [vmem:[%s3 + $0x618] sm:$0xff]
      %v1661 = vld [vmem:[%s3 + $0x620] sm:$0xff]
      %v1662 = vld [vmem:[%s3 + $0x628] sm:$0xff]
      %v1663 = vld [vmem:[%s3 + $0x630] sm:$0xff]
      %v1664 = vld [vmem:[%s3 + $0x638] sm:$0xff]
      %v1665 = vld [vmem:[%s3 + $0x640] sm:$0xff]
      %v1666 = vld [vmem:[%s3 + $0x648] sm:$0xff]
      %v1667 = vld [vmem:[%s3 + $0x650] sm:$0xff]
      %v1668 = vld [vmem:[%s3 + $0x658] sm:$0xff]
      %v1669 = vld [vmem:[%s3 + $0x660] sm:$0xff]
      %v1670 = vld [vmem:[%s3 + $0x668] sm:$0xff]
      %v1671 = vld [vmem:[%s3 + $0x670] sm:$0xff]
      %v1672 = vld [vmem:[%s3 + $0x678] sm:$0xff]
      %v1673 = vld [vmem:[%s3 + $0x680] sm:$0xff]
      %v1674 = vld [vmem:[%s3 + $0x688] sm:$0xff]
      %v1675 = vld [vmem:[%s3 + $0x690] sm:$0xff]
      %v1676 = vld [vmem:[%s3 + $0x698] sm:$0xff]
      %v1677 = vld [vmem:[%s3 + $0x6a0] sm:$0xff]
      %v1678 = vld [vmem:[%s3 + $0x6a8] sm:$0xff]
      %v1679 = vld [vmem:[%s3 + $0x6b0] sm:$0xff]
      %v1680 = vld [vmem:[%s3 + $0x6b8] sm:$0xff]
      %v1681 = vld [vmem:[%s3 + $0x6c0] sm:$0xff]
      %v1682 = vld [vmem:[%s3 + $0x6c8] sm:$0xff]
      %v1683 = vld [vmem:[%s3 + $0x6d0] sm:$0xff]
      %v1684 = vld [vmem:[%s3 + $0x6d8] sm:$0xff]
      %v1685 = vld [vmem:[%s3 + $0x6e0] sm:$0xff]
      %v1686 = vld [vmem:[%s3 + $0x6e8] sm:$0xff]
      %v1687 = vld [vmem:[%s3 + $0x6f0] sm:$0xff]
      %v1688 = vld [vmem:[%s3 + $0x6f8] sm:$0xff]
      %v1689 = vld [vmem:[%s3 + $0x700] sm:$0xff]
      %v1690 = vld [vmem:[%s3 + $0x708] sm:$0xff]
      %v1691 = vld [vmem:[%s3 + $0x710] sm:$0xff]
      %v1692 = vld [vmem:[%s3 + $0x718] sm:$0xff]
      %v1693 = vld [vmem:[%s3 + $0x720] sm:$0xff]
      %v1694 = vld [vmem:[%s3 + $0x728] sm:$0xff]
      %v1695 = vld [vmem:[%s3 + $0x730] sm:$0xff]
      %v1696 = vld [vmem:[%s3 + $0x738] sm:$0xff]
      %v1697 = vld [vmem:[%s3 + $0x740] sm:$0xff]
      %v1698 = vld [vmem:[%s3 + $0x748] sm:$0xff]
      %v1699 = vld [vmem:[%s3 + $0x750] sm:$0xff]
      %v1700 = vld [vmem:[%s3 + $0x758] sm:$0xff]
      %v1701 = vld [vmem:[%s3 + $0x760] sm:$0xff]
      %v1702 = vld [vmem:[%s3 + $0x768] sm:$0xff]
      %v1703 = vld [vmem:[%s3 + $0x770] sm:$0xff]
      %v1704 = vld [vmem:[%s3 + $0x778] sm:$0xff]
      %v1705 = vld [vmem:[%s3 + $0x780] sm:$0xff]
      %v1706 = vld [vmem:[%s3 + $0x788] sm:$0xff]
      %v1707 = vld [vmem:[%s3 + $0x790] sm:$0xff]
      %v1708 = vld [vmem:[%s3 + $0x798] sm:$0xff]
      %v1709 = vld [vmem:[%s3 + $0x7a0] sm:$0xff]
      %v1710 = vld [vmem:[%s3 + $0x7a8] sm:$0xff]
      %v1711 = vld [vmem:[%s3 + $0x7b0] sm:$0xff]
      %v1712 = vld [vmem:[%s3 + $0x7b8] sm:$0xff]
      %v1713 = vld [vmem:[%s3 + $0x7c0] sm:$0xff]
      %v1714 = vld [vmem:[%s3 + $0x7c8] sm:$0xff]
      %v1715 = vld [vmem:[%s3 + $0x7d0] sm:$0xff]
      %v1716 = vld [vmem:[%s3 + $0x7d8] sm:$0xff]
      %v1717 = vld [vmem:[%s3 + $0x7e0] sm:$0xff]
      %v1718 = vld [vmem:[%s3 + $0x7e8] sm:$0xff]
      %v1719 = vld [vmem:[%s3 + $0x7f0] sm:$0xff]
      %v1720 = vld [vmem:[%s3 + $0x7f8] sm:$0xff]
      %v1721 = vld [vmem:[%s3 + $0x800] sm:$0xff]
      %v1722 = vld [vmem:[%s3 + $0x808] sm:$0xff]
      %v1723 = vld [vmem:[%s3 + $0x810] sm:$0xff]
      %v1724 = vld [vmem:[%s3 + $0x818] sm:$0x7f]
      %vm1725 = vcmask 252928
      %v1727 = vsel %vm1725, %v1004, 0
      %v1730 = vsel %vm1725, %v1021, 0
      %v1733 = vsel %vm1725, %v1038, 0
      %v1736 = vsel %vm1725, %v1055, 0
      %v1739 = vsel %vm1725, %v1072, 0
      %v1742 = vsel %vm1725, %v1089, 0
      %v1745 = vsel %vm1725, %v1106, 0
      %v1748 = vsel %vm1725, %v1123, 0
      %v1751 = vsel %vm1725, %v1140, 0
      %v1754 = vsel %vm1725, %v1157, 0
      %v1757 = vsel %vm1725, %v1174, 0
      %v1760 = vsel %vm1725, %v1191, 0
      %v1763 = vsel %vm1725, %v1208, 0
      %v1766 = vsel %vm1725, %v1225, 0
      %v1769 = vsel %vm1725, %v1242, 0
      %v1772 = vsel %vm1725, %v1259, 0
      %vm1774 = vcmask 1046528
      %v1776 = vsel %vm1774, %v1724, 0
      %1778 = vmatprep.subr.mxu0 0.0
      %1779 = vmatpush1.msra.mxu0 %v1465
      %1780 = vmatprep.subr.mxu0 0.0
      %1781 = vmatpush1.msra.mxu0 %v1466
      %1782 = vmatprep.subr.mxu0 0.0
      %1783 = vmatpush1.msra.mxu0 %v1467
      %1784 = vmatprep.subr.mxu0 0.0
      %1785 = vmatpush1.msra.mxu0 %v1468
      %1786 = vmatprep.subr.mxu0 0.0
      %1787 = vmatpush1.msra.mxu0 %v1469
      %1788 = vmatprep.subr.mxu0 0.0
      %1789 = vmatpush1.msra.mxu0 %v1470
      %1790 = vmatprep.subr.mxu0 0.0
      %1791 = vmatpush1.msra.mxu0 %v1471
      %1792 = vmatprep.subr.mxu0 0.0
      %1793 = vmatpush1.msra.mxu0 %v1472
      %1794 = vmatprep.subr.mxu0 0.0
      %1795 = vmatpush1.msra.mxu0 %v1473
      %1796 = vmatprep.subr.mxu0 0.0
      %1797 = vmatpush1.msra.mxu0 %v1474
      %1798 = vmatprep.subr.mxu0 0.0
      %1799 = vmatpush1.msra.mxu0 %v1475
      %1800 = vmatprep.subr.mxu0 0.0
      %1801 = vmatpush1.msra.mxu0 %v1476
      %1802 = vmatprep.subr.mxu0 0.0
      %1803 = vmatpush1.msra.mxu0 %v1477
      %1804 = vmatprep.subr.mxu0 0.0
      %1805 = vmatpush1.msra.mxu0 %v1478
      %1806 = vmatprep.subr.mxu0 0.0
      %1807 = vmatpush1.msra.mxu0 %v1479
      %1808 = vmatprep.subr.mxu0 0.0
      %1809 = vmatpush1.msra.mxu0 %v1480
      %1810 = vmatprep.subr.mxu0 0.0
      %1811 = vmatpush1.msra.mxu0 %v1481
      %1812 = vmatprep.subr.mxu0 0.0
      %1813 = vmatpush1.msra.mxu0 %v1482
      %1814 = vmatprep.subr.mxu0 0.0
      %1815 = vmatpush1.msra.mxu0 %v1483
      %1816 = vmatprep.subr.mxu0 0.0
      %1817 = vmatpush1.msra.mxu0 %v1484
      %1818 = vmatprep.subr.mxu0 0.0
      %1819 = vmatpush1.msra.mxu0 %v1485
      %1820 = vmatprep.subr.mxu0 0.0
      %1821 = vmatpush1.msra.mxu0 %v1486
      %1822 = vmatprep.subr.mxu0 0.0
      %1823 = vmatpush1.msra.mxu0 %v1487
      %1824 = vmatprep.subr.mxu0 0.0
      %1825 = vmatpush1.msra.mxu0 %v1488
      %1826 = vmatprep.subr.mxu0 0.0
      %1827 = vmatpush1.msra.mxu0 %v1489
      %1828 = vmatprep.subr.mxu0 0.0
      %1829 = vmatpush1.msra.mxu0 %v1490
      %1830 = vmatprep.subr.mxu0 0.0
      %1831 = vmatpush1.msra.mxu0 %v1491
      %1832 = vmatprep.subr.mxu0 0.0
      %1833 = vmatpush1.msra.mxu0 %v1492
      %1834 = vmatprep.subr.mxu0 0.0
      %1835 = vmatpush1.msra.mxu0 %v1493
      %1836 = vmatprep.subr.mxu0 0.0
      %1837 = vmatpush1.msra.mxu0 %v1494
      %1838 = vmatprep.subr.mxu0 0.0
      %1839 = vmatpush1.msra.mxu0 %v1495
      %1840 = vmatprep.subr.mxu0 0.0
      %1841 = vmatpush1.msra.mxu0 %v1496
      %1842 = vmatprep.mubr.f32.mxu0 %v989
      %1843 = vmatmul.mubr.f32.gmra.mrb[0].mxu0 %v988
      %v1844 = vpop.f32.mrb[0].mxu0
      %v1845 = vadd.f32 0.0, %v1844
      %v1846 = vpop.f32.mrb[0].mxu0
      %1847 = vmatprep.mubr.f32.mxu0 %v1006
      %1848 = vmatmul.mubr.f32.gmra.mrb[0].mxu0 %v1005
      %v1849 = vpop.f32.mrb[0].mxu0
      %v1850 = vadd.f32 0.0, %v1849
      %v1851 = vpop.f32.mrb[0].mxu0
      %1852 = vmatprep.mubr.f32.mxu0 %v1023
      %1853 = vmatmul.mubr.f32.gmra.mrb[0].mxu0 %v1022
      %v1854 = vpop.f32.mrb[0].mxu0
      %v1855 = vadd.f32 0.0, %v1854
      %v1856 = vpop.f32.mrb[0].mxu0
      %1857 = vmatprep.mubr.f32.mxu0 %v1040
      %1858 = vmatmul.mubr.f32.gmra.mrb[0].mxu0 %v1039
      %v1859 = vpop.f32.mrb[0].mxu0
      %v1860 = vadd.f32 0.0, %v1859
      %v1861 = vpop.f32.mrb[0].mxu0
      %1862 = vmatprep.mubr.f32.mxu0 %v1057
      %1863 = vmatmul.mubr.f32.gmra.mrb[0].mxu0 %v1056
      %v1864 = vpop.f32.mrb[0].mxu0
      %v1865 = vadd.f32 0.0, %v1864
      %v1866 = vpop.f32.mrb[0].mxu0
      %1867 = vmatprep.mubr.f32.mxu0 %v1074
      %1868 = vmatmul.mubr.f32.gmra.mrb[0].mxu0 %v1073
      %v1869 = vpop.f32.mrb[0].mxu0
      %v1870 = vadd.f32 0.0, %v1869
      %v1871 = vpop.f32.mrb[0].mxu0
      %1872 = vmatprep.mubr.f32.mxu0 %v1091
      %1873 = vmatmul.mubr.f32.gmra.mrb[0].mxu0 %v1090
      %v1874 = vpop.f32.mrb[0].mxu0
      %v1875 = vadd.f32 0.0, %v1874
      %v1876 = vpop.f32.mrb[0].mxu0
      %1877 = vmatprep.mubr.f32.mxu0 %v1108
      %1878 = vmatmul.mubr.f32.gmra.mrb[0].mxu0 %v1107
      %v1879 = vpop.f32.mrb[0].mxu0
      %v1880 = vadd.f32 0.0, %v1879
      %v1881 = vpop.f32.mrb[0].mxu0
      %1882 = vmatprep.mubr.f32.mxu0 %v1125
      %1883 = vmatmul.mubr.f32.gmra.mrb[0].mxu0 %v1124
      %v1884 = vpop.f32.mrb[0].mxu0
      %v1885 = vadd.f32 0.0, %v1884
      %v1886 = vpop.f32.mrb[0].mxu0
      %1887 = vmatprep.mubr.f32.mxu0 %v1142
      %1888 = vmatmul.mubr.f32.gmra.mrb[0].mxu0 %v1141
      %v1889 = vpop.f32.mrb[0].mxu0
      %v1890 = vadd.f32 0.0, %v1889
      %v1891 = vpop.f32.mrb[0].mxu0
      %1892 = vmatprep.mubr.f32.mxu0 %v1159
      %1893 = vmatmul.mubr.f32.gmra.mrb[0].mxu0 %v1158
      %v1894 = vpop.f32.mrb[0].mxu0
      %v1895 = vadd.f32 0.0, %v1894
      %v1896 = vpop.f32.mrb[0].mxu0
      %1897 = vmatprep.mubr.f32.mxu0 %v1176
      %1898 = vmatmul.mubr.f32.gmra.mrb[0].mxu0 %v1175
      %v1899 = vpop.f32.mrb[0].mxu0
      %v1900 = vadd.f32 0.0, %v1899
      %v1901 = vpop.f32.mrb[0].mxu0
      %1902 = vmatprep.mubr.f32.mxu0 %v1193
      %1903 = vmatmul.mubr.f32.gmra.mrb[0].mxu0 %v1192
      %v1904 = vpop.f32.mrb[0].mxu0
      %v1905 = vadd.f32 0.0, %v1904
      %v1906 = vpop.f32.mrb[0].mxu0
      %1907 = vmatprep.mubr.f32.mxu0 %v1210
      %1908 = vmatmul.mubr.f32.gmra.mrb[0].mxu0 %v1209
      %v1909 = vpop.f32.mrb[0].mxu0
      %v1910 = vadd.f32 0.0, %v1909
      %v1911 = vpop.f32.mrb[0].mxu0
      %1912 = vmatprep.mubr.f32.mxu0 %v1227
      %1913 = vmatmul.mubr.f32.gmra.mrb[0].mxu0 %v1226
      %v1914 = vpop.f32.mrb[0].mxu0
      %v1915 = vadd.f32 0.0, %v1914
      %v1916 = vpop.f32.mrb[0].mxu0
      %1917 = vmatprep.mubr.f32.mxu0 %v1244
      %1918 = vmatmul.mubr.f32.gmra.mrb[0].mxu0 %v1243
      %v1919 = vpop.f32.mrb[0].mxu0
      %v1920 = vadd.f32 0.0, %v1919
      %v1921 = vpop.f32.mrb[0].mxu0
      %1922 = vdwg.mxu0
      %1923 = vmatprep.subr.mxu0 0.0
      %1924 = vmatpush1.msra.mxu0 %v1497
      %1925 = vmatprep.subr.mxu0 0.0
      %1926 = vmatpush1.msra.mxu0 %v1498
      %1927 = vmatprep.subr.mxu0 0.0
      %1928 = vmatpush1.msra.mxu0 %v1499
      %1929 = vmatprep.subr.mxu0 0.0
      %1930 = vmatpush1.msra.mxu0 %v1500
      %1931 = vmatprep.subr.mxu0 0.0
      %1932 = vmatpush1.msra.mxu0 %v1501
      %1933 = vmatprep.subr.mxu0 0.0
      %1934 = vmatpush1.msra.mxu0 %v1502
      %1935 = vmatprep.subr.mxu0 0.0
      %1936 = vmatpush1.msra.mxu0 %v1503
      %1937 = vmatprep.subr.mxu0 0.0
      %1938 = vmatpush1.msra.mxu0 %v1504
      %1939 = vmatprep.subr.mxu0 0.0
      %1940 = vmatpush1.msra.mxu0 %v1505
      %1941 = vmatprep.subr.mxu0 0.0
      %1942 = vmatpush1.msra.mxu0 %v1506
      %1943 = vmatprep.subr.mxu0 0.0
      %1944 = vmatpush1.msra.mxu0 %v1507
      %1945 = vmatprep.subr.mxu0 0.0
      %1946 = vmatpush1.msra.mxu0 %v1508
      %1947 = vmatprep.subr.mxu0 0.0
      %1948 = vmatpush1.msra.mxu0 %v1509
      %1949 = vmatprep.subr.mxu0 0.0
      %1950 = vmatpush1.msra.mxu0 %v1510
      %1951 = vmatprep.subr.mxu0 0.0
      %1952 = vmatpush1.msra.mxu0 %v1511
      %1953 = vmatprep.subr.mxu0 0.0
      %1954 = vmatpush1.msra.mxu0 %v1512
      %1955 = vmatprep.subr.mxu0 0.0
      %1956 = vmatpush1.msra.mxu0 %v1513
      %1957 = vmatprep.subr.mxu0 0.0
      %1958 = vmatpush1.msra.mxu0 %v1514
      %1959 = vmatprep.subr.mxu0 0.0
      %1960 = vmatpush1.msra.mxu0 %v1515
      %1961 = vmatprep.subr.mxu0 0.0
      %1962 = vmatpush1.msra.mxu0 %v1516
      %1963 = vmatprep.subr.mxu0 0.0
      %1964 = vmatpush1.msra.mxu0 %v1517
      %1965 = vmatprep.subr.mxu0 0.0
      %1966 = vmatpush1.msra.mxu0 %v1518
      %1967 = vmatprep.subr.mxu0 0.0
      %1968 = vmatpush1.msra.mxu0 %v1519
      %1969 = vmatprep.subr.mxu0 0.0
      %1970 = vmatpush1.msra.mxu0 %v1520
      %1971 = vmatprep.subr.mxu0 0.0
      %1972 = vmatpush1.msra.mxu0 %v1521
      %1973 = vmatprep.subr.mxu0 0.0
      %1974 = vmatpush1.msra.mxu0 %v1522
      %1975 = vmatprep.subr.mxu0 0.0
      %1976 = vmatpush1.msra.mxu0 %v1523
      %1977 = vmatprep.subr.mxu0 0.0
      %1978 = vmatpush1.msra.mxu0 %v1524
      %1979 = vmatprep.subr.mxu0 0.0
      %1980 = vmatpush1.msra.mxu0 %v1525
      %1981 = vmatprep.subr.mxu0 0.0
      %1982 = vmatpush1.msra.mxu0 %v1526
      %1983 = vmatprep.subr.mxu0 0.0
      %1984 = vmatpush1.msra.mxu0 %v1527
      %1985 = vmatprep.subr.mxu0 0.0
      %1986 = vmatpush1.msra.mxu0 %v1528
      %1987 = vmatprep.mubr.f32.mxu0 %v991
      %1988 = vmatmul.mubr.f32.gmra.mrb[0].mxu0 %v990
      %v1989 = vpop.f32.mrb[0].mxu0
      %v1990 = vadd.f32 %v1845, %v1989
      %v1991 = vpop.f32.mrb[0].mxu0
      %1992 = vmatprep.mubr.f32.mxu0 %v1008
      %1993 = vmatmul.mubr.f32.gmra.mrb[0].mxu0 %v1007
      %v1994 = vpop.f32.mrb[0].mxu0
      %v1995 = vadd.f32 %v1850, %v1994
      %v1996 = vpop.f32.mrb[0].mxu0
      %1997 = vmatprep.mubr.f32.mxu0 %v1025
      %1998 = vmatmul.mubr.f32.gmra.mrb[0].mxu0 %v1024
      %v1999 = vpop.f32.mrb[0].mxu0
      %v2000 = vadd.f32 %v1855, %v1999
      %v2001 = vpop.f32.mrb[0].mxu0
      %2002 = vmatprep.mubr.f32.mxu0 %v1042
      %2003 = vmatmul.mubr.f32.gmra.mrb[0].mxu0 %v1041
      %v2004 = vpop.f32.mrb[0].mxu0
      %v2005 = vadd.f32 %v1860, %v2004
      %v2006 = vpop.f32.mrb[0].mxu0
      %2007 = vmatprep.mubr.f32.mxu0 %v1059
      %2008 = vmatmul.mubr.f32.gmra.mrb[0].mxu0 %v1058
      %v2009 = vpop.f32.mrb[0].mxu0
      %v2010 = vadd.f32 %v1865, %v2009
      %v2011 = vpop.f32.mrb[0].mxu0
      %2012 = vmatprep.mubr.f32.mxu0 %v1076
      %2013 = vmatmul.mubr.f32.gmra.mrb[0].mxu0 %v1075
      %v2014 = vpop.f32.mrb[0].mxu0
      %v2015 = vadd.f32 %v1870, %v2014
      %v2016 = vpop.f32.mrb[0].mxu0
      %2017 = vmatprep.mubr.f32.mxu0 %v1093
      %2018 = vmatmul.mubr.f32.gmra.mrb[0].mxu0 %v1092
      %v2019 = vpop.f32.mrb[0].mxu0
      %v2020 = vadd.f32 %v1875, %v2019
      %v2021 = vpop.f32.mrb[0].mxu0
      %2022 = vmatprep.mubr.f32.mxu0 %v1110
      %2023 = vmatmul.mubr.f32.gmra.mrb[0].mxu0 %v1109
      %v2024 = vpop.f32.mrb[0].mxu0
      %v2025 = vadd.f32 %v1880, %v2024
      %v2026 = vpop.f32.mrb[0].mxu0
      %2027 = vmatprep.mubr.f32.mxu0 %v1127
      %2028 = vmatmul.mubr.f32.gmra.mrb[0].mxu0 %v1126
      %v2029 = vpop.f32.mrb[0].mxu0
      %v2030 = vadd.f32 %v1885, %v2029
      %v2031 = vpop.f32.mrb[0].mxu0
      %2032 = vmatprep.mubr.f32.mxu0 %v1144
      %2033 = vmatmul.mubr.f32.gmra.mrb[0].mxu0 %v1143
      %v2034 = vpop.f32.mrb[0].mxu0
      %v2035 = vadd.f32 %v1890, %v2034
      %v2036 = vpop.f32.mrb[0].mxu0
      %2037 = vmatprep.mubr.f32.mxu0 %v1161
      %2038 = vmatmul.mubr.f32.gmra.mrb[0].mxu0 %v1160
      %v2039 = vpop.f32.mrb[0].mxu0
      %v2040 = vadd.f32 %v1895, %v2039
      %v2041 = vpop.f32.mrb[0].mxu0
      %2042 = vmatprep.mubr.f32.mxu0 %v1178
      %2043 = vmatmul.mubr.f32.gmra.mrb[0].mxu0 %v1177
      %v2044 = vpop.f32.mrb[0].mxu0
      %v2045 = vadd.f32 %v1900, %v2044
      %v2046 = vpop.f32.mrb[0].mxu0
      %2047 = vmatprep.mubr.f32.mxu0 %v1195
      %2048 = vmatmul.mubr.f32.gmra.mrb[0].mxu0 %v1194
      %v2049 = vpop.f32.mrb[0].mxu0
      %v2050 = vadd.f32 %v1905, %v2049
      %v2051 = vpop.f32.mrb[0].mxu0
      %2052 = vmatprep.mubr.f32.mxu0 %v1212
      %2053 = vmatmul.mubr.f32.gmra.mrb[0].mxu0 %v1211
      %v2054 = vpop.f32.mrb[0].mxu0
      %v2055 = vadd.f32 %v1910, %v2054
      %v2056 = vpop.f32.mrb[0].mxu0
      %2057 = vmatprep.mubr.f32.mxu0 %v1229
      %2058 = vmatmul.mubr.f32.gmra.mrb[0].mxu0 %v1228
      %v2059 = vpop.f32.mrb[0].mxu0
      %v2060 = vadd.f32 %v1915, %v2059
      %v2061 = vpop.f32.mrb[0].mxu0
      %2062 = vmatprep.mubr.f32.mxu0 %v1246
      %2063 = vmatmul.mubr.f32.gmra.mrb[0].mxu0 %v1245
      %v2064 = vpop.f32.mrb[0].mxu0
      %v2065 = vadd.f32 %v1920, %v2064
      %v2066 = vpop.f32.mrb[0].mxu0
      %2067 = vdwg.mxu0
      %2068 = vmatprep.subr.mxu0 0.0
      %2069 = vmatpush1.msra.mxu0 %v1529
      %2070 = vmatprep.subr.mxu0 0.0
      %2071 = vmatpush1.msra.mxu0 %v1530
      %2072 = vmatprep.subr.mxu0 0.0
      %2073 = vmatpush1.msra.mxu0 %v1531
      %2074 = vmatprep.subr.mxu0 0.0
      %2075 = vmatpush1.msra.mxu0 %v1532
      %2076 = vmatprep.subr.mxu0 0.0
      %2077 = vmatpush1.msra.mxu0 %v1533
      %2078 = vmatprep.subr.mxu0 0.0
      %2079 = vmatpush1.msra.mxu0 %v1534
      %2080 = vmatprep.subr.mxu0 0.0
      %2081 = vmatpush1.msra.mxu0 %v1535
      %2082 = vmatprep.subr.mxu0 0.0
      %2083 = vmatpush1.msra.mxu0 %v1536
      %2084 = vmatprep.subr.mxu0 0.0
      %2085 = vmatpush1.msra.mxu0 %v1537
      %2086 = vmatprep.subr.mxu0 0.0
      %2087 = vmatpush1.msra.mxu0 %v1538
      %2088 = vmatprep.subr.mxu0 0.0
      %2089 = vmatpush1.msra.mxu0 %v1539
      %2090 = vmatprep.subr.mxu0 0.0
      %2091 = vmatpush1.msra.mxu0 %v1540
      %2092 = vmatprep.subr.mxu0 0.0
      %2093 = vmatpush1.msra.mxu0 %v1541
      %2094 = vmatprep.subr.mxu0 0.0
      %2095 = vmatpush1.msra.mxu0 %v1542
      %2096 = vmatprep.subr.mxu0 0.0
      %2097 = vmatpush1.msra.mxu0 %v1543
      %2098 = vmatprep.subr.mxu0 0.0
      %2099 = vmatpush1.msra.mxu0 %v1544
      %2100 = vmatprep.subr.mxu0 0.0
      %2101 = vmatpush1.msra.mxu0 %v1545
      %2102 = vmatprep.subr.mxu0 0.0
      %2103 = vmatpush1.msra.mxu0 %v1546
      %2104 = vmatprep.subr.mxu0 0.0
      %2105 = vmatpush1.msra.mxu0 %v1547
      %2106 = vmatprep.subr.mxu0 0.0
      %2107 = vmatpush1.msra.mxu0 %v1548
      %2108 = vmatprep.subr.mxu0 0.0
      %2109 = vmatpush1.msra.mxu0 %v1549
      %2110 = vmatprep.subr.mxu0 0.0
      %2111 = vmatpush1.msra.mxu0 %v1550
      %2112 = vmatprep.subr.mxu0 0.0
      %2113 = vmatpush1.msra.mxu0 %v1551
      %2114 = vmatprep.subr.mxu0 0.0
      %2115 = vmatpush1.msra.mxu0 %v1552
      %2116 = vmatprep.subr.mxu0 0.0
      %2117 = vmatpush1.msra.mxu0 %v1553
      %2118 = vmatprep.subr.mxu0 0.0
      %2119 = vmatpush1.msra.mxu0 %v1554
      %2120 = vmatprep.subr.mxu0 0.0
      %2121 = vmatpush1.msra.mxu0 %v1555
      %2122 = vmatprep.subr.mxu0 0.0
      %2123 = vmatpush1.msra.mxu0 %v1556
      %2124 = vmatprep.subr.mxu0 0.0
      %2125 = vmatpush1.msra.mxu0 %v1557
      %2126 = vmatprep.subr.mxu0 0.0
      %2127 = vmatpush1.msra.mxu0 %v1558
      %2128 = vmatprep.subr.mxu0 0.0
      %2129 = vmatpush1.msra.mxu0 %v1559
      %2130 = vmatprep.subr.mxu0 0.0
      %2131 = vmatpush1.msra.mxu0 %v1560
      %2132 = vmatprep.mubr.f32.mxu0 %v993
      %2133 = vmatmul.mubr.f32.gmra.mrb[0].mxu0 %v992
      %v2134 = vpop.f32.mrb[0].mxu0
      %v2135 = vadd.f32 %v1990, %v2134
      %v2136 = vpop.f32.mrb[0].mxu0
      %2137 = vmatprep.mubr.f32.mxu0 %v1010
      %2138 = vmatmul.mubr.f32.gmra.mrb[0].mxu0 %v1009
      %v2139 = vpop.f32.mrb[0].mxu0
      %v2140 = vadd.f32 %v1995, %v2139
      %v2141 = vpop.f32.mrb[0].mxu0
      %2142 = vmatprep.mubr.f32.mxu0 %v1027
      %2143 = vmatmul.mubr.f32.gmra.mrb[0].mxu0 %v1026
      %v2144 = vpop.f32.mrb[0].mxu0
      %v2145 = vadd.f32 %v2000, %v2144
      %v2146 = vpop.f32.mrb[0].mxu0
      %2147 = vmatprep.mubr.f32.mxu0 %v1044
      %2148 = vmatmul.mubr.f32.gmra.mrb[0].mxu0 %v1043
      %v2149 = vpop.f32.mrb[0].mxu0
      %v2150 = vadd.f32 %v2005, %v2149
      %v2151 = vpop.f32.mrb[0].mxu0
      %2152 = vmatprep.mubr.f32.mxu0 %v1061
      %2153 = vmatmul.mubr.f32.gmra.mrb[0].mxu0 %v1060
      %v2154 = vpop.f32.mrb[0].mxu0
      %v2155 = vadd.f32 %v2010, %v2154
      %v2156 = vpop.f32.mrb[0].mxu0
      %2157 = vmatprep.mubr.f32.mxu0 %v1078
      %2158 = vmatmul.mubr.f32.gmra.mrb[0].mxu0 %v1077
      %v2159 = vpop.f32.mrb[0].mxu0
      %v2160 = vadd.f32 %v2015, %v2159
      %v2161 = vpop.f32.mrb[0].mxu0
      %2162 = vmatprep.mubr.f32.mxu0 %v1095
      %2163 = vmatmul.mubr.f32.gmra.mrb[0].mxu0 %v1094
      %v2164 = vpop.f32.mrb[0].mxu0
      %v2165 = vadd.f32 %v2020, %v2164
      %v2166 = vpop.f32.mrb[0].mxu0
      %2167 = vmatprep.mubr.f32.mxu0 %v1112
      %2168 = vmatmul.mubr.f32.gmra.mrb[0].mxu0 %v1111
      %v2169 = vpop.f32.mrb[0].mxu0
      %v2170 = vadd.f32 %v2025, %v2169
      %v2171 = vpop.f32.mrb[0].mxu0
      %2172 = vmatprep.mubr.f32.mxu0 %v1129
      %2173 = vmatmul.mubr.f32.gmra.mrb[0].mxu0 %v1128
      %v2174 = vpop.f32.mrb[0].mxu0
      %v2175 = vadd.f32 %v2030, %v2174
      %v2176 = vpop.f32.mrb[0].mxu0
      %2177 = vmatprep.mubr.f32.mxu0 %v1146
      %2178 = vmatmul.mubr.f32.gmra.mrb[0].mxu0 %v1145
      %v2179 = vpop.f32.mrb[0].mxu0
      %v2180 = vadd.f32 %v2035, %v2179
      %v2181 = vpop.f32.mrb[0].mxu0
      %2182 = vmatprep.mubr.f32.mxu0 %v1163
      %2183 = vmatmul.mubr.f32.gmra.mrb[0].mxu0 %v1162
      %v2184 = vpop.f32.mrb[0].mxu0
      %v2185 = vadd.f32 %v2040, %v2184
      %v2186 = vpop.f32.mrb[0].mxu0
      %2187 = vmatprep.mubr.f32.mxu0 %v1180
      %2188 = vmatmul.mubr.f32.gmra.mrb[0].mxu0 %v1179
      %v2189 = vpop.f32.mrb[0].mxu0
      %v2190 = vadd.f32 %v2045, %v2189
      %v2191 = vpop.f32.mrb[0].mxu0
      %2192 = vmatprep.mubr.f32.mxu0 %v1197
      %2193 = vmatmul.mubr.f32.gmra.mrb[0].mxu0 %v1196
      %v2194 = vpop.f32.mrb[0].mxu0
      %v2195 = vadd.f32 %v2050, %v2194
      %v2196 = vpop.f32.mrb[0].mxu0
      %2197 = vmatprep.mubr.f32.mxu0 %v1214
      %2198 = vmatmul.mubr.f32.gmra.mrb[0].mxu0 %v1213
      %v2199 = vpop.f32.mrb[0].mxu0
      %v2200 = vadd.f32 %v2055, %v2199
      %v2201 = vpop.f32.mrb[0].mxu0
      %2202 = vmatprep.mubr.f32.mxu0 %v1231
      %2203 = vmatmul.mubr.f32.gmra.mrb[0].mxu0 %v1230
      %v2204 = vpop.f32.mrb[0].mxu0
      %v2205 = vadd.f32 %v2060, %v2204
      %v2206 = vpop.f32.mrb[0].mxu0
      %2207 = vmatprep.mubr.f32.mxu0 %v1248
      %2208 = vmatmul.mubr.f32.gmra.mrb[0].mxu0 %v1247
      %v2209 = vpop.f32.mrb[0].mxu0
      %v2210 = vadd.f32 %v2065, %v2209
      %v2211 = vpop.f32.mrb[0].mxu0
      %2212 = vdwg.mxu0
      %2213 = vmatprep.subr.mxu0 0.0
      %2214 = vmatpush1.msra.mxu0 %v1561
      %2215 = vmatprep.subr.mxu0 0.0
      %2216 = vmatpush1.msra.mxu0 %v1562
      %2217 = vmatprep.subr.mxu0 0.0
      %2218 = vmatpush1.msra.mxu0 %v1563
      %2219 = vmatprep.subr.mxu0 0.0
      %2220 = vmatpush1.msra.mxu0 %v1564
      %2221 = vmatprep.subr.mxu0 0.0
      %2222 = vmatpush1.msra.mxu0 %v1565
      %2223 = vmatprep.subr.mxu0 0.0
      %2224 = vmatpush1.msra.mxu0 %v1566
      %2225 = vmatprep.subr.mxu0 0.0
      %2226 = vmatpush1.msra.mxu0 %v1567
      %2227 = vmatprep.subr.mxu0 0.0
      %2228 = vmatpush1.msra.mxu0 %v1568
      %2229 = vmatprep.subr.mxu0 0.0
      %2230 = vmatpush1.msra.mxu0 %v1569
      %2231 = vmatprep.subr.mxu0 0.0
      %2232 = vmatpush1.msra.mxu0 %v1570
      %2233 = vmatprep.subr.mxu0 0.0
      %2234 = vmatpush1.msra.mxu0 %v1571
      %2235 = vmatprep.subr.mxu0 0.0
      %2236 = vmatpush1.msra.mxu0 %v1572
      %2237 = vmatprep.subr.mxu0 0.0
      %2238 = vmatpush1.msra.mxu0 %v1573
      %2239 = vmatprep.subr.mxu0 0.0
      %2240 = vmatpush1.msra.mxu0 %v1574
      %2241 = vmatprep.subr.mxu0 0.0
      %2242 = vmatpush1.msra.mxu0 %v1575
      %2243 = vmatprep.subr.mxu0 0.0
      %2244 = vmatpush1.msra.mxu0 %v1576
      %2245 = vmatprep.subr.mxu0 0.0
      %2246 = vmatpush1.msra.mxu0 %v1577
      %2247 = vmatprep.subr.mxu0 0.0
      %2248 = vmatpush1.msra.mxu0 %v1578
      %2249 = vmatprep.subr.mxu0 0.0
      %2250 = vmatpush1.msra.mxu0 %v1579
      %2251 = vmatprep.subr.mxu0 0.0
      %2252 = vmatpush1.msra.mxu0 %v1580
      %2253 = vmatprep.subr.mxu0 0.0
      %2254 = vmatpush1.msra.mxu0 %v1581
      %2255 = vmatprep.subr.mxu0 0.0
      %2256 = vmatpush1.msra.mxu0 %v1582
      %2257 = vmatprep.subr.mxu0 0.0
      %2258 = vmatpush1.msra.mxu0 %v1583
      %2259 = vmatprep.subr.mxu0 0.0
      %2260 = vmatpush1.msra.mxu0 %v1584
      %2261 = vmatprep.subr.mxu0 0.0
      %2262 = vmatpush1.msra.mxu0 %v1585
      %2263 = vmatprep.subr.mxu0 0.0
      %2264 = vmatpush1.msra.mxu0 %v1586
      %2265 = vmatprep.subr.mxu0 0.0
      %2266 = vmatpush1.msra.mxu0 %v1587
      %2267 = vmatprep.subr.mxu0 0.0
      %2268 = vmatpush1.msra.mxu0 %v1588
      %2269 = vmatprep.subr.mxu0 0.0
      %2270 = vmatpush1.msra.mxu0 %v1589
      %2271 = vmatprep.subr.mxu0 0.0
      %2272 = vmatpush1.msra.mxu0 %v1590
      %2273 = vmatprep.subr.mxu0 0.0
      %2274 = vmatpush1.msra.mxu0 %v1591
      %2275 = vmatprep.subr.mxu0 0.0
      %2276 = vmatpush1.msra.mxu0 %v1592
      %2277 = vmatprep.mubr.f32.mxu0 %v995
      %2278 = vmatmul.mubr.f32.gmra.mrb[0].mxu0 %v994
      %v2279 = vpop.f32.mrb[0].mxu0
      %v2280 = vadd.f32 %v2135, %v2279
      %v2281 = vpop.f32.mrb[0].mxu0
      %2282 = vmatprep.mubr.f32.mxu0 %v1012
      %2283 = vmatmul.mubr.f32.gmra.mrb[0].mxu0 %v1011
      %v2284 = vpop.f32.mrb[0].mxu0
      %v2285 = vadd.f32 %v2140, %v2284
      %v2286 = vpop.f32.mrb[0].mxu0
      %2287 = vmatprep.mubr.f32.mxu0 %v1029
      %2288 = vmatmul.mubr.f32.gmra.mrb[0].mxu0 %v1028
      %v2289 = vpop.f32.mrb[0].mxu0
      %v2290 = vadd.f32 %v2145, %v2289
      %v2291 = vpop.f32.mrb[0].mxu0
      %2292 = vmatprep.mubr.f32.mxu0 %v1046
      %2293 = vmatmul.mubr.f32.gmra.mrb[0].mxu0 %v1045
      %v2294 = vpop.f32.mrb[0].mxu0
      %v2295 = vadd.f32 %v2150, %v2294
      %v2296 = vpop.f32.mrb[0].mxu0
      %2297 = vmatprep.mubr.f32.mxu0 %v1063
      %2298 = vmatmul.mubr.f32.gmra.mrb[0].mxu0 %v1062
      %v2299 = vpop.f32.mrb[0].mxu0
      %v2300 = vadd.f32 %v2155, %v2299
      %v2301 = vpop.f32.mrb[0].mxu0
      %2302 = vmatprep.mubr.f32.mxu0 %v1080
      %2303 = vmatmul.mubr.f32.gmra.mrb[0].mxu0 %v1079
      %v2304 = vpop.f32.mrb[0].mxu0
      %v2305 = vadd.f32 %v2160, %v2304
      %v2306 = vpop.f32.mrb[0].mxu0
      %2307 = vmatprep.mubr.f32.mxu0 %v1097
      %2308 = vmatmul.mubr.f32.gmra.mrb[0].mxu0 %v1096
      %v2309 = vpop.f32.mrb[0].mxu0
      %v2310 = vadd.f32 %v2165, %v2309
      %v2311 = vpop.f32.mrb[0].mxu0
      %2312 = vmatprep.mubr.f32.mxu0 %v1114
      %2313 = vmatmul.mubr.f32.gmra.mrb[0].mxu0 %v1113
      %v2314 = vpop.f32.mrb[0].mxu0
      %v2315 = vadd.f32 %v2170, %v2314
      %v2316 = vpop.f32.mrb[0].mxu0
      %2317 = vmatprep.mubr.f32.mxu0 %v1131
      %2318 = vmatmul.mubr.f32.gmra.mrb[0].mxu0 %v1130
      %v2319 = vpop.f32.mrb[0].mxu0
      %v2320 = vadd.f32 %v2175, %v2319
      %v2321 = vpop.f32.mrb[0].mxu0
      %2322 = vmatprep.mubr.f32.mxu0 %v1148
      %2323 = vmatmul.mubr.f32.gmra.mrb[0].mxu0 %v1147
      %v2324 = vpop.f32.mrb[0].mxu0
      %v2325 = vadd.f32 %v2180, %v2324
      %v2326 = vpop.f32.mrb[0].mxu0
      %2327 = vmatprep.mubr.f32.mxu0 %v1165
      %2328 = vmatmul.mubr.f32.gmra.mrb[0].mxu0 %v1164
      %v2329 = vpop.f32.mrb[0].mxu0
      %v2330 = vadd.f32 %v2185, %v2329
      %v2331 = vpop.f32.mrb[0].mxu0
      %2332 = vmatprep.mubr.f32.mxu0 %v1182
      %2333 = vmatmul.mubr.f32.gmra.mrb[0].mxu0 %v1181
      %v2334 = vpop.f32.mrb[0].mxu0
      %v2335 = vadd.f32 %v2190, %v2334
      %v2336 = vpop.f32.mrb[0].mxu0
      %2337 = vmatprep.mubr.f32.mxu0 %v1199
      %2338 = vmatmul.mubr.f32.gmra.mrb[0].mxu0 %v1198
      %v2339 = vpop.f32.mrb[0].mxu0
      %v2340 = vadd.f32 %v2195, %v2339
      %v2341 = vpop.f32.mrb[0].mxu0
      %2342 = vmatprep.mubr.f32.mxu0 %v1216
      %2343 = vmatmul.mubr.f32.gmra.mrb[0].mxu0 %v1215
      %v2344 = vpop.f32.mrb[0].mxu0
      %v2345 = vadd.f32 %v2200, %v2344
      %v2346 = vpop.f32.mrb[0].mxu0
      %2347 = vmatprep.mubr.f32.mxu0 %v1233
      %2348 = vmatmul.mubr.f32.gmra.mrb[0].mxu0 %v1232
      %v2349 = vpop.f32.mrb[0].mxu0
      %v2350 = vadd.f32 %v2205, %v2349
      %v2351 = vpop.f32.mrb[0].mxu0
      %2352 = vmatprep.mubr.f32.mxu0 %v1250
      %2353 = vmatmul.mubr.f32.gmra.mrb[0].mxu0 %v1249
      %v2354 = vpop.f32.mrb[0].mxu0
      %v2355 = vadd.f32 %v2210, %v2354
      %v2356 = vpop.f32.mrb[0].mxu0
      %2357 = vdwg.mxu0
      %2358 = vmatprep.subr.mxu0 0.0
      %2359 = vmatpush1.msra.mxu0 %v1593
      %2360 = vmatprep.subr.mxu0 0.0
      %2361 = vmatpush1.msra.mxu0 %v1594
      %2362 = vmatprep.subr.mxu0 0.0
      %2363 = vmatpush1.msra.mxu0 %v1595
      %2364 = vmatprep.subr.mxu0 0.0
      %2365 = vmatpush1.msra.mxu0 %v1596
      %2366 = vmatprep.subr.mxu0 0.0
      %2367 = vmatpush1.msra.mxu0 %v1597
      %2368 = vmatprep.subr.mxu0 0.0
      %2369 = vmatpush1.msra.mxu0 %v1598
      %2370 = vmatprep.subr.mxu0 0.0
      %2371 = vmatpush1.msra.mxu0 %v1599
      %2372 = vmatprep.subr.mxu0 0.0
      %2373 = vmatpush1.msra.mxu0 %v1600
      %2374 = vmatprep.subr.mxu0 0.0
      %2375 = vmatpush1.msra.mxu0 %v1601
      %2376 = vmatprep.subr.mxu0 0.0
      %2377 = vmatpush1.msra.mxu0 %v1602
      %2378 = vmatprep.subr.mxu0 0.0
      %2379 = vmatpush1.msra.mxu0 %v1603
      %2380 = vmatprep.subr.mxu0 0.0
      %2381 = vmatpush1.msra.mxu0 %v1604
      %2382 = vmatprep.subr.mxu0 0.0
      %2383 = vmatpush1.msra.mxu0 %v1605
      %2384 = vmatprep.subr.mxu0 0.0
      %2385 = vmatpush1.msra.mxu0 %v1606
      %2386 = vmatprep.subr.mxu0 0.0
      %2387 = vmatpush1.msra.mxu0 %v1607
      %2388 = vmatprep.subr.mxu0 0.0
      %2389 = vmatpush1.msra.mxu0 %v1608
      %2390 = vmatprep.subr.mxu0 0.0
      %2391 = vmatpush1.msra.mxu0 %v1609
      %2392 = vmatprep.subr.mxu0 0.0
      %2393 = vmatpush1.msra.mxu0 %v1610
      %2394 = vmatprep.subr.mxu0 0.0
      %2395 = vmatpush1.msra.mxu0 %v1611
      %2396 = vmatprep.subr.mxu0 0.0
      %2397 = vmatpush1.msra.mxu0 %v1612
      %2398 = vmatprep.subr.mxu0 0.0
      %2399 = vmatpush1.msra.mxu0 %v1613
      %2400 = vmatprep.subr.mxu0 0.0
      %2401 = vmatpush1.msra.mxu0 %v1614
      %2402 = vmatprep.subr.mxu0 0.0
      %2403 = vmatpush1.msra.mxu0 %v1615
      %2404 = vmatprep.subr.mxu0 0.0
      %2405 = vmatpush1.msra.mxu0 %v1616
      %2406 = vmatprep.subr.mxu0 0.0
      %2407 = vmatpush1.msra.mxu0 %v1617
      %2408 = vmatprep.subr.mxu0 0.0
      %2409 = vmatpush1.msra.mxu0 %v1618
      %2410 = vmatprep.subr.mxu0 0.0
      %2411 = vmatpush1.msra.mxu0 %v1619
      %2412 = vmatprep.subr.mxu0 0.0
      %2413 = vmatpush1.msra.mxu0 %v1620
      %2414 = vmatprep.subr.mxu0 0.0
      %2415 = vmatpush1.msra.mxu0 %v1621
      %2416 = vmatprep.subr.mxu0 0.0
      %2417 = vmatpush1.msra.mxu0 %v1622
      %2418 = vmatprep.subr.mxu0 0.0
      %2419 = vmatpush1.msra.mxu0 %v1623
      %2420 = vmatprep.subr.mxu0 0.0
      %2421 = vmatpush1.msra.mxu0 %v1624
      %2422 = vmatprep.mubr.f32.mxu0 %v997
      %2423 = vmatmul.mubr.f32.gmra.mrb[0].mxu0 %v996
      %v2424 = vpop.f32.mrb[0].mxu0
      %v2425 = vadd.f32 %v2280, %v2424
      %v2426 = vpop.f32.mrb[0].mxu0
      %2427 = vmatprep.mubr.f32.mxu0 %v1014
      %2428 = vmatmul.mubr.f32.gmra.mrb[0].mxu0 %v1013
      %v2429 = vpop.f32.mrb[0].mxu0
      %v2430 = vadd.f32 %v2285, %v2429
      %v2431 = vpop.f32.mrb[0].mxu0
      %2432 = vmatprep.mubr.f32.mxu0 %v1031
      %2433 = vmatmul.mubr.f32.gmra.mrb[0].mxu0 %v1030
      %v2434 = vpop.f32.mrb[0].mxu0
      %v2435 = vadd.f32 %v2290, %v2434
      %v2436 = vpop.f32.mrb[0].mxu0
      %2437 = vmatprep.mubr.f32.mxu0 %v1048
      %2438 = vmatmul.mubr.f32.gmra.mrb[0].mxu0 %v1047
      %v2439 = vpop.f32.mrb[0].mxu0
      %v2440 = vadd.f32 %v2295, %v2439
      %v2441 = vpop.f32.mrb[0].mxu0
      %2442 = vmatprep.mubr.f32.mxu0 %v1065
      %2443 = vmatmul.mubr.f32.gmra.mrb[0].mxu0 %v1064
      %v2444 = vpop.f32.mrb[0].mxu0
      %v2445 = vadd.f32 %v2300, %v2444
      %v2446 = vpop.f32.mrb[0].mxu0
      %2447 = vmatprep.mubr.f32.mxu0 %v1082
      %2448 = vmatmul.mubr.f32.gmra.mrb[0].mxu0 %v1081
      %v2449 = vpop.f32.mrb[0].mxu0
      %v2450 = vadd.f32 %v2305, %v2449
      %v2451 = vpop.f32.mrb[0].mxu0
      %2452 = vmatprep.mubr.f32.mxu0 %v1099
      %2453 = vmatmul.mubr.f32.gmra.mrb[0].mxu0 %v1098
      %v2454 = vpop.f32.mrb[0].mxu0
      %v2455 = vadd.f32 %v2310, %v2454
      %v2456 = vpop.f32.mrb[0].mxu0
      %2457 = vmatprep.mubr.f32.mxu0 %v1116
      %2458 = vmatmul.mubr.f32.gmra.mrb[0].mxu0 %v1115
      %v2459 = vpop.f32.mrb[0].mxu0
      %v2460 = vadd.f32 %v2315, %v2459
      %v2461 = vpop.f32.mrb[0].mxu0
      %2462 = vmatprep.mubr.f32.mxu0 %v1133
      %2463 = vmatmul.mubr.f32.gmra.mrb[0].mxu0 %v1132
      %v2464 = vpop.f32.mrb[0].mxu0
      %v2465 = vadd.f32 %v2320, %v2464
      %v2466 = vpop.f32.mrb[0].mxu0
      %2467 = vmatprep.mubr.f32.mxu0 %v1150
      %2468 = vmatmul.mubr.f32.gmra.mrb[0].mxu0 %v1149
      %v2469 = vpop.f32.mrb[0].mxu0
      %v2470 = vadd.f32 %v2325, %v2469
      %v2471 = vpop.f32.mrb[0].mxu0
      %2472 = vmatprep.mubr.f32.mxu0 %v1167
      %2473 = vmatmul.mubr.f32.gmra.mrb[0].mxu0 %v1166
      %v2474 = vpop.f32.mrb[0].mxu0
      %v2475 = vadd.f32 %v2330, %v2474
      %v2476 = vpop.f32.mrb[0].mxu0
      %2477 = vmatprep.mubr.f32.mxu0 %v1184
      %2478 = vmatmul.mubr.f32.gmra.mrb[0].mxu0 %v1183
      %v2479 = vpop.f32.mrb[0].mxu0
      %v2480 = vadd.f32 %v2335, %v2479
      %v2481 = vpop.f32.mrb[0].mxu0
      %2482 = vmatprep.mubr.f32.mxu0 %v1201
      %2483 = vmatmul.mubr.f32.gmra.mrb[0].mxu0 %v1200
      %v2484 = vpop.f32.mrb[0].mxu0
      %v2485 = vadd.f32 %v2340, %v2484
      %v2486 = vpop.f32.mrb[0].mxu0
      %2487 = vmatprep.mubr.f32.mxu0 %v1218
      %2488 = vmatmul.mubr.f32.gmra.mrb[0].mxu0 %v1217
      %v2489 = vpop.f32.mrb[0].mxu0
      %v2490 = vadd.f32 %v2345, %v2489
      %v2491 = vpop.f32.mrb[0].mxu0
      %2492 = vmatprep.mubr.f32.mxu0 %v1235
      %2493 = vmatmul.mubr.f32.gmra.mrb[0].mxu0 %v1234
      %v2494 = vpop.f32.mrb[0].mxu0
      %v2495 = vadd.f32 %v2350, %v2494
      %v2496 = vpop.f32.mrb[0].mxu0
      %2497 = vmatprep.mubr.f32.mxu0 %v1252
      %2498 = vmatmul.mubr.f32.gmra.mrb[0].mxu0 %v1251
      %v2499 = vpop.f32.mrb[0].mxu0
      %v2500 = vadd.f32 %v2355, %v2499
      %v2501 = vpop.f32.mrb[0].mxu0
      %2502 = vdwg.mxu0
      %2503 = vmatprep.subr.mxu0 0.0
      %2504 = vmatpush1.msra.mxu0 %v1625
      %2505 = vmatprep.subr.mxu0 0.0
      %2506 = vmatpush1.msra.mxu0 %v1626
      %2507 = vmatprep.subr.mxu0 0.0
      %2508 = vmatpush1.msra.mxu0 %v1627
      %2509 = vmatprep.subr.mxu0 0.0
      %2510 = vmatpush1.msra.mxu0 %v1628
      %2511 = vmatprep.subr.mxu0 0.0
      %2512 = vmatpush1.msra.mxu0 %v1629
      %2513 = vmatprep.subr.mxu0 0.0
      %2514 = vmatpush1.msra.mxu0 %v1630
      %2515 = vmatprep.subr.mxu0 0.0
      %2516 = vmatpush1.msra.mxu0 %v1631
      %2517 = vmatprep.subr.mxu0 0.0
      %2518 = vmatpush1.msra.mxu0 %v1632
      %2519 = vmatprep.subr.mxu0 0.0
      %2520 = vmatpush1.msra.mxu0 %v1633
      %2521 = vmatprep.subr.mxu0 0.0
      %2522 = vmatpush1.msra.mxu0 %v1634
      %2523 = vmatprep.subr.mxu0 0.0
      %2524 = vmatpush1.msra.mxu0 %v1635
      %2525 = vmatprep.subr.mxu0 0.0
      %2526 = vmatpush1.msra.mxu0 %v1636
      %2527 = vmatprep.subr.mxu0 0.0
      %2528 = vmatpush1.msra.mxu0 %v1637
      %2529 = vmatprep.subr.mxu0 0.0
      %2530 = vmatpush1.msra.mxu0 %v1638
      %2531 = vmatprep.subr.mxu0 0.0
      %2532 = vmatpush1.msra.mxu0 %v1639
      %2533 = vmatprep.subr.mxu0 0.0
      %2534 = vmatpush1.msra.mxu0 %v1640
      %2535 = vmatprep.subr.mxu0 0.0
      %2536 = vmatpush1.msra.mxu0 %v1641
      %2537 = vmatprep.subr.mxu0 0.0
      %2538 = vmatpush1.msra.mxu0 %v1642
      %2539 = vmatprep.subr.mxu0 0.0
      %2540 = vmatpush1.msra.mxu0 %v1643
      %2541 = vmatprep.subr.mxu0 0.0
      %2542 = vmatpush1.msra.mxu0 %v1644
      %2543 = vmatprep.subr.mxu0 0.0
      %2544 = vmatpush1.msra.mxu0 %v1645
      %2545 = vmatprep.subr.mxu0 0.0
      %2546 = vmatpush1.msra.mxu0 %v1646
      %2547 = vmatprep.subr.mxu0 0.0
      %2548 = vmatpush1.msra.mxu0 %v1647
      %2549 = vmatprep.subr.mxu0 0.0
      %2550 = vmatpush1.msra.mxu0 %v1648
      %2551 = vmatprep.subr.mxu0 0.0
      %2552 = vmatpush1.msra.mxu0 %v1649
      %2553 = vmatprep.subr.mxu0 0.0
      %2554 = vmatpush1.msra.mxu0 %v1650
      %2555 = vmatprep.subr.mxu0 0.0
      %2556 = vmatpush1.msra.mxu0 %v1651
      %2557 = vmatprep.subr.mxu0 0.0
      %2558 = vmatpush1.msra.mxu0 %v1652
      %2559 = vmatprep.subr.mxu0 0.0
      %2560 = vmatpush1.msra.mxu0 %v1653
      %2561 = vmatprep.subr.mxu0 0.0
      %2562 = vmatpush1.msra.mxu0 %v1654
      %2563 = vmatprep.subr.mxu0 0.0
      %2564 = vmatpush1.msra.mxu0 %v1655
      %2565 = vmatprep.subr.mxu0 0.0
      %2566 = vmatpush1.msra.mxu0 %v1656
      %2567 = vmatprep.mubr.f32.mxu0 %v999
      %2568 = vmatmul.mubr.f32.gmra.mrb[0].mxu0 %v998
      %v2569 = vpop.f32.mrb[0].mxu0
      %v2570 = vadd.f32 %v2425, %v2569
      %v2571 = vpop.f32.mrb[0].mxu0
      %2572 = vmatprep.mubr.f32.mxu0 %v1016
      %2573 = vmatmul.mubr.f32.gmra.mrb[0].mxu0 %v1015
      %v2574 = vpop.f32.mrb[0].mxu0
      %v2575 = vadd.f32 %v2430, %v2574
      %v2576 = vpop.f32.mrb[0].mxu0
      %2577 = vmatprep.mubr.f32.mxu0 %v1033
      %2578 = vmatmul.mubr.f32.gmra.mrb[0].mxu0 %v1032
      %v2579 = vpop.f32.mrb[0].mxu0
      %v2580 = vadd.f32 %v2435, %v2579
      %v2581 = vpop.f32.mrb[0].mxu0
      %2582 = vmatprep.mubr.f32.mxu0 %v1050
      %2583 = vmatmul.mubr.f32.gmra.mrb[0].mxu0 %v1049
      %v2584 = vpop.f32.mrb[0].mxu0
      %v2585 = vadd.f32 %v2440, %v2584
      %v2586 = vpop.f32.mrb[0].mxu0
      %2587 = vmatprep.mubr.f32.mxu0 %v1067
      %2588 = vmatmul.mubr.f32.gmra.mrb[0].mxu0 %v1066
      %v2589 = vpop.f32.mrb[0].mxu0
      %v2590 = vadd.f32 %v2445, %v2589
      %v2591 = vpop.f32.mrb[0].mxu0
      %2592 = vmatprep.mubr.f32.mxu0 %v1084
      %2593 = vmatmul.mubr.f32.gmra.mrb[0].mxu0 %v1083
      %v2594 = vpop.f32.mrb[0].mxu0
      %v2595 = vadd.f32 %v2450, %v2594
      %v2596 = vpop.f32.mrb[0].mxu0
      %2597 = vmatprep.mubr.f32.mxu0 %v1101
      %2598 = vmatmul.mubr.f32.gmra.mrb[0].mxu0 %v1100
      %v2599 = vpop.f32.mrb[0].mxu0
      %v2600 = vadd.f32 %v2455, %v2599
      %v2601 = vpop.f32.mrb[0].mxu0
      %2602 = vmatprep.mubr.f32.mxu0 %v1118
      %2603 = vmatmul.mubr.f32.gmra.mrb[0].mxu0 %v1117
      %v2604 = vpop.f32.mrb[0].mxu0
      %v2605 = vadd.f32 %v2460, %v2604
      %v2606 = vpop.f32.mrb[0].mxu0
      %2607 = vmatprep.mubr.f32.mxu0 %v1135
      %2608 = vmatmul.mubr.f32.gmra.mrb[0].mxu0 %v1134
      %v2609 = vpop.f32.mrb[0].mxu0
      %v2610 = vadd.f32 %v2465, %v2609
      %v2611 = vpop.f32.mrb[0].mxu0
      %2612 = vmatprep.mubr.f32.mxu0 %v1152
      %2613 = vmatmul.mubr.f32.gmra.mrb[0].mxu0 %v1151
      %v2614 = vpop.f32.mrb[0].mxu0
      %v2615 = vadd.f32 %v2470, %v2614
      %v2616 = vpop.f32.mrb[0].mxu0
      %2617 = vmatprep.mubr.f32.mxu0 %v1169
      %2618 = vmatmul.mubr.f32.gmra.mrb[0].mxu0 %v1168
      %v2619 = vpop.f32.mrb[0].mxu0
      %v2620 = vadd.f32 %v2475, %v2619
      %v2621 = vpop.f32.mrb[0].mxu0
      %2622 = vmatprep.mubr.f32.mxu0 %v1186
      %2623 = vmatmul.mubr.f32.gmra.mrb[0].mxu0 %v1185
      %v2624 = vpop.f32.mrb[0].mxu0
      %v2625 = vadd.f32 %v2480, %v2624
      %v2626 = vpop.f32.mrb[0].mxu0
      %2627 = vmatprep.mubr.f32.mxu0 %v1203
      %2628 = vmatmul.mubr.f32.gmra.mrb[0].mxu0 %v1202
      %v2629 = vpop.f32.mrb[0].mxu0
      %v2630 = vadd.f32 %v2485, %v2629
      %v2631 = vpop.f32.mrb[0].mxu0
      %2632 = vmatprep.mubr.f32.mxu0 %v1220
      %2633 = vmatmul.mubr.f32.gmra.mrb[0].mxu0 %v1219
      %v2634 = vpop.f32.mrb[0].mxu0
      %v2635 = vadd.f32 %v2490, %v2634
      %v2636 = vpop.f32.mrb[0].mxu0
      %2637 = vmatprep.mubr.f32.mxu0 %v1237
      %2638 = vmatmul.mubr.f32.gmra.mrb[0].mxu0 %v1236
      %v2639 = vpop.f32.mrb[0].mxu0
      %v2640 = vadd.f32 %v2495, %v2639
      %v2641 = vpop.f32.mrb[0].mxu0
      %2642 = vmatprep.mubr.f32.mxu0 %v1254
      %2643 = vmatmul.mubr.f32.gmra.mrb[0].mxu0 %v1253
      %v2644 = vpop.f32.mrb[0].mxu0
      %v2645 = vadd.f32 %v2500, %v2644
      %v2646 = vpop.f32.mrb[0].mxu0
      %2647 = vdwg.mxu0
      %2648 = vmatprep.subr.mxu0 0.0
      %2649 = vmatpush1.msra.mxu0 %v1657
      %2650 = vmatprep.subr.mxu0 0.0
      %2651 = vmatpush1.msra.mxu0 %v1658
      %2652 = vmatprep.subr.mxu0 0.0
      %2653 = vmatpush1.msra.mxu0 %v1659
      %2654 = vmatprep.subr.mxu0 0.0
      %2655 = vmatpush1.msra.mxu0 %v1660
      %2656 = vmatprep.subr.mxu0 0.0
      %2657 = vmatpush1.msra.mxu0 %v1661
      %2658 = vmatprep.subr.mxu0 0.0
      %2659 = vmatpush1.msra.mxu0 %v1662
      %2660 = vmatprep.subr.mxu0 0.0
      %2661 = vmatpush1.msra.mxu0 %v1663
      %2662 = vmatprep.subr.mxu0 0.0
      %2663 = vmatpush1.msra.mxu0 %v1664
      %2664 = vmatprep.subr.mxu0 0.0
      %2665 = vmatpush1.msra.mxu0 %v1665
      %2666 = vmatprep.subr.mxu0 0.0
      %2667 = vmatpush1.msra.mxu0 %v1666
      %2668 = vmatprep.subr.mxu0 0.0
      %2669 = vmatpush1.msra.mxu0 %v1667
      %2670 = vmatprep.subr.mxu0 0.0
      %2671 = vmatpush1.msra.mxu0 %v1668
      %2672 = vmatprep.subr.mxu0 0.0
      %2673 = vmatpush1.msra.mxu0 %v1669
      %2674 = vmatprep.subr.mxu0 0.0
      %2675 = vmatpush1.msra.mxu0 %v1670
      %2676 = vmatprep.subr.mxu0 0.0
      %2677 = vmatpush1.msra.mxu0 %v1671
      %2678 = vmatprep.subr.mxu0 0.0
      %2679 = vmatpush1.msra.mxu0 %v1672
      %2680 = vmatprep.subr.mxu0 0.0
      %2681 = vmatpush1.msra.mxu0 %v1673
      %2682 = vmatprep.subr.mxu0 0.0
      %2683 = vmatpush1.msra.mxu0 %v1674
      %2684 = vmatprep.subr.mxu0 0.0
      %2685 = vmatpush1.msra.mxu0 %v1675
      %2686 = vmatprep.subr.mxu0 0.0
      %2687 = vmatpush1.msra.mxu0 %v1676
      %2688 = vmatprep.subr.mxu0 0.0
      %2689 = vmatpush1.msra.mxu0 %v1677
      %2690 = vmatprep.subr.mxu0 0.0
      %2691 = vmatpush1.msra.mxu0 %v1678
      %2692 = vmatprep.subr.mxu0 0.0
      %2693 = vmatpush1.msra.mxu0 %v1679
      %2694 = vmatprep.subr.mxu0 0.0
      %2695 = vmatpush1.msra.mxu0 %v1680
      %2696 = vmatprep.subr.mxu0 0.0
      %2697 = vmatpush1.msra.mxu0 %v1681
      %2698 = vmatprep.subr.mxu0 0.0
      %2699 = vmatpush1.msra.mxu0 %v1682
      %2700 = vmatprep.subr.mxu0 0.0
      %2701 = vmatpush1.msra.mxu0 %v1683
      %2702 = vmatprep.subr.mxu0 0.0
      %2703 = vmatpush1.msra.mxu0 %v1684
      %2704 = vmatprep.subr.mxu0 0.0
      %2705 = vmatpush1.msra.mxu0 %v1685
      %2706 = vmatprep.subr.mxu0 0.0
      %2707 = vmatpush1.msra.mxu0 %v1686
      %2708 = vmatprep.subr.mxu0 0.0
      %2709 = vmatpush1.msra.mxu0 %v1687
      %2710 = vmatprep.subr.mxu0 0.0
      %2711 = vmatpush1.msra.mxu0 %v1688
      %2712 = vmatprep.mubr.f32.mxu0 %v1001
      %2713 = vmatmul.mubr.f32.gmra.mrb[0].mxu0 %v1000
      %v2714 = vpop.f32.mrb[0].mxu0
      %v2715 = vadd.f32 %v2570, %v2714
      %v2716 = vpop.f32.mrb[0].mxu0
      %2717 = vmatprep.mubr.f32.mxu0 %v1018
      %2718 = vmatmul.mubr.f32.gmra.mrb[0].mxu0 %v1017
      %v2719 = vpop.f32.mrb[0].mxu0
      %v2720 = vadd.f32 %v2575, %v2719
      %v2721 = vpop.f32.mrb[0].mxu0
      %2722 = vmatprep.mubr.f32.mxu0 %v1035
      %2723 = vmatmul.mubr.f32.gmra.mrb[0].mxu0 %v1034
      %v2724 = vpop.f32.mrb[0].mxu0
      %v2725 = vadd.f32 %v2580, %v2724
      %v2726 = vpop.f32.mrb[0].mxu0
      %2727 = vmatprep.mubr.f32.mxu0 %v1052
      %2728 = vmatmul.mubr.f32.gmra.mrb[0].mxu0 %v1051
      %v2729 = vpop.f32.mrb[0].mxu0
      %v2730 = vadd.f32 %v2585, %v2729
      %v2731 = vpop.f32.mrb[0].mxu0
      %2732 = vmatprep.mubr.f32.mxu0 %v1069
      %2733 = vmatmul.mubr.f32.gmra.mrb[0].mxu0 %v1068
      %v2734 = vpop.f32.mrb[0].mxu0
      %v2735 = vadd.f32 %v2590, %v2734
      %v2736 = vpop.f32.mrb[0].mxu0
      %2737 = vmatprep.mubr.f32.mxu0 %v1086
      %2738 = vmatmul.mubr.f32.gmra.mrb[0].mxu0 %v1085
      %v2739 = vpop.f32.mrb[0].mxu0
      %v2740 = vadd.f32 %v2595, %v2739
      %v2741 = vpop.f32.mrb[0].mxu0
      %2742 = vmatprep.mubr.f32.mxu0 %v1103
      %2743 = vmatmul.mubr.f32.gmra.mrb[0].mxu0 %v1102
      %v2744 = vpop.f32.mrb[0].mxu0
      %v2745 = vadd.f32 %v2600, %v2744
      %v2746 = vpop.f32.mrb[0].mxu0
      %2747 = vmatprep.mubr.f32.mxu0 %v1120
      %2748 = vmatmul.mubr.f32.gmra.mrb[0].mxu0 %v1119
      %v2749 = vpop.f32.mrb[0].mxu0
      %v2750 = vadd.f32 %v2605, %v2749
      %v2751 = vpop.f32.mrb[0].mxu0
      %2752 = vmatprep.mubr.f32.mxu0 %v1137
      %2753 = vmatmul.mubr.f32.gmra.mrb[0].mxu0 %v1136
      %v2754 = vpop.f32.mrb[0].mxu0
      %v2755 = vadd.f32 %v2610, %v2754
      %v2756 = vpop.f32.mrb[0].mxu0
      %2757 = vmatprep.mubr.f32.mxu0 %v1154
      %2758 = vmatmul.mubr.f32.gmra.mrb[0].mxu0 %v1153
      %v2759 = vpop.f32.mrb[0].mxu0
      %v2760 = vadd.f32 %v2615, %v2759
      %v2761 = vpop.f32.mrb[0].mxu0
      %2762 = vmatprep.mubr.f32.mxu0 %v1171
      %2763 = vmatmul.mubr.f32.gmra.mrb[0].mxu0 %v1170
      %v2764 = vpop.f32.mrb[0].mxu0
      %v2765 = vadd.f32 %v2620, %v2764
      %v2766 = vpop.f32.mrb[0].mxu0
      %2767 = vmatprep.mubr.f32.mxu0 %v1188
      %2768 = vmatmul.mubr.f32.gmra.mrb[0].mxu0 %v1187
      %v2769 = vpop.f32.mrb[0].mxu0
      %v2770 = vadd.f32 %v2625, %v2769
      %v2771 = vpop.f32.mrb[0].mxu0
      %2772 = vmatprep.mubr.f32.mxu0 %v1205
      %2773 = vmatmul.mubr.f32.gmra.mrb[0].mxu0 %v1204
      %v2774 = vpop.f32.mrb[0].mxu0
      %v2775 = vadd.f32 %v2630, %v2774
      %v2776 = vpop.f32.mrb[0].mxu0
      %2777 = vmatprep.mubr.f32.mxu0 %v1222
      %2778 = vmatmul.mubr.f32.gmra.mrb[0].mxu0 %v1221
      %v2779 = vpop.f32.mrb[0].mxu0
      %v2780 = vadd.f32 %v2635, %v2779
      %v2781 = vpop.f32.mrb[0].mxu0
      %2782 = vmatprep.mubr.f32.mxu0 %v1239
      %2783 = vmatmul.mubr.f32.gmra.mrb[0].mxu0 %v1238
      %v2784 = vpop.f32.mrb[0].mxu0
      %v2785 = vadd.f32 %v2640, %v2784
      %v2786 = vpop.f32.mrb[0].mxu0
      %2787 = vmatprep.mubr.f32.mxu0 %v1256
      %2788 = vmatmul.mubr.f32.gmra.mrb[0].mxu0 %v1255
      %v2789 = vpop.f32.mrb[0].mxu0
      %v2790 = vadd.f32 %v2645, %v2789
      %v2791 = vpop.f32.mrb[0].mxu0
      %2792 = vdwg.mxu0
      %2793 = vmatprep.subr.mxu0 0.0
      %2794 = vmatpush1.msra.mxu0 %v1689
      %2795 = vmatprep.subr.mxu0 0.0
      %2796 = vmatpush1.msra.mxu0 %v1690
      %2797 = vmatprep.subr.mxu0 0.0
      %2798 = vmatpush1.msra.mxu0 %v1691
      %2799 = vmatprep.subr.mxu0 0.0
      %2800 = vmatpush1.msra.mxu0 %v1692
      %2801 = vmatprep.subr.mxu0 0.0
      %2802 = vmatpush1.msra.mxu0 %v1693
      %2803 = vmatprep.subr.mxu0 0.0
      %2804 = vmatpush1.msra.mxu0 %v1694
      %2805 = vmatprep.subr.mxu0 0.0
      %2806 = vmatpush1.msra.mxu0 %v1695
      %2807 = vmatprep.subr.mxu0 0.0
      %2808 = vmatpush1.msra.mxu0 %v1696
      %2809 = vmatprep.subr.mxu0 0.0
      %2810 = vmatpush1.msra.mxu0 %v1697
      %2811 = vmatprep.subr.mxu0 0.0
      %2812 = vmatpush1.msra.mxu0 %v1698
      %2813 = vmatprep.subr.mxu0 0.0
      %2814 = vmatpush1.msra.mxu0 %v1699
      %2815 = vmatprep.subr.mxu0 0.0
      %2816 = vmatpush1.msra.mxu0 %v1700
      %2817 = vmatprep.subr.mxu0 0.0
      %2818 = vmatpush1.msra.mxu0 %v1701
      %2819 = vmatprep.subr.mxu0 0.0
      %2820 = vmatpush1.msra.mxu0 %v1702
      %2821 = vmatprep.subr.mxu0 0.0
      %2822 = vmatpush1.msra.mxu0 %v1703
      %2823 = vmatprep.subr.mxu0 0.0
      %2824 = vmatpush1.msra.mxu0 %v1704
      %2825 = vmatprep.subr.mxu0 0.0
      %2826 = vmatpush1.msra.mxu0 %v1705
      %2827 = vmatprep.subr.mxu0 0.0
      %2828 = vmatpush1.msra.mxu0 %v1706
      %2829 = vmatprep.subr.mxu0 0.0
      %2830 = vmatpush1.msra.mxu0 %v1707
      %2831 = vmatprep.subr.mxu0 0.0
      %2832 = vmatpush1.msra.mxu0 %v1708
      %2833 = vmatprep.subr.mxu0 0.0
      %2834 = vmatpush1.msra.mxu0 %v1709
      %2835 = vmatprep.subr.mxu0 0.0
      %2836 = vmatpush1.msra.mxu0 %v1710
      %2837 = vmatprep.subr.mxu0 0.0
      %2838 = vmatpush1.msra.mxu0 %v1711
      %2839 = vmatprep.subr.mxu0 0.0
      %2840 = vmatpush1.msra.mxu0 %v1712
      %2841 = vmatprep.subr.mxu0 0.0
      %2842 = vmatpush1.msra.mxu0 %v1713
      %2843 = vmatprep.subr.mxu0 0.0
      %2844 = vmatpush1.msra.mxu0 %v1714
      %2845 = vmatprep.subr.mxu0 0.0
      %2846 = vmatpush1.msra.mxu0 %v1715
      %2847 = vmatprep.subr.mxu0 0.0
      %2848 = vmatpush1.msra.mxu0 %v1716
      %2849 = vmatprep.subr.mxu0 0.0
      %2850 = vmatpush1.msra.mxu0 %v1717
      %2851 = vmatprep.subr.mxu0 0.0
      %2852 = vmatpush1.msra.mxu0 %v1718
      %2853 = vmatprep.subr.mxu0 0.0
      %2854 = vmatpush1.msra.mxu0 %v1719
      %2855 = vmatprep.subr.mxu0 0.0
      %2856 = vmatpush1.msra.mxu0 %v1720
      %2857 = vmatprep.mubr.f32.mxu0 %v1003
      %2858 = vmatmul.mubr.f32.gmra.mrb[0].mxu0 %v1002
      %v2859 = vpop.f32.mrb[0].mxu0
      %v2860 = vadd.f32 %v2715, %v2859
      %v2861 = vpop.f32.mrb[0].mxu0
      %2862 = vmatprep.mubr.f32.mxu0 %v1020
      %2863 = vmatmul.mubr.f32.gmra.mrb[0].mxu0 %v1019
      %v2864 = vpop.f32.mrb[0].mxu0
      %v2865 = vadd.f32 %v2720, %v2864
      %v2866 = vpop.f32.mrb[0].mxu0
      %2867 = vmatprep.mubr.f32.mxu0 %v1037
      %2868 = vmatmul.mubr.f32.gmra.mrb[0].mxu0 %v1036
      %v2869 = vpop.f32.mrb[0].mxu0
      %v2870 = vadd.f32 %v2725, %v2869
      %v2871 = vpop.f32.mrb[0].mxu0
      %2872 = vmatprep.mubr.f32.mxu0 %v1054
      %2873 = vmatmul.mubr.f32.gmra.mrb[0].mxu0 %v1053
      %v2874 = vpop.f32.mrb[0].mxu0
      %v2875 = vadd.f32 %v2730, %v2874
      %v2876 = vpop.f32.mrb[0].mxu0
      %2877 = vmatprep.mubr.f32.mxu0 %v1071
      %2878 = vmatmul.mubr.f32.gmra.mrb[0].mxu0 %v1070
      %v2879 = vpop.f32.mrb[0].mxu0
      %v2880 = vadd.f32 %v2735, %v2879
      %v2881 = vpop.f32.mrb[0].mxu0
      %2882 = vmatprep.mubr.f32.mxu0 %v1088
      %2883 = vmatmul.mubr.f32.gmra.mrb[0].mxu0 %v1087
      %v2884 = vpop.f32.mrb[0].mxu0
      %v2885 = vadd.f32 %v2740, %v2884
      %v2886 = vpop.f32.mrb[0].mxu0
      %2887 = vmatprep.mubr.f32.mxu0 %v1105
      %2888 = vmatmul.mubr.f32.gmra.mrb[0].mxu0 %v1104
      %v2889 = vpop.f32.mrb[0].mxu0
      %v2890 = vadd.f32 %v2745, %v2889
      %v2891 = vpop.f32.mrb[0].mxu0
      %2892 = vmatprep.mubr.f32.mxu0 %v1122
      %2893 = vmatmul.mubr.f32.gmra.mrb[0].mxu0 %v1121
      %v2894 = vpop.f32.mrb[0].mxu0
      %v2895 = vadd.f32 %v2750, %v2894
      %v2896 = vpop.f32.mrb[0].mxu0
      %2897 = vmatprep.mubr.f32.mxu0 %v1139
      %2898 = vmatmul.mubr.f32.gmra.mrb[0].mxu0 %v1138
      %v2899 = vpop.f32.mrb[0].mxu0
      %v2900 = vadd.f32 %v2755, %v2899
      %v2901 = vpop.f32.mrb[0].mxu0
      %2902 = vmatprep.mubr.f32.mxu0 %v1156
      %2903 = vmatmul.mubr.f32.gmra.mrb[0].mxu0 %v1155
      %v2904 = vpop.f32.mrb[0].mxu0
      %v2905 = vadd.f32 %v2760, %v2904
      %v2906 = vpop.f32.mrb[0].mxu0
      %2907 = vmatprep.mubr.f32.mxu0 %v1173
      %2908 = vmatmul.mubr.f32.gmra.mrb[0].mxu0 %v1172
      %v2909 = vpop.f32.mrb[0].mxu0
      %v2910 = vadd.f32 %v2765, %v2909
      %v2911 = vpop.f32.mrb[0].mxu0
      %2912 = vmatprep.mubr.f32.mxu0 %v1190
      %2913 = vmatmul.mubr.f32.gmra.mrb[0].mxu0 %v1189
      %v2914 = vpop.f32.mrb[0].mxu0
      %v2915 = vadd.f32 %v2770, %v2914
      %v2916 = vpop.f32.mrb[0].mxu0
      %2917 = vmatprep.mubr.f32.mxu0 %v1207
      %2918 = vmatmul.mubr.f32.gmra.mrb[0].mxu0 %v1206
      %v2919 = vpop.f32.mrb[0].mxu0
      %v2920 = vadd.f32 %v2775, %v2919
      %v2921 = vpop.f32.mrb[0].mxu0
      %2922 = vmatprep.mubr.f32.mxu0 %v1224
      %2923 = vmatmul.mubr.f32.gmra.mrb[0].mxu0 %v1223
      %v2924 = vpop.f32.mrb[0].mxu0
      %v2925 = vadd.f32 %v2780, %v2924
      %v2926 = vpop.f32.mrb[0].mxu0
      %2927 = vmatprep.mubr.f32.mxu0 %v1241
      %2928 = vmatmul.mubr.f32.gmra.mrb[0].mxu0 %v1240
      %v2929 = vpop.f32.mrb[0].mxu0
      %v2930 = vadd.f32 %v2785, %v2929
      %v2931 = vpop.f32.mrb[0].mxu0
      %2932 = vmatprep.mubr.f32.mxu0 %v1258
      %2933 = vmatmul.mubr.f32.gmra.mrb[0].mxu0 %v1257
      %v2934 = vpop.f32.mrb[0].mxu0
      %v2935 = vadd.f32 %v2790, %v2934
      %v2936 = vpop.f32.mrb[0].mxu0
      %2937 = vdwg.mxu0
      %2938 = vmatprep.subr.mxu0 0.0
      %2939 = vmatpush1.msra.mxu0 %v1721
      %2940 = vmatprep.subr.mxu0 0.0
      %2941 = vmatpush1.msra.mxu0 %v1722
      %2942 = vmatprep.subr.mxu0 0.0
      %2943 = vmatpush1.msra.mxu0 %v1723
      %2944 = vmatprep.subr.mxu0 0.0
      %2945 = vmatpush1.msra.mxu0 %v1776
      %2946 = vmatprep.subr.mxu0 0.0
      %2947 = vmatpush1.msra.mxu0 0.0
      %2948 = vmatprep.subr.mxu0 0.0
      %2949 = vmatpush1.msra.mxu0 0.0
      %2950 = vmatprep.subr.mxu0 0.0
      %2951 = vmatpush1.msra.mxu0 0.0
      %2952 = vmatprep.subr.mxu0 0.0
      %2953 = vmatpush1.msra.mxu0 0.0
      %2954 = vmatprep.subr.mxu0 0.0
      %2955 = vmatpush1.msra.mxu0 0.0
      %2956 = vmatprep.subr.mxu0 0.0
      %2957 = vmatpush1.msra.mxu0 0.0
      %2958 = vmatprep.subr.mxu0 0.0
      %2959 = vmatpush1.msra.mxu0 0.0
      %2960 = vmatprep.subr.mxu0 0.0
      %2961 = vmatpush1.msra.mxu0 0.0
      %2962 = vmatprep.subr.mxu0 0.0
      %2963 = vmatpush1.msra.mxu0 0.0
      %2964 = vmatprep.subr.mxu0 0.0
      %2965 = vmatpush1.msra.mxu0 0.0
      %2966 = vmatprep.subr.mxu0 0.0
      %2967 = vmatpush1.msra.mxu0 0.0
      %2968 = vmatprep.subr.mxu0 0.0
      %2969 = vmatpush1.msra.mxu0 0.0
      %2970 = vmatprep.subr.mxu0 0.0
      %2971 = vmatpush1.msra.mxu0 0.0
      %2972 = vmatprep.subr.mxu0 0.0
      %2973 = vmatpush1.msra.mxu0 0.0
      %2974 = vmatprep.subr.mxu0 0.0
      %2975 = vmatpush1.msra.mxu0 0.0
      %2976 = vmatprep.subr.mxu0 0.0
      %2977 = vmatpush1.msra.mxu0 0.0
      %2978 = vmatprep.subr.mxu0 0.0
      %2979 = vmatpush1.msra.mxu0 0.0
      %2980 = vmatprep.subr.mxu0 0.0
      %2981 = vmatpush1.msra.mxu0 0.0
      %2982 = vmatprep.subr.mxu0 0.0
      %2983 = vmatpush1.msra.mxu0 0.0
      %2984 = vmatprep.subr.mxu0 0.0
      %2985 = vmatpush1.msra.mxu0 0.0
      %2986 = vmatprep.subr.mxu0 0.0
      %2987 = vmatpush1.msra.mxu0 0.0
      %2988 = vmatprep.subr.mxu0 0.0
      %2989 = vmatpush1.msra.mxu0 0.0
      %2990 = vmatprep.subr.mxu0 0.0
      %2991 = vmatpush1.msra.mxu0 0.0
      %2992 = vmatprep.subr.mxu0 0.0
      %2993 = vmatpush1.msra.mxu0 0.0
      %2994 = vmatprep.subr.mxu0 0.0
      %2995 = vmatpush1.msra.mxu0 0.0
      %2996 = vmatprep.subr.mxu0 0.0
      %2997 = vmatpush1.msra.mxu0 0.0
      %2998 = vmatprep.subr.mxu0 0.0
      %2999 = vmatpush1.msra.mxu0 0.0
      %3000 = vmatprep.subr.mxu0 0.0
      %3001 = vmatpush1.msra.mxu0 0.0
      %3002 = vmatprep.mubr.f32.mxu0 0.0
      %3003 = vmatmul.mubr.f32.gmra.mrb[0].mxu0 %v1727
      %v3004 = vpop.f32.mrb[0].mxu0
      %v3005 = vadd.f32 %v2860, %v3004
      %v3006 = vpop.f32.mrb[0].mxu0
      %3007 = vmatprep.mubr.f32.mxu0 0.0
      %3008 = vmatmul.mubr.f32.gmra.mrb[0].mxu0 %v1730
      %v3009 = vpop.f32.mrb[0].mxu0
      %v3010 = vadd.f32 %v2865, %v3009
      %v3011 = vpop.f32.mrb[0].mxu0
      %3012 = vmatprep.mubr.f32.mxu0 0.0
      %3013 = vmatmul.mubr.f32.gmra.mrb[0].mxu0 %v1733
      %v3014 = vpop.f32.mrb[0].mxu0
      %v3015 = vadd.f32 %v2870, %v3014
      %v3016 = vpop.f32.mrb[0].mxu0
      %3017 = vmatprep.mubr.f32.mxu0 0.0
      %3018 = vmatmul.mubr.f32.gmra.mrb[0].mxu0 %v1736
      %v3019 = vpop.f32.mrb[0].mxu0
      %v3020 = vadd.f32 %v2875, %v3019
      %v3021 = vpop.f32.mrb[0].mxu0
      %3022 = vmatprep.mubr.f32.mxu0 0.0
      %3023 = vmatmul.mubr.f32.gmra.mrb[0].mxu0 %v1739
      %v3024 = vpop.f32.mrb[0].mxu0
      %v3025 = vadd.f32 %v2880, %v3024
      %v3026 = vpop.f32.mrb[0].mxu0
      %3027 = vmatprep.mubr.f32.mxu0 0.0
      %3028 = vmatmul.mubr.f32.gmra.mrb[0].mxu0 %v1742
      %v3029 = vpop.f32.mrb[0].mxu0
      %v3030 = vadd.f32 %v2885, %v3029
      %v3031 = vpop.f32.mrb[0].mxu0
      %3032 = vmatprep.mubr.f32.mxu0 0.0
      %3033 = vmatmul.mubr.f32.gmra.mrb[0].mxu0 %v1745
      %v3034 = vpop.f32.mrb[0].mxu0
      %v3035 = vadd.f32 %v2890, %v3034
      %v3036 = vpop.f32.mrb[0].mxu0
      %3037 = vmatprep.mubr.f32.mxu0 0.0
      %3038 = vmatmul.mubr.f32.gmra.mrb[0].mxu0 %v1748
      %v3039 = vpop.f32.mrb[0].mxu0
      %v3040 = vadd.f32 %v2895, %v3039
      %v3041 = vpop.f32.mrb[0].mxu0
      %3042 = vmatprep.mubr.f32.mxu0 0.0
      %3043 = vmatmul.mubr.f32.gmra.mrb[0].mxu0 %v1751
      %v3044 = vpop.f32.mrb[0].mxu0
      %v3045 = vadd.f32 %v2900, %v3044
      %v3046 = vpop.f32.mrb[0].mxu0
      %3047 = vmatprep.mubr.f32.mxu0 0.0
      %3048 = vmatmul.mubr.f32.gmra.mrb[0].mxu0 %v1754
      %v3049 = vpop.f32.mrb[0].mxu0
      %v3050 = vadd.f32 %v2905, %v3049
      %v3051 = vpop.f32.mrb[0].mxu0
      %3052 = vmatprep.mubr.f32.mxu0 0.0
      %3053 = vmatmul.mubr.f32.gmra.mrb[0].mxu0 %v1757
      %v3054 = vpop.f32.mrb[0].mxu0
      %v3055 = vadd.f32 %v2910, %v3054
      %v3056 = vpop.f32.mrb[0].mxu0
      %3057 = vmatprep.mubr.f32.mxu0 0.0
      %3058 = vmatmul.mubr.f32.gmra.mrb[0].mxu0 %v1760
      %v3059 = vpop.f32.mrb[0].mxu0
      %v3060 = vadd.f32 %v2915, %v3059
      %v3061 = vpop.f32.mrb[0].mxu0
      %3062 = vmatprep.mubr.f32.mxu0 0.0
      %3063 = vmatmul.mubr.f32.gmra.mrb[0].mxu0 %v1763
      %v3064 = vpop.f32.mrb[0].mxu0
      %v3065 = vadd.f32 %v2920, %v3064
      %v3066 = vpop.f32.mrb[0].mxu0
      %3067 = vmatprep.mubr.f32.mxu0 0.0
      %3068 = vmatmul.mubr.f32.gmra.mrb[0].mxu0 %v1766
      %v3069 = vpop.f32.mrb[0].mxu0
      %v3070 = vadd.f32 %v2925, %v3069
      %v3071 = vpop.f32.mrb[0].mxu0
      %3072 = vmatprep.mubr.f32.mxu0 0.0
      %3073 = vmatmul.mubr.f32.gmra.mrb[0].mxu0 %v1769
      %v3074 = vpop.f32.mrb[0].mxu0
      %v3075 = vadd.f32 %v2930, %v3074
      %v3076 = vpop.f32.mrb[0].mxu0
      %3077 = vmatprep.mubr.f32.mxu0 0.0
      %3078 = vmatmul.mubr.f32.gmra.mrb[0].mxu0 %v1772
      %v3079 = vpop.f32.mrb[0].mxu0
      %v3080 = vadd.f32 %v2935, %v3079
      %v3081 = vpop.f32.mrb[0].mxu0
      %3082 = vdwg.mxu0
      %v3083 = vld [vmem:[%s4] sm:$0xff]
      %v3084 = vld [vmem:[%s4 + $0x8] sm:$0xff]
      %v3085 = vld [vmem:[%s4 + $0x10] sm:$0xff]
      %v3086 = vld [vmem:[%s4 + $0x18] sm:$0xff]
      %v3087 = vld [vmem:[%s4 + $0x20] sm:$0xff]
      %v3088 = vld [vmem:[%s4 + $0x28] sm:$0xff]
      %v3089 = vld [vmem:[%s4 + $0x30] sm:$0x1]
      %v3090 = vld [vmem:[%s4 + $0x31] sm:$0x1]
      %v3091 = vld [vmem:[%s4 + $0x32] sm:$0x1]
      %v3092 = vld [vmem:[%s4 + $0x33] sm:$0x1]
      %v3093 = vld [vmem:[%s4 + $0x34] sm:$0x1]
      %v3094 = vld [vmem:[%s4 + $0x35] sm:$0x1]
      %vm3095 = vcmask 130048
      %v3097 = vsel %vm3095, %v3005, 0
      %v3100 = vsel %vm3095, %v3010, 0
      %v3103 = vsel %vm3095, %v3015, 0
      %v3106 = vsel %vm3095, %v3020, 0
      %v3109 = vsel %vm3095, %v3025, 0
      %v3112 = vsel %vm3095, %v3030, 0
      %v3115 = vsel %vm3095, %v3035, 0
      %v3118 = vsel %vm3095, %v3040, 0
      %v3121 = vsel %vm3095, %v3045, 0
      %v3124 = vsel %vm3095, %v3050, 0
      %v3127 = vsel %vm3095, %v3055, 0
      %v3130 = vsel %vm3095, %v3060, 0
      %v3133 = vsel %vm3095, %v3065, 0
      %v3136 = vsel %vm3095, %v3070, 0
      %v3139 = vsel %vm3095, %v3075, 0
      %v3142 = vsel %vm3095, %v3080, 0
      %3144 = vmatprep.subr.mxu0 0.0
      %3145 = vmatpush1.msra.mxu0 %v3085
      %3146 = vmatprep.subr.mxu0 0.0
      %3147 = vmatpush1.msra.mxu0 %v3086
      %3148 = vmatprep.subr.mxu0 0.0
      %3149 = vmatpush1.msra.mxu0 0.0
      %3150 = vmatprep.subr.mxu0 0.0
      %3151 = vmatpush1.msra.mxu0 0.0
      %3152 = vmatprep.subr.mxu0 0.0
      %3153 = vmatpush1.msra.mxu0 0.0
      %3154 = vmatprep.subr.mxu0 0.0
      %3155 = vmatpush1.msra.mxu0 0.0
      %3156 = vmatprep.subr.mxu0 0.0
      %3157 = vmatpush1.msra.mxu0 0.0
      %3158 = vmatprep.subr.mxu0 0.0
      %3159 = vmatpush1.msra.mxu0 0.0
      %3160 = vmatprep.subr.mxu0 0.0
      %3161 = vmatpush1.msra.mxu0 0.0
      %3162 = vmatprep.subr.mxu0 0.0
      %3163 = vmatpush1.msra.mxu0 0.0
      %3164 = vmatprep.subr.mxu0 0.0
      %3165 = vmatpush1.msra.mxu0 0.0
      %3166 = vmatprep.subr.mxu0 0.0
      %3167 = vmatpush1.msra.mxu0 0.0
      %3168 = vmatprep.subr.mxu0 0.0
      %3169 = vmatpush1.msra.mxu0 0.0
      %3170 = vmatprep.subr.mxu0 0.0
      %3171 = vmatpush1.msra.mxu0 0.0
      %3172 = vmatprep.subr.mxu0 0.0
      %3173 = vmatpush1.msra.mxu0 0.0
      %3174 = vmatprep.subr.mxu0 0.0
      %3175 = vmatpush1.msra.mxu0 0.0
      %3176 = vmatprep.subr.mxu0 0.0
      %3177 = vmatpush1.msra.mxu0 0.0
      %3178 = vmatprep.subr.mxu0 0.0
      %3179 = vmatpush1.msra.mxu0 0.0
      %3180 = vmatprep.subr.mxu0 0.0
      %3181 = vmatpush1.msra.mxu0 0.0
      %3182 = vmatprep.subr.mxu0 0.0
      %3183 = vmatpush1.msra.mxu0 0.0
      %3184 = vmatprep.subr.mxu0 0.0
      %3185 = vmatpush1.msra.mxu0 0.0
      %3186 = vmatprep.subr.mxu0 0.0
      %3187 = vmatpush1.msra.mxu0 0.0
      %3188 = vmatprep.subr.mxu0 0.0
      %3189 = vmatpush1.msra.mxu0 0.0
      %3190 = vmatprep.subr.mxu0 0.0
      %3191 = vmatpush1.msra.mxu0 0.0
      %3192 = vmatprep.subr.mxu0 0.0
      %3193 = vmatpush1.msra.mxu0 0.0
      %3194 = vmatprep.subr.mxu0 0.0
      %3195 = vmatpush1.msra.mxu0 0.0
      %3196 = vmatprep.subr.mxu0 0.0
      %3197 = vmatpush1.msra.mxu0 0.0
      %3198 = vmatprep.subr.mxu0 0.0
      %3199 = vmatpush1.msra.mxu0 0.0
      %3200 = vmatprep.subr.mxu0 0.0
      %3201 = vmatpush1.msra.mxu0 0.0
      %3202 = vmatprep.subr.mxu0 0.0
      %3203 = vmatpush1.msra.mxu0 0.0
      %3204 = vmatprep.subr.mxu0 0.0
      %3205 = vmatpush1.msra.mxu0 0.0
      %3206 = vmatprep.subr.mxu0 0.0
      %3207 = vmatpush1.msra.mxu0 0.0
      %3208 = vmatprep.mubr.f32.mxu0 0.0
      %3209 = vmatmul.mubr.f32.gmra.mrb[0].mxu0 %v3097
      %v3210 = vpop.f32.mrb[0].mxu0
      %v3211 = vadd.f32 0.0, %v3210
      %v3212 = vpop.f32.mrb[0].mxu0
      %3213 = vmatprep.mubr.f32.mxu0 0.0
      %3214 = vmatmul.mubr.f32.gmra.mrb[0].mxu0 %v3100
      %v3215 = vpop.f32.mrb[0].mxu0
      %v3216 = vadd.f32 0.0, %v3215
      %v3217 = vpop.f32.mrb[0].mxu0
      %3218 = vmatprep.mubr.f32.mxu0 0.0
      %3219 = vmatmul.mubr.f32.gmra.mrb[0].mxu0 %v3103
      %v3220 = vpop.f32.mrb[0].mxu0
      %v3221 = vadd.f32 0.0, %v3220
      %v3222 = vpop.f32.mrb[0].mxu0
      %3223 = vmatprep.mubr.f32.mxu0 0.0
      %3224 = vmatmul.mubr.f32.gmra.mrb[0].mxu0 %v3106
      %v3225 = vpop.f32.mrb[0].mxu0
      %v3226 = vadd.f32 0.0, %v3225
      %v3227 = vpop.f32.mrb[0].mxu0
      %3228 = vmatprep.mubr.f32.mxu0 0.0
      %3229 = vmatmul.mubr.f32.gmra.mrb[0].mxu0 %v3109
      %v3230 = vpop.f32.mrb[0].mxu0
      %v3231 = vadd.f32 0.0, %v3230
      %v3232 = vpop.f32.mrb[0].mxu0
      %3233 = vmatprep.mubr.f32.mxu0 0.0
      %3234 = vmatmul.mubr.f32.gmra.mrb[0].mxu0 %v3112
      %v3235 = vpop.f32.mrb[0].mxu0
      %v3236 = vadd.f32 0.0, %v3235
      %v3237 = vpop.f32.mrb[0].mxu0
      %3238 = vmatprep.mubr.f32.mxu0 0.0
      %3239 = vmatmul.mubr.f32.gmra.mrb[0].mxu0 %v3115
      %v3240 = vpop.f32.mrb[0].mxu0
      %v3241 = vadd.f32 0.0, %v3240
      %v3242 = vpop.f32.mrb[0].mxu0
      %3243 = vmatprep.mubr.f32.mxu0 0.0
      %3244 = vmatmul.mubr.f32.gmra.mrb[0].mxu0 %v3118
      %v3245 = vpop.f32.mrb[0].mxu0
      %v3246 = vadd.f32 0.0, %v3245
      %v3247 = vpop.f32.mrb[0].mxu0
      %3248 = vmatprep.mubr.f32.mxu0 0.0
      %3249 = vmatmul.mubr.f32.gmra.mrb[0].mxu0 %v3121
      %v3250 = vpop.f32.mrb[0].mxu0
      %v3251 = vadd.f32 0.0, %v3250
      %v3252 = vpop.f32.mrb[0].mxu0
      %3253 = vmatprep.mubr.f32.mxu0 0.0
      %3254 = vmatmul.mubr.f32.gmra.mrb[0].mxu0 %v3124
      %v3255 = vpop.f32.mrb[0].mxu0
      %v3256 = vadd.f32 0.0, %v3255
      %v3257 = vpop.f32.mrb[0].mxu0
      %3258 = vmatprep.mubr.f32.mxu0 0.0
      %3259 = vmatmul.mubr.f32.gmra.mrb[0].mxu0 %v3127
      %v3260 = vpop.f32.mrb[0].mxu0
      %v3261 = vadd.f32 0.0, %v3260
      %v3262 = vpop.f32.mrb[0].mxu0
      %3263 = vmatprep.mubr.f32.mxu0 0.0
      %3264 = vmatmul.mubr.f32.gmra.mrb[0].mxu0 %v3130
      %v3265 = vpop.f32.mrb[0].mxu0
      %v3266 = vadd.f32 0.0, %v3265
      %v3267 = vpop.f32.mrb[0].mxu0
      %3268 = vmatprep.mubr.f32.mxu0 0.0
      %3269 = vmatmul.mubr.f32.gmra.mrb[0].mxu0 %v3133
      %v3270 = vpop.f32.mrb[0].mxu0
      %v3271 = vadd.f32 0.0, %v3270
      %v3272 = vpop.f32.mrb[0].mxu0
      %3273 = vmatprep.mubr.f32.mxu0 0.0
      %3274 = vmatmul.mubr.f32.gmra.mrb[0].mxu0 %v3136
      %v3275 = vpop.f32.mrb[0].mxu0
      %v3276 = vadd.f32 0.0, %v3275
      %v3277 = vpop.f32.mrb[0].mxu0
      %3278 = vmatprep.mubr.f32.mxu0 0.0
      %3279 = vmatmul.mubr.f32.gmra.mrb[0].mxu0 %v3139
      %v3280 = vpop.f32.mrb[0].mxu0
      %v3281 = vadd.f32 0.0, %v3280
      %v3282 = vpop.f32.mrb[0].mxu0
      %3283 = vmatprep.mubr.f32.mxu0 0.0
      %3284 = vmatmul.mubr.f32.gmra.mrb[0].mxu0 %v3142
      %v3285 = vpop.f32.mrb[0].mxu0
      %v3286 = vadd.f32 0.0, %v3285
      %v3287 = vpop.f32.mrb[0].mxu0
      %3288 = vdwg.mxu0
      %v3290 = vsel %vm3095, %v1387, 0
      %v3293 = vsel %vm3095, %v1392, 0
      %v3296 = vsel %vm3095, %v1397, 0
      %v3299 = vsel %vm3095, %v1402, 0
      %v3302 = vsel %vm3095, %v1407, 0
      %v3305 = vsel %vm3095, %v1412, 0
      %v3308 = vsel %vm3095, %v1417, 0
      %v3311 = vsel %vm3095, %v1422, 0
      %v3314 = vsel %vm3095, %v1427, 0
      %v3317 = vsel %vm3095, %v1432, 0
      %v3320 = vsel %vm3095, %v1437, 0
      %v3323 = vsel %vm3095, %v1442, 0
      %v3326 = vsel %vm3095, %v1447, 0
      %v3329 = vsel %vm3095, %v1452, 0
      %v3332 = vsel %vm3095, %v1457, 0
      %v3335 = vsel %vm3095, %v1462, 0
      %3337 = vmatprep.subr.mxu0 0.0
      %3338 = vmatpush1.msra.mxu0 %v3083
      %3339 = vmatprep.subr.mxu0 0.0
      %3340 = vmatpush1.msra.mxu0 %v3084
      %3341 = vmatprep.subr.mxu0 0.0
      %3342 = vmatpush1.msra.mxu0 0.0
      %3343 = vmatprep.subr.mxu0 0.0
      %3344 = vmatpush1.msra.mxu0 0.0
      %3345 = vmatprep.subr.mxu0 0.0
      %3346 = vmatpush1.msra.mxu0 0.0
      %3347 = vmatprep.subr.mxu0 0.0
      %3348 = vmatpush1.msra.mxu0 0.0
      %3349 = vmatprep.subr.mxu0 0.0
      %3350 = vmatpush1.msra.mxu0 0.0
      %3351 = vmatprep.subr.mxu0 0.0
      %3352 = vmatpush1.msra.mxu0 0.0
      %3353 = vmatprep.subr.mxu0 0.0
      %3354 = vmatpush1.msra.mxu0 0.0
      %3355 = vmatprep.subr.mxu0 0.0
      %3356 = vmatpush1.msra.mxu0 0.0
      %3357 = vmatprep.subr.mxu0 0.0
      %3358 = vmatpush1.msra.mxu0 0.0
      %3359 = vmatprep.subr.mxu0 0.0
      %3360 = vmatpush1.msra.mxu0 0.0
      %3361 = vmatprep.subr.mxu0 0.0
      %3362 = vmatpush1.msra.mxu0 0.0
      %3363 = vmatprep.subr.mxu0 0.0
      %3364 = vmatpush1.msra.mxu0 0.0
      %3365 = vmatprep.subr.mxu0 0.0
      %3366 = vmatpush1.msra.mxu0 0.0
      %3367 = vmatprep.subr.mxu0 0.0
      %3368 = vmatpush1.msra.mxu0 0.0
      %3369 = vmatprep.subr.mxu0 0.0
      %3370 = vmatpush1.msra.mxu0 0.0
      %3371 = vmatprep.subr.mxu0 0.0
      %3372 = vmatpush1.msra.mxu0 0.0
      %3373 = vmatprep.subr.mxu0 0.0
      %3374 = vmatpush1.msra.mxu0 0.0
      %3375 = vmatprep.subr.mxu0 0.0
      %3376 = vmatpush1.msra.mxu0 0.0
      %3377 = vmatprep.subr.mxu0 0.0
      %3378 = vmatpush1.msra.mxu0 0.0
      %3379 = vmatprep.subr.mxu0 0.0
      %3380 = vmatpush1.msra.mxu0 0.0
      %3381 = vmatprep.subr.mxu0 0.0
      %3382 = vmatpush1.msra.mxu0 0.0
      %3383 = vmatprep.subr.mxu0 0.0
      %3384 = vmatpush1.msra.mxu0 0.0
      %3385 = vmatprep.subr.mxu0 0.0
      %3386 = vmatpush1.msra.mxu0 0.0
      %3387 = vmatprep.subr.mxu0 0.0
      %3388 = vmatpush1.msra.mxu0 0.0
      %3389 = vmatprep.subr.mxu0 0.0
      %3390 = vmatpush1.msra.mxu0 0.0
      %3391 = vmatprep.subr.mxu0 0.0
      %3392 = vmatpush1.msra.mxu0 0.0
      %3393 = vmatprep.subr.mxu0 0.0
      %3394 = vmatpush1.msra.mxu0 0.0
      %3395 = vmatprep.subr.mxu0 0.0
      %3396 = vmatpush1.msra.mxu0 0.0
      %3397 = vmatprep.subr.mxu0 0.0
      %3398 = vmatpush1.msra.mxu0 0.0
      %3399 = vmatprep.subr.mxu0 0.0
      %3400 = vmatpush1.msra.mxu0 0.0
      %3401 = vmatprep.mubr.f32.mxu0 0.0
      %3402 = vmatmul.mubr.f32.gmra.mrb[0].mxu0 %v3290
      %v3403 = vpop.f32.mrb[0].mxu0
      %v3404 = vadd.f32 %v3211, %v3403
      %v3405 = vpop.f32.mrb[0].mxu0
      %3406 = vmatprep.mubr.f32.mxu0 0.0
      %3407 = vmatmul.mubr.f32.gmra.mrb[0].mxu0 %v3293
      %v3408 = vpop.f32.mrb[0].mxu0
      %v3409 = vadd.f32 %v3216, %v3408
      %v3410 = vpop.f32.mrb[0].mxu0
      %3411 = vmatprep.mubr.f32.mxu0 0.0
      %3412 = vmatmul.mubr.f32.gmra.mrb[0].mxu0 %v3296
      %v3413 = vpop.f32.mrb[0].mxu0
      %v3414 = vadd.f32 %v3221, %v3413
      %v3415 = vpop.f32.mrb[0].mxu0
      %3416 = vmatprep.mubr.f32.mxu0 0.0
      %3417 = vmatmul.mubr.f32.gmra.mrb[0].mxu0 %v3299
      %v3418 = vpop.f32.mrb[0].mxu0
      %v3419 = vadd.f32 %v3226, %v3418
      %v3420 = vpop.f32.mrb[0].mxu0
      %3421 = vmatprep.mubr.f32.mxu0 0.0
      %3422 = vmatmul.mubr.f32.gmra.mrb[0].mxu0 %v3302
      %v3423 = vpop.f32.mrb[0].mxu0
      %v3424 = vadd.f32 %v3231, %v3423
      %v3425 = vpop.f32.mrb[0].mxu0
      %3426 = vmatprep.mubr.f32.mxu0 0.0
      %3427 = vmatmul.mubr.f32.gmra.mrb[0].mxu0 %v3305
      %v3428 = vpop.f32.mrb[0].mxu0
      %v3429 = vadd.f32 %v3236, %v3428
      %v3430 = vpop.f32.mrb[0].mxu0
      %3431 = vmatprep.mubr.f32.mxu0 0.0
      %3432 = vmatmul.mubr.f32.gmra.mrb[0].mxu0 %v3308
      %v3433 = vpop.f32.mrb[0].mxu0
      %v3434 = vadd.f32 %v3241, %v3433
      %v3435 = vpop.f32.mrb[0].mxu0
      %3436 = vmatprep.mubr.f32.mxu0 0.0
      %3437 = vmatmul.mubr.f32.gmra.mrb[0].mxu0 %v3311
      %v3438 = vpop.f32.mrb[0].mxu0
      %v3439 = vadd.f32 %v3246, %v3438
      %v3440 = vpop.f32.mrb[0].mxu0
      %3441 = vmatprep.mubr.f32.mxu0 0.0
      %3442 = vmatmul.mubr.f32.gmra.mrb[0].mxu0 %v3314
      %v3443 = vpop.f32.mrb[0].mxu0
      %v3444 = vadd.f32 %v3251, %v3443
      %v3445 = vpop.f32.mrb[0].mxu0
      %3446 = vmatprep.mubr.f32.mxu0 0.0
      %3447 = vmatmul.mubr.f32.gmra.mrb[0].mxu0 %v3317
      %v3448 = vpop.f32.mrb[0].mxu0
      %v3449 = vadd.f32 %v3256, %v3448
      %v3450 = vpop.f32.mrb[0].mxu0
      %3451 = vmatprep.mubr.f32.mxu0 0.0
      %3452 = vmatmul.mubr.f32.gmra.mrb[0].mxu0 %v3320
      %v3453 = vpop.f32.mrb[0].mxu0
      %v3454 = vadd.f32 %v3261, %v3453
      %v3455 = vpop.f32.mrb[0].mxu0
      %3456 = vmatprep.mubr.f32.mxu0 0.0
      %3457 = vmatmul.mubr.f32.gmra.mrb[0].mxu0 %v3323
      %v3458 = vpop.f32.mrb[0].mxu0
      %v3459 = vadd.f32 %v3266, %v3458
      %v3460 = vpop.f32.mrb[0].mxu0
      %3461 = vmatprep.mubr.f32.mxu0 0.0
      %3462 = vmatmul.mubr.f32.gmra.mrb[0].mxu0 %v3326
      %v3463 = vpop.f32.mrb[0].mxu0
      %v3464 = vadd.f32 %v3271, %v3463
      %v3465 = vpop.f32.mrb[0].mxu0
      %3466 = vmatprep.mubr.f32.mxu0 0.0
      %3467 = vmatmul.mubr.f32.gmra.mrb[0].mxu0 %v3329
      %v3468 = vpop.f32.mrb[0].mxu0
      %v3469 = vadd.f32 %v3276, %v3468
      %v3470 = vpop.f32.mrb[0].mxu0
      %3471 = vmatprep.mubr.f32.mxu0 0.0
      %3472 = vmatmul.mubr.f32.gmra.mrb[0].mxu0 %v3332
      %v3473 = vpop.f32.mrb[0].mxu0
      %v3474 = vadd.f32 %v3281, %v3473
      %v3475 = vpop.f32.mrb[0].mxu0
      %3476 = vmatprep.mubr.f32.mxu0 0.0
      %3477 = vmatmul.mubr.f32.gmra.mrb[0].mxu0 %v3335
      %v3478 = vpop.f32.mrb[0].mxu0
      %v3479 = vadd.f32 %v3286, %v3478
      %v3480 = vpop.f32.mrb[0].mxu0
      %3481 = vdwg.mxu0
      %v3482 = vlaneseq
      %v3483 = vshrl.u32 %v3482, 7
      %v3484 = vsub.s32 0, %v3483
      %v3485 = vrot.slane %v3089, %v3484
      %v3486 = vadd.f32 %v3404, %v3485
      %v3487 = vadd.f32 %v3409, %v3485
      %v3488 = vadd.f32 %v3414, %v3485
      %v3489 = vadd.f32 %v3419, %v3485
      %v3490 = vadd.f32 %v3424, %v3485
      %v3491 = vadd.f32 %v3429, %v3485
      %v3492 = vadd.f32 %v3434, %v3485
      %v3493 = vadd.f32 %v3439, %v3485
      %v3494 = vadd.f32 %v3444, %v3485
      %v3495 = vadd.f32 %v3449, %v3485
      %v3496 = vadd.f32 %v3454, %v3485
      %v3497 = vadd.f32 %v3459, %v3485
      %v3498 = vadd.f32 %v3464, %v3485
      %v3499 = vadd.f32 %v3469, %v3485
      %v3500 = vadd.f32 %v3474, %v3485
      %v3501 = vadd.f32 %v3479, %v3485
      %v3502 = vmax.f32 %v3486, 0.0
      %v3503 = vmax.f32 %v3487, 0.0
      %v3504 = vmax.f32 %v3488, 0.0
      %v3505 = vmax.f32 %v3489, 0.0
      %v3506 = vmax.f32 %v3490, 0.0
      %v3507 = vmax.f32 %v3491, 0.0
      %v3508 = vmax.f32 %v3492, 0.0
      %v3509 = vmax.f32 %v3493, 0.0
      %v3510 = vmax.f32 %v3494, 0.0
      %v3511 = vmax.f32 %v3495, 0.0
      %v3512 = vmax.f32 %v3496, 0.0
      %v3513 = vmax.f32 %v3497, 0.0
      %v3514 = vmax.f32 %v3498, 0.0
      %v3515 = vmax.f32 %v3499, 0.0
      %v3516 = vmax.f32 %v3500, 0.0
      %v3517 = vmax.f32 %v3501, 0.0
      %v3518 = vlaneseq
      %v3519 = vshrl.u32 %v3518, 7
      %v3520 = vsub.s32 0, %v3519
      %v3521 = vrot.slane %v3090, %v3520
      %vm3522 = vcmask 64512
      %v3524 = vsel %vm3522, %v3502, 0
      %v3527 = vsel %vm3522, %v3503, 0
      %v3530 = vsel %vm3522, %v3504, 0
      %v3533 = vsel %vm3522, %v3505, 0
      %v3536 = vsel %vm3522, %v3506, 0
      %v3539 = vsel %vm3522, %v3507, 0
      %v3542 = vsel %vm3522, %v3508, 0
      %v3545 = vsel %vm3522, %v3509, 0
      %v3548 = vsel %vm3522, %v3510, 0
      %v3551 = vsel %vm3522, %v3511, 0
      %v3554 = vsel %vm3522, %v3512, 0
      %v3557 = vsel %vm3522, %v3513, 0
      %v3560 = vsel %vm3522, %v3514, 0
      %v3563 = vsel %vm3522, %v3515, 0
      %v3566 = vsel %vm3522, %v3516, 0
      %v3569 = vsel %vm3522, %v3517, 0
      %3571 = vmatprep.subr.mxu0 0.0
      %3572 = vmatpush1.msra.mxu0 %v3087
      %3573 = vmatprep.subr.mxu0 0.0
      %3574 = vmatpush1.msra.mxu0 0.0
      %3575 = vmatprep.subr.mxu0 0.0
      %3576 = vmatpush1.msra.mxu0 0.0
      %3577 = vmatprep.subr.mxu0 0.0
      %3578 = vmatpush1.msra.mxu0 0.0
      %3579 = vmatprep.subr.mxu0 0.0
      %3580 = vmatpush1.msra.mxu0 0.0
      %3581 = vmatprep.subr.mxu0 0.0
      %3582 = vmatpush1.msra.mxu0 0.0
      %3583 = vmatprep.subr.mxu0 0.0
      %3584 = vmatpush1.msra.mxu0 0.0
      %3585 = vmatprep.subr.mxu0 0.0
      %3586 = vmatpush1.msra.mxu0 0.0
      %3587 = vmatprep.subr.mxu0 0.0
      %3588 = vmatpush1.msra.mxu0 0.0
      %3589 = vmatprep.subr.mxu0 0.0
      %3590 = vmatpush1.msra.mxu0 0.0
      %3591 = vmatprep.subr.mxu0 0.0
      %3592 = vmatpush1.msra.mxu0 0.0
      %3593 = vmatprep.subr.mxu0 0.0
      %3594 = vmatpush1.msra.mxu0 0.0
      %3595 = vmatprep.subr.mxu0 0.0
      %3596 = vmatpush1.msra.mxu0 0.0
      %3597 = vmatprep.subr.mxu0 0.0
      %3598 = vmatpush1.msra.mxu0 0.0
      %3599 = vmatprep.subr.mxu0 0.0
      %3600 = vmatpush1.msra.mxu0 0.0
      %3601 = vmatprep.subr.mxu0 0.0
      %3602 = vmatpush1.msra.mxu0 0.0
      %3603 = vmatprep.subr.mxu0 0.0
      %3604 = vmatpush1.msra.mxu0 0.0
      %3605 = vmatprep.subr.mxu0 0.0
      %3606 = vmatpush1.msra.mxu0 0.0
      %3607 = vmatprep.subr.mxu0 0.0
      %3608 = vmatpush1.msra.mxu0 0.0
      %3609 = vmatprep.subr.mxu0 0.0
      %3610 = vmatpush1.msra.mxu0 0.0
      %3611 = vmatprep.subr.mxu0 0.0
      %3612 = vmatpush1.msra.mxu0 0.0
      %3613 = vmatprep.subr.mxu0 0.0
      %3614 = vmatpush1.msra.mxu0 0.0
      %3615 = vmatprep.subr.mxu0 0.0
      %3616 = vmatpush1.msra.mxu0 0.0
      %3617 = vmatprep.subr.mxu0 0.0
      %3618 = vmatpush1.msra.mxu0 0.0
      %3619 = vmatprep.subr.mxu0 0.0
      %3620 = vmatpush1.msra.mxu0 0.0
      %3621 = vmatprep.subr.mxu0 0.0
      %3622 = vmatpush1.msra.mxu0 0.0
      %3623 = vmatprep.subr.mxu0 0.0
      %3624 = vmatpush1.msra.mxu0 0.0
      %3625 = vmatprep.subr.mxu0 0.0
      %3626 = vmatpush1.msra.mxu0 0.0
      %3627 = vmatprep.subr.mxu0 0.0
      %3628 = vmatpush1.msra.mxu0 0.0
      %3629 = vmatprep.subr.mxu0 0.0
      %3630 = vmatpush1.msra.mxu0 0.0
      %3631 = vmatprep.subr.mxu0 0.0
      %3632 = vmatpush1.msra.mxu0 0.0
      %3633 = vmatprep.subr.mxu0 0.0
      %3634 = vmatpush1.msra.mxu0 0.0
      %3635 = vmatprep.mubr.f32.mxu0 0.0
      %3636 = vmatmul.mubr.f32.gmra.mrb[0].mxu0 %v3524
      %v3637 = vpop.f32.mrb[0].mxu0
      %v3638 = vadd.f32 %v3521, %v3637
      %v3639 = vpop.f32.mrb[0].mxu0
      %3640 = vmatprep.mubr.f32.mxu0 0.0
      %3641 = vmatmul.mubr.f32.gmra.mrb[0].mxu0 %v3527
      %v3642 = vpop.f32.mrb[0].mxu0
      %v3643 = vadd.f32 %v3521, %v3642
      %v3644 = vpop.f32.mrb[0].mxu0
      %3645 = vmatprep.mubr.f32.mxu0 0.0
      %3646 = vmatmul.mubr.f32.gmra.mrb[0].mxu0 %v3530
      %v3647 = vpop.f32.mrb[0].mxu0
      %v3648 = vadd.f32 %v3521, %v3647
      %v3649 = vpop.f32.mrb[0].mxu0
      %3650 = vmatprep.mubr.f32.mxu0 0.0
      %3651 = vmatmul.mubr.f32.gmra.mrb[0].mxu0 %v3533
      %v3652 = vpop.f32.mrb[0].mxu0
      %v3653 = vadd.f32 %v3521, %v3652
      %v3654 = vpop.f32.mrb[0].mxu0
      %3655 = vmatprep.mubr.f32.mxu0 0.0
      %3656 = vmatmul.mubr.f32.gmra.mrb[0].mxu0 %v3536
      %v3657 = vpop.f32.mrb[0].mxu0
      %v3658 = vadd.f32 %v3521, %v3657
      %v3659 = vpop.f32.mrb[0].mxu0
      %3660 = vmatprep.mubr.f32.mxu0 0.0
      %3661 = vmatmul.mubr.f32.gmra.mrb[0].mxu0 %v3539
      %v3662 = vpop.f32.mrb[0].mxu0
      %v3663 = vadd.f32 %v3521, %v3662
      %v3664 = vpop.f32.mrb[0].mxu0
      %3665 = vmatprep.mubr.f32.mxu0 0.0
      %3666 = vmatmul.mubr.f32.gmra.mrb[0].mxu0 %v3542
      %v3667 = vpop.f32.mrb[0].mxu0
      %v3668 = vadd.f32 %v3521, %v3667
      %v3669 = vpop.f32.mrb[0].mxu0
      %3670 = vmatprep.mubr.f32.mxu0 0.0
      %3671 = vmatmul.mubr.f32.gmra.mrb[0].mxu0 %v3545
      %v3672 = vpop.f32.mrb[0].mxu0
      %v3673 = vadd.f32 %v3521, %v3672
      %v3674 = vpop.f32.mrb[0].mxu0
      %3675 = vmatprep.mubr.f32.mxu0 0.0
      %3676 = vmatmul.mubr.f32.gmra.mrb[0].mxu0 %v3548
      %v3677 = vpop.f32.mrb[0].mxu0
      %v3678 = vadd.f32 %v3521, %v3677
      %v3679 = vpop.f32.mrb[0].mxu0
      %3680 = vmatprep.mubr.f32.mxu0 0.0
      %3681 = vmatmul.mubr.f32.gmra.mrb[0].mxu0 %v3551
      %v3682 = vpop.f32.mrb[0].mxu0
      %v3683 = vadd.f32 %v3521, %v3682
      %v3684 = vpop.f32.mrb[0].mxu0
      %3685 = vmatprep.mubr.f32.mxu0 0.0
      %3686 = vmatmul.mubr.f32.gmra.mrb[0].mxu0 %v3554
      %v3687 = vpop.f32.mrb[0].mxu0
      %v3688 = vadd.f32 %v3521, %v3687
      %v3689 = vpop.f32.mrb[0].mxu0
      %3690 = vmatprep.mubr.f32.mxu0 0.0
      %3691 = vmatmul.mubr.f32.gmra.mrb[0].mxu0 %v3557
      %v3692 = vpop.f32.mrb[0].mxu0
      %v3693 = vadd.f32 %v3521, %v3692
      %v3694 = vpop.f32.mrb[0].mxu0
      %3695 = vmatprep.mubr.f32.mxu0 0.0
      %3696 = vmatmul.mubr.f32.gmra.mrb[0].mxu0 %v3560
      %v3697 = vpop.f32.mrb[0].mxu0
      %v3698 = vadd.f32 %v3521, %v3697
      %v3699 = vpop.f32.mrb[0].mxu0
      %3700 = vmatprep.mubr.f32.mxu0 0.0
      %3701 = vmatmul.mubr.f32.gmra.mrb[0].mxu0 %v3563
      %v3702 = vpop.f32.mrb[0].mxu0
      %v3703 = vadd.f32 %v3521, %v3702
      %v3704 = vpop.f32.mrb[0].mxu0
      %3705 = vmatprep.mubr.f32.mxu0 0.0
      %3706 = vmatmul.mubr.f32.gmra.mrb[0].mxu0 %v3566
      %v3707 = vpop.f32.mrb[0].mxu0
      %v3708 = vadd.f32 %v3521, %v3707
      %v3709 = vpop.f32.mrb[0].mxu0
      %3710 = vmatprep.mubr.f32.mxu0 0.0
      %3711 = vmatmul.mubr.f32.gmra.mrb[0].mxu0 %v3569
      %v3712 = vpop.f32.mrb[0].mxu0
      %v3713 = vadd.f32 %v3521, %v3712
      %v3714 = vpop.f32.mrb[0].mxu0
      %3715 = vdwg.mxu0
      %v3716 = vmax.f32 %v3638, 0.0
      %v3717 = vmax.f32 %v3643, 0.0
      %v3718 = vmax.f32 %v3648, 0.0
      %v3719 = vmax.f32 %v3653, 0.0
      %v3720 = vmax.f32 %v3658, 0.0
      %v3721 = vmax.f32 %v3663, 0.0
      %v3722 = vmax.f32 %v3668, 0.0
      %v3723 = vmax.f32 %v3673, 0.0
      %v3724 = vmax.f32 %v3678, 0.0
      %v3725 = vmax.f32 %v3683, 0.0
      %v3726 = vmax.f32 %v3688, 0.0
      %v3727 = vmax.f32 %v3693, 0.0
      %v3728 = vmax.f32 %v3698, 0.0
      %v3729 = vmax.f32 %v3703, 0.0
      %v3730 = vmax.f32 %v3708, 0.0
      %v3731 = vmax.f32 %v3713, 0.0
      %v3732 = vlaneseq
      %v3733 = vshrl.u32 %v3732, 7
      %v3734 = vsub.s32 0, %v3733
      %v3735 = vrot.slane %v3091, %v3734
      %v3737 = vsel %vm3522, %v3716, 0
      %v3740 = vsel %vm3522, %v3717, 0
      %v3743 = vsel %vm3522, %v3718, 0
      %v3746 = vsel %vm3522, %v3719, 0
      %v3749 = vsel %vm3522, %v3720, 0
      %v3752 = vsel %vm3522, %v3721, 0
      %v3755 = vsel %vm3522, %v3722, 0
      %v3758 = vsel %vm3522, %v3723, 0
      %v3761 = vsel %vm3522, %v3724, 0
      %v3764 = vsel %vm3522, %v3725, 0
      %v3767 = vsel %vm3522, %v3726, 0
      %v3770 = vsel %vm3522, %v3727, 0
      %v3773 = vsel %vm3522, %v3728, 0
      %v3776 = vsel %vm3522, %v3729, 0
      %v3779 = vsel %vm3522, %v3730, 0
      %v3782 = vsel %vm3522, %v3731, 0
      %3784 = vmatprep.subr.mxu0 0.0
      %3785 = vmatpush1.msra.mxu0 %v3088
      %3786 = vmatprep.subr.mxu0 0.0
      %3787 = vmatpush1.msra.mxu0 0.0
      %3788 = vmatprep.subr.mxu0 0.0
      %3789 = vmatpush1.msra.mxu0 0.0
      %3790 = vmatprep.subr.mxu0 0.0
      %3791 = vmatpush1.msra.mxu0 0.0
      %3792 = vmatprep.subr.mxu0 0.0
      %3793 = vmatpush1.msra.mxu0 0.0
      %3794 = vmatprep.subr.mxu0 0.0
      %3795 = vmatpush1.msra.mxu0 0.0
      %3796 = vmatprep.subr.mxu0 0.0
      %3797 = vmatpush1.msra.mxu0 0.0
      %3798 = vmatprep.subr.mxu0 0.0
      %3799 = vmatpush1.msra.mxu0 0.0
      %3800 = vmatprep.subr.mxu0 0.0
      %3801 = vmatpush1.msra.mxu0 0.0
      %3802 = vmatprep.subr.mxu0 0.0
      %3803 = vmatpush1.msra.mxu0 0.0
      %3804 = vmatprep.subr.mxu0 0.0
      %3805 = vmatpush1.msra.mxu0 0.0
      %3806 = vmatprep.subr.mxu0 0.0
      %3807 = vmatpush1.msra.mxu0 0.0
      %3808 = vmatprep.subr.mxu0 0.0
      %3809 = vmatpush1.msra.mxu0 0.0
      %3810 = vmatprep.subr.mxu0 0.0
      %3811 = vmatpush1.msra.mxu0 0.0
      %3812 = vmatprep.subr.mxu0 0.0
      %3813 = vmatpush1.msra.mxu0 0.0
      %3814 = vmatprep.subr.mxu0 0.0
      %3815 = vmatpush1.msra.mxu0 0.0
      %3816 = vmatprep.subr.mxu0 0.0
      %3817 = vmatpush1.msra.mxu0 0.0
      %3818 = vmatprep.subr.mxu0 0.0
      %3819 = vmatpush1.msra.mxu0 0.0
      %3820 = vmatprep.subr.mxu0 0.0
      %3821 = vmatpush1.msra.mxu0 0.0
      %3822 = vmatprep.subr.mxu0 0.0
      %3823 = vmatpush1.msra.mxu0 0.0
      %3824 = vmatprep.subr.mxu0 0.0
      %3825 = vmatpush1.msra.mxu0 0.0
      %3826 = vmatprep.subr.mxu0 0.0
      %3827 = vmatpush1.msra.mxu0 0.0
      %3828 = vmatprep.subr.mxu0 0.0
      %3829 = vmatpush1.msra.mxu0 0.0
      %3830 = vmatprep.subr.mxu0 0.0
      %3831 = vmatpush1.msra.mxu0 0.0
      %3832 = vmatprep.subr.mxu0 0.0
      %3833 = vmatpush1.msra.mxu0 0.0
      %3834 = vmatprep.subr.mxu0 0.0
      %3835 = vmatpush1.msra.mxu0 0.0
      %3836 = vmatprep.subr.mxu0 0.0
      %3837 = vmatpush1.msra.mxu0 0.0
      %3838 = vmatprep.subr.mxu0 0.0
      %3839 = vmatpush1.msra.mxu0 0.0
      %3840 = vmatprep.subr.mxu0 0.0
      %3841 = vmatpush1.msra.mxu0 0.0
      %3842 = vmatprep.subr.mxu0 0.0
      %3843 = vmatpush1.msra.mxu0 0.0
      %3844 = vmatprep.subr.mxu0 0.0
      %3845 = vmatpush1.msra.mxu0 0.0
      %3846 = vmatprep.subr.mxu0 0.0
      %3847 = vmatpush1.msra.mxu0 0.0
      %3848 = vmatprep.mubr.f32.mxu0 0.0
      %3849 = vmatmul.mubr.f32.gmra.mrb[0].mxu0 %v3737
      %v3850 = vpop.f32.mrb[0].mxu0
      %v3851 = vadd.f32 %v3735, %v3850
      %v3852 = vpop.f32.mrb[0].mxu0
      %3853 = vmatprep.mubr.f32.mxu0 0.0
      %3854 = vmatmul.mubr.f32.gmra.mrb[0].mxu0 %v3740
      %v3855 = vpop.f32.mrb[0].mxu0
      %v3856 = vadd.f32 %v3735, %v3855
      %v3857 = vpop.f32.mrb[0].mxu0
      %3858 = vmatprep.mubr.f32.mxu0 0.0
      %3859 = vmatmul.mubr.f32.gmra.mrb[0].mxu0 %v3743
      %v3860 = vpop.f32.mrb[0].mxu0
      %v3861 = vadd.f32 %v3735, %v3860
      %v3862 = vpop.f32.mrb[0].mxu0
      %3863 = vmatprep.mubr.f32.mxu0 0.0
      %3864 = vmatmul.mubr.f32.gmra.mrb[0].mxu0 %v3746
      %v3865 = vpop.f32.mrb[0].mxu0
      %v3866 = vadd.f32 %v3735, %v3865
      %v3867 = vpop.f32.mrb[0].mxu0
      %3868 = vmatprep.mubr.f32.mxu0 0.0
      %3869 = vmatmul.mubr.f32.gmra.mrb[0].mxu0 %v3749
      %v3870 = vpop.f32.mrb[0].mxu0
      %v3871 = vadd.f32 %v3735, %v3870
      %v3872 = vpop.f32.mrb[0].mxu0
      %3873 = vmatprep.mubr.f32.mxu0 0.0
      %3874 = vmatmul.mubr.f32.gmra.mrb[0].mxu0 %v3752
      %v3875 = vpop.f32.mrb[0].mxu0
      %v3876 = vadd.f32 %v3735, %v3875
      %v3877 = vpop.f32.mrb[0].mxu0
      %3878 = vmatprep.mubr.f32.mxu0 0.0
      %3879 = vmatmul.mubr.f32.gmra.mrb[0].mxu0 %v3755
      %v3880 = vpop.f32.mrb[0].mxu0
      %v3881 = vadd.f32 %v3735, %v3880
      %v3882 = vpop.f32.mrb[0].mxu0
      %3883 = vmatprep.mubr.f32.mxu0 0.0
      %3884 = vmatmul.mubr.f32.gmra.mrb[0].mxu0 %v3758
      %v3885 = vpop.f32.mrb[0].mxu0
      %v3886 = vadd.f32 %v3735, %v3885
      %v3887 = vpop.f32.mrb[0].mxu0
      %3888 = vmatprep.mubr.f32.mxu0 0.0
      %3889 = vmatmul.mubr.f32.gmra.mrb[0].mxu0 %v3761
      %v3890 = vpop.f32.mrb[0].mxu0
      %v3891 = vadd.f32 %v3735, %v3890
      %v3892 = vpop.f32.mrb[0].mxu0
      %3893 = vmatprep.mubr.f32.mxu0 0.0
      %3894 = vmatmul.mubr.f32.gmra.mrb[0].mxu0 %v3764
      %v3895 = vpop.f32.mrb[0].mxu0
      %v3896 = vadd.f32 %v3735, %v3895
      %v3897 = vpop.f32.mrb[0].mxu0
      %3898 = vmatprep.mubr.f32.mxu0 0.0
      %3899 = vmatmul.mubr.f32.gmra.mrb[0].mxu0 %v3767
      %v3900 = vpop.f32.mrb[0].mxu0
      %v3901 = vadd.f32 %v3735, %v3900
      %v3902 = vpop.f32.mrb[0].mxu0
      %3903 = vmatprep.mubr.f32.mxu0 0.0
      %3904 = vmatmul.mubr.f32.gmra.mrb[0].mxu0 %v3770
      %v3905 = vpop.f32.mrb[0].mxu0
      %v3906 = vadd.f32 %v3735, %v3905
      %v3907 = vpop.f32.mrb[0].mxu0
      %3908 = vmatprep.mubr.f32.mxu0 0.0
      %3909 = vmatmul.mubr.f32.gmra.mrb[0].mxu0 %v3773
      %v3910 = vpop.f32.mrb[0].mxu0
      %v3911 = vadd.f32 %v3735, %v3910
      %v3912 = vpop.f32.mrb[0].mxu0
      %3913 = vmatprep.mubr.f32.mxu0 0.0
      %3914 = vmatmul.mubr.f32.gmra.mrb[0].mxu0 %v3776
      %v3915 = vpop.f32.mrb[0].mxu0
      %v3916 = vadd.f32 %v3735, %v3915
      %v3917 = vpop.f32.mrb[0].mxu0
      %3918 = vmatprep.mubr.f32.mxu0 0.0
      %3919 = vmatmul.mubr.f32.gmra.mrb[0].mxu0 %v3779
      %v3920 = vpop.f32.mrb[0].mxu0
      %v3921 = vadd.f32 %v3735, %v3920
      %v3922 = vpop.f32.mrb[0].mxu0
      %3923 = vmatprep.mubr.f32.mxu0 0.0
      %3924 = vmatmul.mubr.f32.gmra.mrb[0].mxu0 %v3782
      %v3925 = vpop.f32.mrb[0].mxu0
      %v3926 = vadd.f32 %v3735, %v3925
      %v3927 = vpop.f32.mrb[0].mxu0
      %3928 = vdwg.mxu0
      %v3929 = vmax.f32 %v3851, 0.0
      %v3930 = vmax.f32 %v3856, 0.0
      %v3931 = vmax.f32 %v3861, 0.0
      %v3932 = vmax.f32 %v3866, 0.0
      %v3933 = vmax.f32 %v3871, 0.0
      %v3934 = vmax.f32 %v3876, 0.0
      %v3935 = vmax.f32 %v3881, 0.0
      %v3936 = vmax.f32 %v3886, 0.0
      %v3937 = vmax.f32 %v3891, 0.0
      %v3938 = vmax.f32 %v3896, 0.0
      %v3939 = vmax.f32 %v3901, 0.0
      %v3940 = vmax.f32 %v3906, 0.0
      %v3941 = vmax.f32 %v3911, 0.0
      %v3942 = vmax.f32 %v3916, 0.0
      %v3943 = vmax.f32 %v3921, 0.0
      %v3944 = vmax.f32 %v3926, 0.0
      %v3945 = vmul.f32 %v1387, %v3005
      %v3946 = vmul.f32 %v1392, %v3010
      %v3947 = vmul.f32 %v1397, %v3015
      %v3948 = vmul.f32 %v1402, %v3020
      %v3949 = vmul.f32 %v1407, %v3025
      %v3950 = vmul.f32 %v1412, %v3030
      %v3951 = vmul.f32 %v1417, %v3035
      %v3952 = vmul.f32 %v1422, %v3040
      %v3953 = vmul.f32 %v1427, %v3045
      %v3954 = vmul.f32 %v1432, %v3050
      %v3955 = vmul.f32 %v1437, %v3055
      %v3956 = vmul.f32 %v1442, %v3060
      %v3957 = vmul.f32 %v1447, %v3065
      %v3958 = vmul.f32 %v1452, %v3070
      %v3959 = vmul.f32 %v1457, %v3075
      %v3960 = vmul.f32 %v1462, %v3080
      %v3961 = vlaneseq
      %v3962 = vshrl.u32 %v3961, 7
      %v3963 = vsub.s32 0, %v3962
      %v3964 = vrot.slane %v3092, %v3963
      %v3965 = vmul.f32 %v3929, %v3964
      %v3966 = vmul.f32 %v3930, %v3964
      %v3967 = vmul.f32 %v3931, %v3964
      %v3968 = vmul.f32 %v3932, %v3964
      %v3969 = vmul.f32 %v3933, %v3964
      %v3970 = vmul.f32 %v3934, %v3964
      %v3971 = vmul.f32 %v3935, %v3964
      %v3972 = vmul.f32 %v3936, %v3964
      %v3973 = vmul.f32 %v3937, %v3964
      %v3974 = vmul.f32 %v3938, %v3964
      %v3975 = vmul.f32 %v3939, %v3964
      %v3976 = vmul.f32 %v3940, %v3964
      %v3977 = vmul.f32 %v3941, %v3964
      %v3978 = vmul.f32 %v3942, %v3964
      %v3979 = vmul.f32 %v3943, %v3964
      %v3980 = vmul.f32 %v3944, %v3964
      %v3981 = vsel %vm3522, %v3965, 0.0
      %3982 = vadd.xlane.f32.xlu0 %v3981
      %v3983 = vpop.xlane.xlu0 %3982
      %v3984 = vsel %vm3522, %v3966, 0.0
      %3985 = vadd.xlane.f32.xlu0 %v3984
      %v3986 = vpop.xlane.xlu0 %3985
      %v3987 = vsel %vm3522, %v3967, 0.0
      %3988 = vadd.xlane.f32.xlu0 %v3987
      %v3989 = vpop.xlane.xlu0 %3988
      %v3990 = vsel %vm3522, %v3968, 0.0
      %3991 = vadd.xlane.f32.xlu0 %v3990
      %v3992 = vpop.xlane.xlu0 %3991
      %v3993 = vsel %vm3522, %v3969, 0.0
      %3994 = vadd.xlane.f32.xlu0 %v3993
      %v3995 = vpop.xlane.xlu0 %3994
      %v3996 = vsel %vm3522, %v3970, 0.0
      %3997 = vadd.xlane.f32.xlu0 %v3996
      %v3998 = vpop.xlane.xlu0 %3997
      %v3999 = vsel %vm3522, %v3971, 0.0
      %4000 = vadd.xlane.f32.xlu0 %v3999
      %v4001 = vpop.xlane.xlu0 %4000
      %v4002 = vsel %vm3522, %v3972, 0.0
      %4003 = vadd.xlane.f32.xlu0 %v4002
      %v4004 = vpop.xlane.xlu0 %4003
      %v4005 = vsel %vm3522, %v3973, 0.0
      %4006 = vadd.xlane.f32.xlu0 %v4005
      %v4007 = vpop.xlane.xlu0 %4006
      %v4008 = vsel %vm3522, %v3974, 0.0
      %4009 = vadd.xlane.f32.xlu0 %v4008
      %v4010 = vpop.xlane.xlu0 %4009
      %v4011 = vsel %vm3522, %v3975, 0.0
      %4012 = vadd.xlane.f32.xlu0 %v4011
      %v4013 = vpop.xlane.xlu0 %4012
      %v4014 = vsel %vm3522, %v3976, 0.0
      %4015 = vadd.xlane.f32.xlu0 %v4014
      %v4016 = vpop.xlane.xlu0 %4015
      %v4017 = vsel %vm3522, %v3977, 0.0
      %4018 = vadd.xlane.f32.xlu0 %v4017
      %v4019 = vpop.xlane.xlu0 %4018
      %v4020 = vsel %vm3522, %v3978, 0.0
      %4021 = vadd.xlane.f32.xlu0 %v4020
      %v4022 = vpop.xlane.xlu0 %4021
      %v4023 = vsel %vm3522, %v3979, 0.0
      %4024 = vadd.xlane.f32.xlu0 %v4023
      %v4025 = vpop.xlane.xlu0 %4024
      %v4026 = vsel %vm3522, %v3980, 0.0
      %4027 = vadd.xlane.f32.xlu0 %v4026
      %v4028 = vpop.xlane.xlu0 %4027
      %v4029 = vlaneseq
      %v4030 = vshrl.u32 %v4029, 7
      %v4031 = vsub.s32 0, %v4030
      %v4032 = vrot.slane %v3093, %v4031
      %v4033 = vmul.f32 %v3945, %v4032
      %v4034 = vmul.f32 %v3946, %v4032
      %v4035 = vmul.f32 %v3947, %v4032
      %v4036 = vmul.f32 %v3948, %v4032
      %v4037 = vmul.f32 %v3949, %v4032
      %v4038 = vmul.f32 %v3950, %v4032
      %v4039 = vmul.f32 %v3951, %v4032
      %v4040 = vmul.f32 %v3952, %v4032
      %v4041 = vmul.f32 %v3953, %v4032
      %v4042 = vmul.f32 %v3954, %v4032
      %v4043 = vmul.f32 %v3955, %v4032
      %v4044 = vmul.f32 %v3956, %v4032
      %v4045 = vmul.f32 %v3957, %v4032
      %v4046 = vmul.f32 %v3958, %v4032
      %v4047 = vmul.f32 %v3959, %v4032
      %v4048 = vmul.f32 %v3960, %v4032
      %v4049 = vsel %vm3095, %v4033, 0.0
      %4050 = vadd.xlane.f32.xlu0 %v4049
      %v4051 = vpop.xlane.xlu0 %4050
      %v4052 = vsel %vm3095, %v4034, 0.0
      %4053 = vadd.xlane.f32.xlu0 %v4052
      %v4054 = vpop.xlane.xlu0 %4053
      %v4055 = vsel %vm3095, %v4035, 0.0
      %4056 = vadd.xlane.f32.xlu0 %v4055
      %v4057 = vpop.xlane.xlu0 %4056
      %v4058 = vsel %vm3095, %v4036, 0.0
      %4059 = vadd.xlane.f32.xlu0 %v4058
      %v4060 = vpop.xlane.xlu0 %4059
      %v4061 = vsel %vm3095, %v4037, 0.0
      %4062 = vadd.xlane.f32.xlu0 %v4061
      %v4063 = vpop.xlane.xlu0 %4062
      %v4064 = vsel %vm3095, %v4038, 0.0
      %4065 = vadd.xlane.f32.xlu0 %v4064
      %v4066 = vpop.xlane.xlu0 %4065
      %v4067 = vsel %vm3095, %v4039, 0.0
      %4068 = vadd.xlane.f32.xlu0 %v4067
      %v4069 = vpop.xlane.xlu0 %4068
      %v4070 = vsel %vm3095, %v4040, 0.0
      %4071 = vadd.xlane.f32.xlu0 %v4070
      %v4072 = vpop.xlane.xlu0 %4071
      %v4073 = vsel %vm3095, %v4041, 0.0
      %4074 = vadd.xlane.f32.xlu0 %v4073
      %v4075 = vpop.xlane.xlu0 %4074
      %v4076 = vsel %vm3095, %v4042, 0.0
      %4077 = vadd.xlane.f32.xlu0 %v4076
      %v4078 = vpop.xlane.xlu0 %4077
      %v4079 = vsel %vm3095, %v4043, 0.0
      %4080 = vadd.xlane.f32.xlu0 %v4079
      %v4081 = vpop.xlane.xlu0 %4080
      %v4082 = vsel %vm3095, %v4044, 0.0
      %4083 = vadd.xlane.f32.xlu0 %v4082
      %v4084 = vpop.xlane.xlu0 %4083
      %v4085 = vsel %vm3095, %v4045, 0.0
      %4086 = vadd.xlane.f32.xlu0 %v4085
      %v4087 = vpop.xlane.xlu0 %4086
      %v4088 = vsel %vm3095, %v4046, 0.0
      %4089 = vadd.xlane.f32.xlu0 %v4088
      %v4090 = vpop.xlane.xlu0 %4089
      %v4091 = vsel %vm3095, %v4047, 0.0
      %4092 = vadd.xlane.f32.xlu0 %v4091
      %v4093 = vpop.xlane.xlu0 %4092
      %v4094 = vsel %vm3095, %v4048, 0.0
      %4095 = vadd.xlane.f32.xlu0 %v4094
      %v4096 = vpop.xlane.xlu0 %4095
      %v4097 = vadd.f32 %v3983, %v4051
      %v4098 = vadd.f32 %v3986, %v4054
      %v4099 = vadd.f32 %v3989, %v4057
      %v4100 = vadd.f32 %v3992, %v4060
      %v4101 = vadd.f32 %v3995, %v4063
      %v4102 = vadd.f32 %v3998, %v4066
      %v4103 = vadd.f32 %v4001, %v4069
      %v4104 = vadd.f32 %v4004, %v4072
      %v4105 = vadd.f32 %v4007, %v4075
      %v4106 = vadd.f32 %v4010, %v4078
      %v4107 = vadd.f32 %v4013, %v4081
      %v4108 = vadd.f32 %v4016, %v4084
      %v4109 = vadd.f32 %v4019, %v4087
      %v4110 = vadd.f32 %v4022, %v4090
      %v4111 = vadd.f32 %v4025, %v4093
      %v4112 = vadd.f32 %v4028, %v4096
      %v4113 = vlaneseq
      %v4114 = vshrl.u32 %v4113, 7
      %v4115 = vsub.s32 0, %v4114
      %v4116 = vrot.slane %v3094, %v4115
      %v4117 = vadd.f32 %v4097, %v4116
      %v4118 = vadd.f32 %v4098, %v4116
      %v4119 = vadd.f32 %v4099, %v4116
      %v4120 = vadd.f32 %v4100, %v4116
      %v4121 = vadd.f32 %v4101, %v4116
      %v4122 = vadd.f32 %v4102, %v4116
      %v4123 = vadd.f32 %v4103, %v4116
      %v4124 = vadd.f32 %v4104, %v4116
      %v4125 = vadd.f32 %v4105, %v4116
      %v4126 = vadd.f32 %v4106, %v4116
      %v4127 = vadd.f32 %v4107, %v4116
      %v4128 = vadd.f32 %v4108, %v4116
      %v4129 = vadd.f32 %v4109, %v4116
      %v4130 = vadd.f32 %v4110, %v4116
      %v4131 = vadd.f32 %v4111, %v4116
      %v4132 = vadd.f32 %v4112, %v4116
      %v4133 = vsub.f32 0.0, %v4117
      %v4134 = vsub.f32 0.0, %v4118
      %v4135 = vsub.f32 0.0, %v4119
      %v4136 = vsub.f32 0.0, %v4120
      %v4137 = vsub.f32 0.0, %v4121
      %v4138 = vsub.f32 0.0, %v4122
      %v4139 = vsub.f32 0.0, %v4123
      %v4140 = vsub.f32 0.0, %v4124
      %v4141 = vsub.f32 0.0, %v4125
      %v4142 = vsub.f32 0.0, %v4126
      %v4143 = vsub.f32 0.0, %v4127
      %v4144 = vsub.f32 0.0, %v4128
      %v4145 = vsub.f32 0.0, %v4129
      %v4146 = vsub.f32 0.0, %v4130
      %v4147 = vsub.f32 0.0, %v4131
      %v4148 = vsub.f32 0.0, %v4132
      %v4149 = vmul.f32 %v4133, 1.442695
      %v4150 = vpow.pop %v4149
      %v4151 = vmul.f32 %v4134, 1.442695
      %v4152 = vpow.pop %v4151
      %v4153 = vmul.f32 %v4135, 1.442695
      %v4154 = vpow.pop %v4153
      %v4155 = vmul.f32 %v4136, 1.442695
      %v4156 = vpow.pop %v4155
      %v4157 = vmul.f32 %v4137, 1.442695
      %v4158 = vpow.pop %v4157
      %v4159 = vmul.f32 %v4138, 1.442695
      %v4160 = vpow.pop %v4159
      %v4161 = vmul.f32 %v4139, 1.442695
      %v4162 = vpow.pop %v4161
      %v4163 = vmul.f32 %v4140, 1.442695
      %v4164 = vpow.pop %v4163
      %v4165 = vmul.f32 %v4141, 1.442695
      %v4166 = vpow.pop %v4165
      %v4167 = vmul.f32 %v4142, 1.442695
      %v4168 = vpow.pop %v4167
      %v4169 = vmul.f32 %v4143, 1.442695
      %v4170 = vpow.pop %v4169
      %v4171 = vmul.f32 %v4144, 1.442695
      %v4172 = vpow.pop %v4171
      %v4173 = vmul.f32 %v4145, 1.442695
      %v4174 = vpow.pop %v4173
      %v4175 = vmul.f32 %v4146, 1.442695
      %v4176 = vpow.pop %v4175
      %v4177 = vmul.f32 %v4147, 1.442695
      %v4178 = vpow.pop %v4177
      %v4179 = vmul.f32 %v4148, 1.442695
      %v4180 = vpow.pop %v4179
      %v4181 = vadd.f32 %v4150, 1.0
      %v4182 = vadd.f32 %v4152, 1.0
      %v4183 = vadd.f32 %v4154, 1.0
      %v4184 = vadd.f32 %v4156, 1.0
      %v4185 = vadd.f32 %v4158, 1.0
      %v4186 = vadd.f32 %v4160, 1.0
      %v4187 = vadd.f32 %v4162, 1.0
      %v4188 = vadd.f32 %v4164, 1.0
      %v4189 = vadd.f32 %v4166, 1.0
      %v4190 = vadd.f32 %v4168, 1.0
      %v4191 = vadd.f32 %v4170, 1.0
      %v4192 = vadd.f32 %v4172, 1.0
      %v4193 = vadd.f32 %v4174, 1.0
      %v4194 = vadd.f32 %v4176, 1.0
      %v4195 = vadd.f32 %v4178, 1.0
      %v4196 = vadd.f32 %v4180, 1.0
      %v4197 = vrcp.pop %v4181
      %v4198 = vmul.f32 1.0, %v4197
      %v4199 = vrcp.pop %v4182
      %v4200 = vmul.f32 1.0, %v4199
      %v4201 = vrcp.pop %v4183
      %v4202 = vmul.f32 1.0, %v4201
      %v4203 = vrcp.pop %v4184
      %v4204 = vmul.f32 1.0, %v4203
      %v4205 = vrcp.pop %v4185
      %v4206 = vmul.f32 1.0, %v4205
      %v4207 = vrcp.pop %v4186
      %v4208 = vmul.f32 1.0, %v4207
      %v4209 = vrcp.pop %v4187
      %v4210 = vmul.f32 1.0, %v4209
      %v4211 = vrcp.pop %v4188
      %v4212 = vmul.f32 1.0, %v4211
      %v4213 = vrcp.pop %v4189
      %v4214 = vmul.f32 1.0, %v4213
      %v4215 = vrcp.pop %v4190
      %v4216 = vmul.f32 1.0, %v4215
      %v4217 = vrcp.pop %v4191
      %v4218 = vmul.f32 1.0, %v4217
      %v4219 = vrcp.pop %v4192
      %v4220 = vmul.f32 1.0, %v4219
      %v4221 = vrcp.pop %v4193
      %v4222 = vmul.f32 1.0, %v4221
      %v4223 = vrcp.pop %v4194
      %v4224 = vmul.f32 1.0, %v4223
      %v4225 = vrcp.pop %v4195
      %v4226 = vmul.f32 1.0, %v4225
      %v4227 = vrcp.pop %v4196
      %v4228 = vmul.f32 1.0, %v4227
      %vm4229 = vcmask 7168
      %4230 = vst.msk [vmem:[%s248] sm:$0xff] %vm4229, %v4198
      %4231 = vst.msk [vmem:[%s248 + $0x8] sm:$0xff] %vm4229, %v4200
      %4232 = vst.msk [vmem:[%s248 + $0x10] sm:$0xff] %vm4229, %v4202
      %4233 = vst.msk [vmem:[%s248 + $0x18] sm:$0xff] %vm4229, %v4204
      %4234 = vst.msk [vmem:[%s248 + $0x20] sm:$0xff] %vm4229, %v4206
      %4235 = vst.msk [vmem:[%s248 + $0x28] sm:$0xff] %vm4229, %v4208
      %4236 = vst.msk [vmem:[%s248 + $0x30] sm:$0xff] %vm4229, %v4210
      %4237 = vst.msk [vmem:[%s248 + $0x38] sm:$0xff] %vm4229, %v4212
      %4238 = vst.msk [vmem:[%s248 + $0x40] sm:$0xff] %vm4229, %v4214
      %4239 = vst.msk [vmem:[%s248 + $0x48] sm:$0xff] %vm4229, %v4216
      %4240 = vst.msk [vmem:[%s248 + $0x50] sm:$0xff] %vm4229, %v4218
      %4241 = vst.msk [vmem:[%s248 + $0x58] sm:$0xff] %vm4229, %v4220
      %4242 = vst.msk [vmem:[%s248 + $0x60] sm:$0xff] %vm4229, %v4222
      %4243 = vst.msk [vmem:[%s248 + $0x68] sm:$0xff] %vm4229, %v4224
      %4244 = vst.msk [vmem:[%s248 + $0x70] sm:$0xff] %vm4229, %v4226
      %4245 = vst.msk [vmem:[%s248 + $0x78] sm:$0xff] %vm4229, %v4228
      %s4246 = smul.u32 16, %s16
      %p4247 = scmp.lt.s32.totalorder %s4246, 31
      %s4248 = scalar_select %p4247, %s4246, 31
      %s4249 = smul.addr %s4248, 8
      %s4250 = scalar_lea.vmem %s5, %s4249
      // Predicated region
      $region41: #{neucf_forward.1} parent=39 // pred_check
        %p4251 = pneg %p149
      $region42: #{neucf_forward.1} parent=39 // pred_check_branch
        %4253 = sbr.rel (%p4251) target = $region44
      $region43: #{neucf_forward.1} parent=39 // pred_region
        %s4254 = smul.u32 16, %s16
      $region44: #{neucf_forward.1} parent=39 // pred_fallthru
        _
    $region40: #{neucf_forward.1} parent=5 // pred_fallthru
      _
    %p4255 = scmp.le.s32.totalorder 2, %s11
    // Predicated region
    $region45: #{neucf_forward.1} parent=5 // pred_check
      %p4256 = pneg %p4255
    $region46: #{neucf_forward.1} parent=5 // pred_check_branch
      %4258 = sbr.rel (%p4256) target = $region48
    $region47: #{neucf_forward.1} parent=5 // pred_region
      %s4259 = ssub.s32 %s11, 2
      // Predicated region
      $region49: #{neucf_forward.1} parent=47 // pred_check
        %p4260 = pneg %p155
      $region50: #{neucf_forward.1} parent=47 // pred_check_branch
        %4262 = sbr.rel (%p4260) target = $region52
      $region51: #{neucf_forward.1} parent=47 // pred_region
        %s4263 = smul.u32 16, %s17
        %p4264 = scmp.lt.s32.totalorder %s4263, 31
        %s4265 = scalar_select %p4264, %s4263, 31
        %s4266 = smul.addr %s4265, 8
        %s4267 = scalar_lea.vmem %s5, %s4266
      $region52: #{neucf_forward.1} parent=47 // pred_fallthru
        _
    $region48: #{neucf_forward.1} parent=5 // pred_fallthru
      _
  $region6: #{neucf_forward.1} parent=0 // loop_footer
    %s15 = sadd.s32 1, %s11
  $region7: #{neucf_forward.1} parent=0 // loop_footer_branch
    %10 = sbr.rel target = $region3
  $region8: #{neucf_forward.1} parent=0 // loop_exit
    _

</llo_original>
